<compile_context>
chip_gen: v5e
topology: v5e:2x2
jax: 0.10.0
libtpu: 0.0.40
codegen_flags: <defaults>
</compile_context>

<pallas_src>
import functools
import math

import jax
import jax.numpy as jnp
import numpy as np
from jax.experimental import pallas as pl
from jax.experimental.pallas import tpu as pltpu

EPS = 1e-5


def _round_up(a, b):
    return (a + b - 1) // b * b


def _padded_bytes(shape, dtype):
    """VMEM footprint including sublane/lane padding (raw element counts under-estimate
    by up to 32x when the minor dims are small)."""
    it = np.dtype(dtype).itemsize
    shape = tuple(int(s) for s in shape)
    if len(shape) == 0:
        shape = (1, 1)
    elif len(shape) == 1:
        shape = (1, shape[0])
    lead = 1
    for s in shape[:-2]:
        lead *= s
    sub_tile = 8 * max(1, 4 // it)                 # 8 rows for f32, 16 for bf16
    return lead * _round_up(shape[-2], sub_tile) * _round_up(shape[-1], 128) * it


def _vmem_capacity_bytes():
    fn = getattr(pltpu, "get_tpu_info", None)
    if fn is not None:
        try:
            cap = int(getattr(fn(), "vmem_capacity_bytes", 0) or 0)
            if cap > 0:
                return cap
        except Exception:
            pass
    return 64 << 20                                # conservative default (v7x per-core VMEM)


def _conv_stats_kernel(xp_hbm, w_ref, b_ref, mask_ref, y_ref, s1_ref, s2_ref,
                       win_ref, dma_sem, *, K, Wp, S, Cout, HALO):
    """Pass 1: ConvTranspose2d (K*K shifted matmuls over a halo window) + bias, plus
    per-image BN partial sums accumulated across the spatial grid axis.

    xp_hbm:  (N, Cin, L1) bf16 HBM ref (pl.ANY) - whole padded input, read via manual DMA.
    w_ref:   (K*K, Cout, Cin) bf16 flipped conv taps (index map constant -> resident).
    b_ref:   (Cout, 1) f32 conv bias.
    mask_ref:(1, S) f32 validity mask for this tile's flat columns.
    y_ref:   (1, Cout, S) f32 conv+bias tile (lane-dense: flat spatial on lanes).
    s1/s2:   (1, Cout, 1) f32 sum / sum-of-squares, accumulated over the j grid axis.
    win_ref: (Cin, HALO) bf16 VMEM scratch holding this tile's halo window.
    """
    n = pl.program_id(0)
    j = pl.program_id(1)

    # Halo-window DMA: only the data this tile needs, in (channels, spatial) layout so the
    # tap shifts below are static lane offsets and the matmuls need no transposes.
    off = pl.multiple_of(j * S, 128)
    cp = pltpu.make_async_copy(xp_hbm.at[n, :, pl.ds(off, HALO)], win_ref, dma_sem.at[0])
    cp.start()
    cp.wait()

    acc = jnp.zeros((Cout, S), jnp.float32)
    for ky in range(K):
        for kx in range(K):
            a = ky * Wp + kx                       # static offset inside the halo window
            f = win_ref[:, a:a + S]                # (Cin, S) bf16
            w_kk = w_ref[ky * K + kx]              # (Cout, Cin) bf16
            acc = acc + jax.lax.dot_general(       # (Cout, S), f32 accumulation on the MXU
                w_kk, f, (((1,), (0,)), ((), ())),
                preferred_element_type=jnp.float32)

    acc = acc + b_ref[...]                         # (Cout, 1) broadcast over lanes
    y_ref[0, :, :] = acc

    # BN partial sums over valid columns, accumulated in the revisited output blocks.
    @pl.when(j == 0)
    def _():
        s1_ref[...] = jnp.zeros_like(s1_ref)
        s2_ref[...] = jnp.zeros_like(s2_ref)

    m = mask_ref[...]                              # (1, S)
    am = acc * m
    s1_ref[0, :, :] += jnp.sum(am, axis=1, keepdims=True)
    s2_ref[0, :, :] += jnp.sum(acc * am, axis=1, keepdims=True)


def _bn_crop_kernel(y_ref, scale_ref, shift_ref, o_ref, *, rows, Wp, Wo):
    """Pass 2: o = y * scale + shift, writing the cropped NCHW output directly.
    One FMA per element; fusing the flat->NCHW crop saves an extra HBM round trip."""
    z = y_ref[0, :, :] * scale_ref[...] + shift_ref[...]        # (Cout, S) f32
    for i in range(rows):                                       # static row extraction
        o_ref[0, :, i, :] = z[:, i * Wp:i * Wp + Wo]


@functools.partial(jax.jit, static_argnames=("kernel_size", "stride", "padding"))
def cdk2d_forward(x_nchw, w_t, bias, gamma, beta, *, kernel_size=4, stride=1, padding=1):
    """Forward pass of cdk2d(in_ch, out_ch) defaults: ConvTranspose2d(k=4, s=1, p=1) followed
    by BatchNorm2d (training-mode batch statistics, as nn.BatchNorm2d in train mode)."""
    assert stride == 1, "this lowering covers the module's default stride=1"
    N, Cin, H, W = x_nchw.shape
    Cout = w_t.shape[1]
    K = kernel_size
    pad = K - 1 - padding                          # equivalent regular-conv padding
    Ho = (H - 1) * stride - 2 * padding + K
    Wo = (W - 1) * stride - 2 * padding + K
    Hp, Wp = H + 2 * pad, W + 2 * pad
    L2 = Ho * Wp                                   # width-padded flattened output length

    # ---- generation-aware tile sizing ------------------------------------------------
    vmem_cap = _vmem_capacity_bytes()
    big_vmem = vmem_cap >= (100 << 20)             # v5e/v6e (128 MiB) vs v7x (64 MiB)
    target_lanes = 4096 if big_vmem else 2048
    vmem_ceiling = (96 << 20) if big_vmem else (48 << 20)

    # S must be a multiple of 128 (lane-dense stores) and of 8*Wp (sublane-aligned row count
    # per tile so the crop can be fused into pass 2).
    unit = (8 * Wp) * 128 // math.gcd(8 * Wp, 128)
    max_units = max(1, -(-L2 // unit))
    units = max(1, min(max(1, target_lanes // unit), max_units))

    def _pass1_vmem(S_):
        HALO_ = _round_up(S_ + (K - 1) * Wp + (K - 1), 128)
        need = _padded_bytes((Cin, HALO_), jnp.bfloat16)            # halo scratch (1 buffer)
        need += 2 * _padded_bytes((K * K, Cout, Cin), jnp.bfloat16)
        need += 2 * _padded_bytes((Cout, 1), jnp.float32)
        need += 2 * _padded_bytes((1, S_), jnp.float32)
        need += 2 * _padded_bytes((1, Cout, S_), jnp.float32)       # y tile, double buffered
        need += 4 * _padded_bytes((1, Cout, 1), jnp.float32)
        need += 3 * _padded_bytes((Cout, S_), jnp.float32)          # acc / product temporaries
        need += 2 * _padded_bytes((Cin, S_), jnp.bfloat16)          # per-tap slices
        return need

    while units > 1 and _pass1_vmem(units * unit) > (3 * vmem_cap) // 5:
        units -= 1
    S = units * unit
    n_blk = -(-L2 // S)
    L2p = n_blk * S
    r = S // Wp                                    # output rows covered per tile
    rows_out = min(r, Ho)                          # rows actually written by pass 2
    HALO = _round_up(S + (K - 1) * Wp + (K - 1), 128)
    L1 = (n_blk - 1) * S + HALO                    # padded flat input length seen by the DMAs

    # ---- layout prep (cheap XLA glue; ~1x input read, no im2col) -----------------------
    xb = x_nchw.astype(jnp.bfloat16)               # bf16 streaming, f32 accumulation in-kernel
    xp = jnp.pad(xb, ((0, 0), (0, 0), (pad, pad), (pad, pad)))
    xp_flat = xp.reshape(N, Cin, Hp * Wp)
    xp_flat = jnp.pad(xp_flat, ((0, 0), (0, 0), (0, L1 - Hp * Wp)))

    # ConvTranspose2d weight (Cin, Cout, K, K) -> flipped regular-conv taps, each (Cout, Cin):
    #   w_kk[ky*K+kx, co, ci] = w_t[ci, co, K-1-ky, K-1-kx]
    w_kk = jnp.transpose(w_t[:, :, ::-1, ::-1], (2, 3, 1, 0)).reshape(K * K, Cout, Cin)
    w_kk = w_kk.astype(jnp.bfloat16)
    b_col = bias.reshape(Cout, 1).astype(jnp.float32)

    # Static validity mask over the width-padded flat grid (junk wrap + tail columns -> 0).
    col = np.arange(L2p)
    mask_np = (((col % Wp) < Wo) & (col < L2)).astype(np.float32).reshape(1, L2p)
    mask = jnp.asarray(mask_np)

    itemsize = 4
    # ---- pass 1: conv-transpose + bias + BN partial sums -------------------------------
    vmem1 = int(min(vmem_ceiling, max(16 << 20, 2 * _pass1_vmem(S))))
    cost1 = pl.CostEstimate(
        flops=2 * N * L2p * K * K * Cin * Cout,
        transcendentals=0,
        bytes_accessed=int(2 * N * n_blk * Cin * HALO + 2 * K * K * Cout * Cin
                           + itemsize * (N * Cout * L2p + L2p + 2 * N * Cout + Cout)))

    y_flat, s1, s2 = pl.pallas_call(
        functools.partial(_conv_stats_kernel, K=K, Wp=Wp, S=S, Cout=Cout, HALO=HALO),
        grid=(N, n_blk),
        in_specs=[
            pl.BlockSpec(memory_space=pl.ANY),                        # input stays in HBM
            pl.BlockSpec((K * K, Cout, Cin), lambda n, j: (0, 0, 0)),
            pl.BlockSpec((Cout, 1), lambda n, j: (0, 0)),
            pl.BlockSpec((1, S), lambda n, j: (0, j)),
        ],
        out_specs=(
            pl.BlockSpec((1, Cout, S), lambda n, j: (n, 0, j)),
            pl.BlockSpec((1, Cout, 1), lambda n, j: (n, 0, 0)),       # accumulated over j
            pl.BlockSpec((1, Cout, 1), lambda n, j: (n, 0, 0)),
        ),
        out_shape=(
            jax.ShapeDtypeStruct((N, Cout, L2p), jnp.float32),
            jax.ShapeDtypeStruct((N, Cout, 1), jnp.float32),
            jax.ShapeDtypeStruct((N, Cout, 1), jnp.float32),
        ),
        scratch_shapes=[
            pltpu.VMEM((Cin, HALO), jnp.bfloat16),
            pltpu.SemaphoreType.DMA((1,)),
        ],
        compiler_params=pltpu.CompilerParams(
            dimension_semantics=("parallel", "arbitrary"),
            vmem_limit_bytes=vmem1),
        cost_estimate=cost1,
    )(xp_flat, w_kk, b_col, mask)

    # ---- tiny glue: finalize BN scale/shift (training-mode batch statistics) -----------
    count = jnp.float32(N * Ho * Wo)
    ch_sum = jnp.sum(s1, axis=0)[:, 0]             # (Cout,)
    ch_sq = jnp.sum(s2, axis=0)[:, 0]
    mean = ch_sum / count
    var = jnp.maximum(ch_sq / count - mean * mean, 0.0)   # biased variance (PyTorch BN fwd)
    inv = jax.lax.rsqrt(var + EPS)
    g32 = gamma.astype(jnp.float32)
    scale = (g32 * inv).reshape(Cout, 1)
    shift = (beta.astype(jnp.float32) - mean * g32 * inv).reshape(Cout, 1)

    # ---- pass 2: BN apply fused with the crop to the final NCHW output -----------------
    need2 = (2 * _padded_bytes((1, Cout, S), jnp.float32)
             + 4 * _padded_bytes((Cout, 1), jnp.float32)
             + 2 * _padded_bytes((1, Cout, rows_out, Wo), jnp.float32)
             + 2 * _padded_bytes((Cout, S), jnp.float32))
    vmem2 = int(min(vmem_ceiling, max(16 << 20, 2 * need2)))
    cost2 = pl.CostEstimate(
        flops=2 * N * Cout * L2p, transcendentals=0,
        bytes_accessed=itemsize * (N * Cout * L2p + N * Cout * Ho * Wo + 2 * Cout))

    out = pl.pallas_call(
        functools.partial(_bn_crop_kernel, rows=rows_out, Wp=Wp, Wo=Wo),
        grid=(N, n_blk),
        in_specs=[
            pl.BlockSpec((1, Cout, S), lambda n, j: (n, 0, j)),
            pl.BlockSpec((Cout, 1), lambda n, j: (0, 0)),
            pl.BlockSpec((Cout, 1), lambda n, j: (0, 0)),
        ],
        out_specs=pl.BlockSpec((1, Cout, rows_out, Wo), lambda n, j: (n, 0, j, 0)),
        out_shape=jax.ShapeDtypeStruct((N, Cout, Ho, Wo), jnp.float32),
        compiler_params=pltpu.CompilerParams(
            dimension_semantics=("parallel", "parallel"),
            vmem_limit_bytes=vmem2),
        cost_estimate=cost2,
    )(y_flat, scale, shift)
    return out


def _numpy_reference(x, w, b, gamma, beta, K=4, stride=1, padding=1):
    """Independent reference: direct ConvTranspose2d scatter + BatchNorm (train mode)."""
    x, w, b = np.asarray(x), np.asarray(w), np.asarray(b)
    gamma, beta = np.asarray(gamma), np.asarray(beta)
    N, Cin, H, W = x.shape
    Cout = w.shape[1]
    Ho = (H - 1) * stride - 2 * padding + K
    Wo = (W - 1) * stride - 2 * padding + K
    full = np.zeros((N, Cout, H + K - 1, W + K - 1), np.float32)
    contrib = np.einsum('nchw,cokl->nohwkl', x, w)
    for ky in range(K):
        for kx in range(K):
            full[:, :, ky:ky + H, kx:kx + W] += contrib[:, :, :, :, ky, kx]
    y = full[:, :, padding:padding + Ho, padding:padding + Wo] + b[None, :, None, None]
    mean = y.mean(axis=(0, 2, 3), keepdims=True)
    var = y.var(axis=(0, 2, 3), keepdims=True)     # biased, as in PyTorch BN fwd
    y = (y - mean) / np.sqrt(var + EPS)
    return y * gamma[None, :, None, None] + beta[None, :, None, None]


if __name__ == "__main__":
    in_ch, out_ch, K = 4, 8, 4
    N, H, W = 2, 16, 16

    key = jax.random.PRNGKey(0)
    k_x, k_w, k_b = jax.random.split(key, 3)
    x = jax.random.normal(k_x, (N, in_ch, H, W), jnp.float32)
    w_t = jax.random.normal(k_w, (in_ch, out_ch, K, K), jnp.float32) * 0.1
    bias = jax.random.normal(k_b, (out_ch,), jnp.float32) * 0.1
    gamma = jnp.ones((out_ch,), jnp.float32)       # BatchNorm2d default init
    beta = jnp.zeros((out_ch,), jnp.float32)

    out = cdk2d_forward(x, w_t, bias, gamma, beta,
                        kernel_size=K, stride=1, padding=1)
    out = jax.block_until_ready(out)

    ref = _numpy_reference(x, w_t, bias, gamma, beta, K=K, stride=1, padding=1)
    assert out.shape == (N, out_ch, H + 1, W + 1), out.shape
    err = float(np.abs(np.asarray(out) - ref).max())
    # bf16-streamed MXU operands with f32 accumulation: tolerance relaxed vs. pure f32.
    assert np.allclose(np.asarray(out), ref, atol=3e-2, rtol=2e-2), err

    print("KERNEL_OK")
</pallas_src>

<mosaic_0001>
module attributes {stable_mosaic.version = 11 : i64} {
  func.func @_conv_stats_kernel(%arg0: i32, %arg1: i32, %arg2: memref<2x4x768xbf16, #tpu.memory_space<any>>, %arg3: memref<16x8x4xbf16, #tpu.memory_space<vmem>>, %arg4: memref<8x1xf32, #tpu.memory_space<vmem>>, %arg5: memref<1x640xf32, #tpu.memory_space<vmem>>, %arg6: memref<1x8x640xf32, #tpu.memory_space<vmem>>, %arg7: memref<1x8x1xf32, #tpu.memory_space<vmem>>, %arg8: memref<1x8x1xf32, #tpu.memory_space<vmem>>, %arg9: memref<4x768xbf16, #tpu.memory_space<vmem>>, %arg10: memref<1x!tpu.dma_semaphore, #tpu.memory_space<semaphore_mem>>) attributes {dimension_semantics = [#tpu.dimension_semantics<parallel>, #tpu.dimension_semantics<arbitrary>], iteration_bounds = array<i64: 2, 1>, scalar_prefetch = 0 : i64, scratch_operands = 2 : i64, tpu.core_type = #tpu.core_type<tc>, window_params = [{}, {pipeline_mode = #tpu.pipeline_mode<synchronous>, transform_indices = @transform_1, window_bounds = array<i64: 16, 8, 4>}, {pipeline_mode = #tpu.pipeline_mode<synchronous>, transform_indices = @transform_2, window_bounds = array<i64: 8, 1>}, {transform_indices = @transform_3, window_bounds = array<i64: 1, 640>}, {transform_indices = @transform_4, window_bounds = array<i64: 1, 8, 640>}, {transform_indices = @transform_5, window_bounds = array<i64: 1, 8, 1>}, {transform_indices = @transform_6, window_bounds = array<i64: 1, 8, 1>}]} {
    %c640_i32 = arith.constant 640 : i32
    %0 = arith.muli %arg1, %c640_i32 : i32
    %1 = tpu.assume_multiple %0, 128 : i32
    %c0_i32 = arith.constant 0 : i32
    %c0_i32_0 = arith.constant 0 : i32
    %2 = tpu.memref_slice %arg2[%arg0, %c0_i32_0, %1] : memref<2x4x768xbf16, #tpu.memory_space<any>> -> memref<1x4x768xbf16, #tpu.memory_space<any>>
    %3 = tpu.memref_squeeze %2 : memref<1x4x768xbf16, #tpu.memory_space<any>> -> memref<4x768xbf16, #tpu.memory_space<any>>
    %4 = tpu.memref_slice %arg10[%c0_i32] : memref<1x!tpu.dma_semaphore, #tpu.memory_space<semaphore_mem>> -> memref<1x!tpu.dma_semaphore, #tpu.memory_space<semaphore_mem>>
    %5 = tpu.memref_squeeze %4 : memref<1x!tpu.dma_semaphore, #tpu.memory_space<semaphore_mem>> -> memref<!tpu.dma_semaphore, #tpu.memory_space<semaphore_mem>>
    tpu.enqueue_dma source(%3 : memref<4x768xbf16, #tpu.memory_space<any>>) target(%arg9 : memref<4x768xbf16, #tpu.memory_space<vmem>>) target_semaphore(%5 : memref<!tpu.dma_semaphore, #tpu.memory_space<semaphore_mem>>)
    %c0_i32_1 = arith.constant 0 : i32
    %c0_i32_2 = arith.constant 0 : i32
    %6 = tpu.memref_slice %arg2[%arg0, %c0_i32_2, %1] : memref<2x4x768xbf16, #tpu.memory_space<any>> -> memref<1x4x768xbf16, #tpu.memory_space<any>>
    %7 = tpu.memref_squeeze %6 : memref<1x4x768xbf16, #tpu.memory_space<any>> -> memref<4x768xbf16, #tpu.memory_space<any>>
    %8 = tpu.memref_slice %arg10[%c0_i32_1] : memref<1x!tpu.dma_semaphore, #tpu.memory_space<semaphore_mem>> -> memref<1x!tpu.dma_semaphore, #tpu.memory_space<semaphore_mem>>
    %9 = tpu.memref_squeeze %8 : memref<1x!tpu.dma_semaphore, #tpu.memory_space<semaphore_mem>> -> memref<!tpu.dma_semaphore, #tpu.memory_space<semaphore_mem>>
    tpu.wait_dma2 semaphore(%9 : memref<!tpu.dma_semaphore, #tpu.memory_space<semaphore_mem>>) src(%7 : memref<4x768xbf16, #tpu.memory_space<any>>) dst(%arg9 : memref<4x768xbf16, #tpu.memory_space<vmem>>)
    %cst = arith.constant 0.000000e+00 : f32
    %10 = vector.broadcast %cst : f32 to vector<8x640xf32>
    %c0 = arith.constant 0 : index
    %c0_3 = arith.constant 0 : index
    %11 = vector.load %arg9[%c0, %c0_3] : memref<4x768xbf16, #tpu.memory_space<vmem>>, vector<4x640xbf16>
    %c0_4 = arith.constant 0 : index
    %c0_5 = arith.constant 0 : index
    %c0_6 = arith.constant 0 : index
    %12 = vector.load %arg3[%c0_4, %c0_5, %c0_6] : memref<16x8x4xbf16, #tpu.memory_space<vmem>>, vector<1x8x4xbf16>
    %13 = vector.shape_cast %12 : vector<1x8x4xbf16> to vector<8x4xbf16>
    %cst_7 = arith.constant dense<0.000000e+00> : vector<8x640xf32>
    %14 = tpu.matmul %13, %11, %cst_7 {dimension_numbers = #tpu.dot_dimension_numbers<[1], [0], [0], [1], [0, 0, 1, 1], [], []>} : vector<8x4xbf16>, vector<4x640xbf16>, vector<8x640xf32> -> vector<8x640xf32>
    %15 = arith.addf %10, %14 : vector<8x640xf32>
    %c0_8 = arith.constant 0 : index
    %c1 = arith.constant 1 : index
    %16 = vector.load %arg9[%c0_8, %c1] : memref<4x768xbf16, #tpu.memory_space<vmem>>, vector<4x640xbf16>
    %c1_9 = arith.constant 1 : index
    %c0_10 = arith.constant 0 : index
    %c0_11 = arith.constant 0 : index
    %17 = vector.load %arg3[%c1_9, %c0_10, %c0_11] : memref<16x8x4xbf16, #tpu.memory_space<vmem>>, vector<1x8x4xbf16>
    %18 = vector.shape_cast %17 : vector<1x8x4xbf16> to vector<8x4xbf16>
    %cst_12 = arith.constant dense<0.000000e+00> : vector<8x640xf32>
    %19 = tpu.matmul %18, %16, %cst_12 {dimension_numbers = #tpu.dot_dimension_numbers<[1], [0], [0], [1], [0, 0, 1, 1], [], []>} : vector<8x4xbf16>, vector<4x640xbf16>, vector<8x640xf32> -> vector<8x640xf32>
    %20 = arith.addf %15, %19 : vector<8x640xf32>
    %c0_13 = arith.constant 0 : index
    %c2 = arith.constant 2 : index
    %21 = vector.load %arg9[%c0_13, %c2] : memref<4x768xbf16, #tpu.memory_space<vmem>>, vector<4x640xbf16>
    %c2_14 = arith.constant 2 : index
    %c0_15 = arith.constant 0 : index
    %c0_16 = arith.constant 0 : index
    %22 = vector.load %arg3[%c2_14, %c0_15, %c0_16] : memref<16x8x4xbf16, #tpu.memory_space<vmem>>, vector<1x8x4xbf16>
    %23 = vector.shape_cast %22 : vector<1x8x4xbf16> to vector<8x4xbf16>
    %cst_17 = arith.constant dense<0.000000e+00> : vector<8x640xf32>
    %24 = tpu.matmul %23, %21, %cst_17 {dimension_numbers = #tpu.dot_dimension_numbers<[1], [0], [0], [1], [0, 0, 1, 1], [], []>} : vector<8x4xbf16>, vector<4x640xbf16>, vector<8x640xf32> -> vector<8x640xf32>
    %25 = arith.addf %20, %24 : vector<8x640xf32>
    %c0_18 = arith.constant 0 : index
    %c3 = arith.constant 3 : index
    %26 = vector.load %arg9[%c0_18, %c3] : memref<4x768xbf16, #tpu.memory_space<vmem>>, vector<4x640xbf16>
    %c3_19 = arith.constant 3 : index
    %c0_20 = arith.constant 0 : index
    %c0_21 = arith.constant 0 : index
    %27 = vector.load %arg3[%c3_19, %c0_20, %c0_21] : memref<16x8x4xbf16, #tpu.memory_space<vmem>>, vector<1x8x4xbf16>
    %28 = vector.shape_cast %27 : vector<1x8x4xbf16> to vector<8x4xbf16>
    %cst_22 = arith.constant dense<0.000000e+00> : vector<8x640xf32>
    %29 = tpu.matmul %28, %26, %cst_22 {dimension_numbers = #tpu.dot_dimension_numbers<[1], [0], [0], [1], [0, 0, 1, 1], [], []>} : vector<8x4xbf16>, vector<4x640xbf16>, vector<8x640xf32> -> vector<8x640xf32>
    %30 = arith.addf %25, %29 : vector<8x640xf32>
    %c0_23 = arith.constant 0 : index
    %c20 = arith.constant 20 : index
    %31 = vector.load %arg9[%c0_23, %c20] : memref<4x768xbf16, #tpu.memory_space<vmem>>, vector<4x640xbf16>
    %c4 = arith.constant 4 : index
    %c0_24 = arith.constant 0 : index
    %c0_25 = arith.constant 0 : index
    %32 = vector.load %arg3[%c4, %c0_24, %c0_25] : memref<16x8x4xbf16, #tpu.memory_space<vmem>>, vector<1x8x4xbf16>
    %33 = vector.shape_cast %32 : vector<1x8x4xbf16> to vector<8x4xbf16>
    %cst_26 = arith.constant dense<0.000000e+00> : vector<8x640xf32>
    %34 = tpu.matmul %33, %31, %cst_26 {dimension_numbers = #tpu.dot_dimension_numbers<[1], [0], [0], [1], [0, 0, 1, 1], [], []>} : vector<8x4xbf16>, vector<4x640xbf16>, vector<8x640xf32> -> vector<8x640xf32>
    %35 = arith.addf %30, %34 : vector<8x640xf32>
    %c0_27 = arith.constant 0 : index
    %c21 = arith.constant 21 : index
    %36 = vector.load %arg9[%c0_27, %c21] : memref<4x768xbf16, #tpu.memory_space<vmem>>, vector<4x640xbf16>
    %c5 = arith.constant 5 : index
    %c0_28 = arith.constant 0 : index
    %c0_29 = arith.constant 0 : index
    %37 = vector.load %arg3[%c5, %c0_28, %c0_29] : memref<16x8x4xbf16, #tpu.memory_space<vmem>>, vector<1x8x4xbf16>
    %38 = vector.shape_cast %37 : vector<1x8x4xbf16> to vector<8x4xbf16>
    %cst_30 = arith.constant dense<0.000000e+00> : vector<8x640xf32>
    %39 = tpu.matmul %38, %36, %cst_30 {dimension_numbers = #tpu.dot_dimension_numbers<[1], [0], [0], [1], [0, 0, 1, 1], [], []>} : vector<8x4xbf16>, vector<4x640xbf16>, vector<8x640xf32> -> vector<8x640xf32>
    %40 = arith.addf %35, %39 : vector<8x640xf32>
    %c0_31 = arith.constant 0 : index
    %c22 = arith.constant 22 : index
    %41 = vector.load %arg9[%c0_31, %c22] : memref<4x768xbf16, #tpu.memory_space<vmem>>, vector<4x640xbf16>
    %c6 = arith.constant 6 : index
    %c0_32 = arith.constant 0 : index
    %c0_33 = arith.constant 0 : index
    %42 = vector.load %arg3[%c6, %c0_32, %c0_33] : memref<16x8x4xbf16, #tpu.memory_space<vmem>>, vector<1x8x4xbf16>
    %43 = vector.shape_cast %42 : vector<1x8x4xbf16> to vector<8x4xbf16>
    %cst_34 = arith.constant dense<0.000000e+00> : vector<8x640xf32>
    %44 = tpu.matmul %43, %41, %cst_34 {dimension_numbers = #tpu.dot_dimension_numbers<[1], [0], [0], [1], [0, 0, 1, 1], [], []>} : vector<8x4xbf16>, vector<4x640xbf16>, vector<8x640xf32> -> vector<8x640xf32>
    %45 = arith.addf %40, %44 : vector<8x640xf32>
    %c0_35 = arith.constant 0 : index
    %c23 = arith.constant 23 : index
    %46 = vector.load %arg9[%c0_35, %c23] : memref<4x768xbf16, #tpu.memory_space<vmem>>, vector<4x640xbf16>
    %c7 = arith.constant 7 : index
    %c0_36 = arith.constant 0 : index
    %c0_37 = arith.constant 0 : index
    %47 = vector.load %arg3[%c7, %c0_36, %c0_37] : memref<16x8x4xbf16, #tpu.memory_space<vmem>>, vector<1x8x4xbf16>
    %48 = vector.shape_cast %47 : vector<1x8x4xbf16> to vector<8x4xbf16>
    %cst_38 = arith.constant dense<0.000000e+00> : vector<8x640xf32>
    %49 = tpu.matmul %48, %46, %cst_38 {dimension_numbers = #tpu.dot_dimension_numbers<[1], [0], [0], [1], [0, 0, 1, 1], [], []>} : vector<8x4xbf16>, vector<4x640xbf16>, vector<8x640xf32> -> vector<8x640xf32>
    %50 = arith.addf %45, %49 : vector<8x640xf32>
    %c0_39 = arith.constant 0 : index
    %c40 = arith.constant 40 : index
    %51 = vector.load %arg9[%c0_39, %c40] : memref<4x768xbf16, #tpu.memory_space<vmem>>, vector<4x640xbf16>
    %c8 = arith.constant 8 : index
    %c0_40 = arith.constant 0 : index
    %c0_41 = arith.constant 0 : index
    %52 = vector.load %arg3[%c8, %c0_40, %c0_41] : memref<16x8x4xbf16, #tpu.memory_space<vmem>>, vector<1x8x4xbf16>
    %53 = vector.shape_cast %52 : vector<1x8x4xbf16> to vector<8x4xbf16>
    %cst_42 = arith.constant dense<0.000000e+00> : vector<8x640xf32>
    %54 = tpu.matmul %53, %51, %cst_42 {dimension_numbers = #tpu.dot_dimension_numbers<[1], [0], [0], [1], [0, 0, 1, 1], [], []>} : vector<8x4xbf16>, vector<4x640xbf16>, vector<8x640xf32> -> vector<8x640xf32>
    %55 = arith.addf %50, %54 : vector<8x640xf32>
    %c0_43 = arith.constant 0 : index
    %c41 = arith.constant 41 : index
    %56 = vector.load %arg9[%c0_43, %c41] : memref<4x768xbf16, #tpu.memory_space<vmem>>, vector<4x640xbf16>
    %c9 = arith.constant 9 : index
    %c0_44 = arith.constant 0 : index
    %c0_45 = arith.constant 0 : index
    %57 = vector.load %arg3[%c9, %c0_44, %c0_45] : memref<16x8x4xbf16, #tpu.memory_space<vmem>>, vector<1x8x4xbf16>
    %58 = vector.shape_cast %57 : vector<1x8x4xbf16> to vector<8x4xbf16>
    %cst_46 = arith.constant dense<0.000000e+00> : vector<8x640xf32>
    %59 = tpu.matmul %58, %56, %cst_46 {dimension_numbers = #tpu.dot_dimension_numbers<[1], [0], [0], [1], [0, 0, 1, 1], [], []>} : vector<8x4xbf16>, vector<4x640xbf16>, vector<8x640xf32> -> vector<8x640xf32>
    %60 = arith.addf %55, %59 : vector<8x640xf32>
    %c0_47 = arith.constant 0 : index
    %c42 = arith.constant 42 : index
    %61 = vector.load %arg9[%c0_47, %c42] : memref<4x768xbf16, #tpu.memory_space<vmem>>, vector<4x640xbf16>
    %c10 = arith.constant 10 : index
    %c0_48 = arith.constant 0 : index
    %c0_49 = arith.constant 0 : index
    %62 = vector.load %arg3[%c10, %c0_48, %c0_49] : memref<16x8x4xbf16, #tpu.memory_space<vmem>>, vector<1x8x4xbf16>
    %63 = vector.shape_cast %62 : vector<1x8x4xbf16> to vector<8x4xbf16>
    %cst_50 = arith.constant dense<0.000000e+00> : vector<8x640xf32>
    %64 = tpu.matmul %63, %61, %cst_50 {dimension_numbers = #tpu.dot_dimension_numbers<[1], [0], [0], [1], [0, 0, 1, 1], [], []>} : vector<8x4xbf16>, vector<4x640xbf16>, vector<8x640xf32> -> vector<8x640xf32>
    %65 = arith.addf %60, %64 : vector<8x640xf32>
    %c0_51 = arith.constant 0 : index
    %c43 = arith.constant 43 : index
    %66 = vector.load %arg9[%c0_51, %c43] : memref<4x768xbf16, #tpu.memory_space<vmem>>, vector<4x640xbf16>
    %c11 = arith.constant 11 : index
    %c0_52 = arith.constant 0 : index
    %c0_53 = arith.constant 0 : index
    %67 = vector.load %arg3[%c11, %c0_52, %c0_53] : memref<16x8x4xbf16, #tpu.memory_space<vmem>>, vector<1x8x4xbf16>
    %68 = vector.shape_cast %67 : vector<1x8x4xbf16> to vector<8x4xbf16>
    %cst_54 = arith.constant dense<0.000000e+00> : vector<8x640xf32>
    %69 = tpu.matmul %68, %66, %cst_54 {dimension_numbers = #tpu.dot_dimension_numbers<[1], [0], [0], [1], [0, 0, 1, 1], [], []>} : vector<8x4xbf16>, vector<4x640xbf16>, vector<8x640xf32> -> vector<8x640xf32>
    %70 = arith.addf %65, %69 : vector<8x640xf32>
    %c0_55 = arith.constant 0 : index
    %c60 = arith.constant 60 : index
    %71 = vector.load %arg9[%c0_55, %c60] : memref<4x768xbf16, #tpu.memory_space<vmem>>, vector<4x640xbf16>
    %c12 = arith.constant 12 : index
    %c0_56 = arith.constant 0 : index
    %c0_57 = arith.constant 0 : index
    %72 = vector.load %arg3[%c12, %c0_56, %c0_57] : memref<16x8x4xbf16, #tpu.memory_space<vmem>>, vector<1x8x4xbf16>
    %73 = vector.shape_cast %72 : vector<1x8x4xbf16> to vector<8x4xbf16>
    %cst_58 = arith.constant dense<0.000000e+00> : vector<8x640xf32>
    %74 = tpu.matmul %73, %71, %cst_58 {dimension_numbers = #tpu.dot_dimension_numbers<[1], [0], [0], [1], [0, 0, 1, 1], [], []>} : vector<8x4xbf16>, vector<4x640xbf16>, vector<8x640xf32> -> vector<8x640xf32>
    %75 = arith.addf %70, %74 : vector<8x640xf32>
    %c0_59 = arith.constant 0 : index
    %c61 = arith.constant 61 : index
    %76 = vector.load %arg9[%c0_59, %c61] : memref<4x768xbf16, #tpu.memory_space<vmem>>, vector<4x640xbf16>
    %c13 = arith.constant 13 : index
    %c0_60 = arith.constant 0 : index
    %c0_61 = arith.constant 0 : index
    %77 = vector.load %arg3[%c13, %c0_60, %c0_61] : memref<16x8x4xbf16, #tpu.memory_space<vmem>>, vector<1x8x4xbf16>
    %78 = vector.shape_cast %77 : vector<1x8x4xbf16> to vector<8x4xbf16>
    %cst_62 = arith.constant dense<0.000000e+00> : vector<8x640xf32>
    %79 = tpu.matmul %78, %76, %cst_62 {dimension_numbers = #tpu.dot_dimension_numbers<[1], [0], [0], [1], [0, 0, 1, 1], [], []>} : vector<8x4xbf16>, vector<4x640xbf16>, vector<8x640xf32> -> vector<8x640xf32>
    %80 = arith.addf %75, %79 : vector<8x640xf32>
    %c0_63 = arith.constant 0 : index
    %c62 = arith.constant 62 : index
    %81 = vector.load %arg9[%c0_63, %c62] : memref<4x768xbf16, #tpu.memory_space<vmem>>, vector<4x640xbf16>
    %c14 = arith.constant 14 : index
    %c0_64 = arith.constant 0 : index
    %c0_65 = arith.constant 0 : index
    %82 = vector.load %arg3[%c14, %c0_64, %c0_65] : memref<16x8x4xbf16, #tpu.memory_space<vmem>>, vector<1x8x4xbf16>
    %83 = vector.shape_cast %82 : vector<1x8x4xbf16> to vector<8x4xbf16>
    %cst_66 = arith.constant dense<0.000000e+00> : vector<8x640xf32>
    %84 = tpu.matmul %83, %81, %cst_66 {dimension_numbers = #tpu.dot_dimension_numbers<[1], [0], [0], [1], [0, 0, 1, 1], [], []>} : vector<8x4xbf16>, vector<4x640xbf16>, vector<8x640xf32> -> vector<8x640xf32>
    %85 = arith.addf %80, %84 : vector<8x640xf32>
    %c0_67 = arith.constant 0 : index
    %c63 = arith.constant 63 : index
    %86 = vector.load %arg9[%c0_67, %c63] : memref<4x768xbf16, #tpu.memory_space<vmem>>, vector<4x640xbf16>
    %c15 = arith.constant 15 : index
    %c0_68 = arith.constant 0 : index
    %c0_69 = arith.constant 0 : index
    %87 = vector.load %arg3[%c15, %c0_68, %c0_69] : memref<16x8x4xbf16, #tpu.memory_space<vmem>>, vector<1x8x4xbf16>
    %88 = vector.shape_cast %87 : vector<1x8x4xbf16> to vector<8x4xbf16>
    %cst_70 = arith.constant dense<0.000000e+00> : vector<8x640xf32>
    %89 = tpu.matmul %88, %86, %cst_70 {dimension_numbers = #tpu.dot_dimension_numbers<[1], [0], [0], [1], [0, 0, 1, 1], [], []>} : vector<8x4xbf16>, vector<4x640xbf16>, vector<8x640xf32> -> vector<8x640xf32>
    %90 = arith.addf %85, %89 : vector<8x640xf32>
    %c0_71 = arith.constant 0 : index
    %c0_72 = arith.constant 0 : index
    %91 = vector.load %arg4[%c0_71, %c0_72] : memref<8x1xf32, #tpu.memory_space<vmem>>, vector<8x1xf32>
    %92 = vector.broadcast %91 : vector<8x1xf32> to vector<8x640xf32>
    %93 = arith.addf %90, %92 : vector<8x640xf32>
    %c0_73 = arith.constant 0 : index
    %c0_74 = arith.constant 0 : index
    %c0_75 = arith.constant 0 : index
    %94 = vector.load %arg6[%c0_73, %c0_74, %c0_75] : memref<1x8x640xf32, #tpu.memory_space<vmem>>, vector<1x8x640xf32>
    %95 = vector.shape_cast %94 : vector<1x8x640xf32> to vector<8x640xf32>
    %96 = vector.shape_cast %93 : vector<8x640xf32> to vector<1x8x640xf32>
    tpu.vector_store %arg6[%c0_73, %c0_74, %c0_75], %96 {strides = array<i32>} : memref<1x8x640xf32, #tpu.memory_space<vmem>>, vector<1x8x640xf32>,
    %c0_i32_76 = arith.constant 0 : i32
    %97 = arith.cmpi eq, %arg1, %c0_i32_76 : i32
    %98 = arith.extui %97 : i1 to i32
    %c0_i32_77 = arith.constant 0 : i32
    %99 = arith.cmpi ne, %98, %c0_i32_77 : i32
    scf.if %99 {
      %cst_94 = arith.constant 0.000000e+00 : f32
      %120 = vector.broadcast %cst_94 : f32 to vector<1x8x1xf32>
      %c0_95 = arith.constant 0 : index
      %c0_96 = arith.constant 0 : index
      %c0_97 = arith.constant 0 : index
      %121 = vector.load %arg7[%c0_95, %c0_96, %c0_97] : memref<1x8x1xf32, #tpu.memory_space<vmem>>, vector<1x8x1xf32>
      tpu.vector_store %arg7[%c0_95, %c0_96, %c0_97], %120 {strides = array<i32>} : memref<1x8x1xf32, #tpu.memory_space<vmem>>, vector<1x8x1xf32>,
      %cst_98 = arith.constant 0.000000e+00 : f32
      %122 = vector.broadcast %cst_98 : f32 to vector<1x8x1xf32>
      %c0_99 = arith.constant 0 : index
      %c0_100 = arith.constant 0 : index
      %c0_101 = arith.constant 0 : index
      %123 = vector.load %arg8[%c0_99, %c0_100, %c0_101] : memref<1x8x1xf32, #tpu.memory_space<vmem>>, vector<1x8x1xf32>
      tpu.vector_store %arg8[%c0_99, %c0_100, %c0_101], %122 {strides = array<i32>} : memref<1x8x1xf32, #tpu.memory_space<vmem>>, vector<1x8x1xf32>,
    } else {
    }
    %c0_78 = arith.constant 0 : index
    %c0_79 = arith.constant 0 : index
    %100 = vector.load %arg5[%c0_78, %c0_79] : memref<1x640xf32, #tpu.memory_space<vmem>>, vector<1x640xf32>
    %101 = vector.broadcast %100 : vector<1x640xf32> to vector<8x640xf32>
    %102 = arith.mulf %93, %101 : vector<8x640xf32>
    %c0_80 = arith.constant 0 : index
    %c0_81 = arith.constant 0 : index
    %c0_82 = arith.constant 0 : index
    %103 = vector.load %arg7[%c0_80, %c0_81, %c0_82] : memref<1x8x1xf32, #tpu.memory_space<vmem>>, vector<1x8x1xf32>
    %104 = vector.shape_cast %103 : vector<1x8x1xf32> to vector<8x1xf32>
    %cst_83 = arith.constant dense<0.000000e+00> : vector<8xf32>
    %105 = vector.multi_reduction <add>, %102, %cst_83 [1] : vector<8x640xf32> to vector<8xf32>
    %106 = vector.shape_cast %105 : vector<8xf32> to vector<8x1xf32>
    %107 = arith.addf %104, %106 : vector<8x1xf32>
    %c0_84 = arith.constant 0 : index
    %c0_85 = arith.constant 0 : index
    %c0_86 = arith.constant 0 : index
    %108 = vector.load %arg7[%c0_84, %c0_85, %c0_86] : memref<1x8x1xf32, #tpu.memory_space<vmem>>, vector<1x8x1xf32>
    %109 = vector.shape_cast %108 : vector<1x8x1xf32> to vector<8x1xf32>
    %110 = vector.shape_cast %107 : vector<8x1xf32> to vector<1x8x1xf32>
    tpu.vector_store %arg7[%c0_84, %c0_85, %c0_86], %110 {strides = array<i32>} : memref<1x8x1xf32, #tpu.memory_space<vmem>>, vector<1x8x1xf32>,
    %c0_87 = arith.constant 0 : index
    %c0_88 = arith.constant 0 : index
    %c0_89 = arith.constant 0 : index
    %111 = vector.load %arg8[%c0_87, %c0_88, %c0_89] : memref<1x8x1xf32, #tpu.memory_space<vmem>>, vector<1x8x1xf32>
    %112 = vector.shape_cast %111 : vector<1x8x1xf32> to vector<8x1xf32>
    %113 = arith.mulf %93, %102 : vector<8x640xf32>
    %cst_90 = arith.constant dense<0.000000e+00> : vector<8xf32>
    %114 = vector.multi_reduction <add>, %113, %cst_90 [1] : vector<8x640xf32> to vector<8xf32>
    %115 = vector.shape_cast %114 : vector<8xf32> to vector<8x1xf32>
    %116 = arith.addf %112, %115 : vector<8x1xf32>
    %c0_91 = arith.constant 0 : index
    %c0_92 = arith.constant 0 : index
    %c0_93 = arith.constant 0 : index
    %117 = vector.load %arg8[%c0_91, %c0_92, %c0_93] : memref<1x8x1xf32, #tpu.memory_space<vmem>>, vector<1x8x1xf32>
    %118 = vector.shape_cast %117 : vector<1x8x1xf32> to vector<8x1xf32>
    %119 = vector.shape_cast %116 : vector<8x1xf32> to vector<1x8x1xf32>
    tpu.vector_store %arg8[%c0_91, %c0_92, %c0_93], %119 {strides = array<i32>} : memref<1x8x1xf32, #tpu.memory_space<vmem>>, vector<1x8x1xf32>,
    return
  }
  func.func @transform_1(%arg0: i32, %arg1: i32) -> (i32, i32, i32) {
    %c0_i32 = arith.constant 0 : i32
    %c0_i32_0 = arith.constant 0 : i32
    %c0_i32_1 = arith.constant 0 : i32
    %c0_i32_2 = arith.constant 0 : i32
    return %c0_i32, %c0_i32_0, %c0_i32_1 : i32, i32, i32
  }
  func.func @transform_2(%arg0: i32, %arg1: i32) -> (i32, i32) {
    %c0_i32 = arith.constant 0 : i32
    %c0_i32_0 = arith.constant 0 : i32
    %c0_i32_1 = arith.constant 0 : i32
    return %c0_i32, %c0_i32_0 : i32, i32
  }
  func.func @transform_3(%arg0: i32, %arg1: i32) -> (i32, i32) {
    %c0_i32 = arith.constant 0 : i32
    %c0_i32_0 = arith.constant 0 : i32
    return %c0_i32, %arg1 : i32, i32
  }
  func.func @transform_4(%arg0: i32, %arg1: i32) -> (i32, i32, i32) {
    %c0_i32 = arith.constant 0 : i32
    %c0_i32_0 = arith.constant 0 : i32
    return %arg0, %c0_i32, %arg1 : i32, i32, i32
  }
  func.func @transform_5(%arg0: i32, %arg1: i32) -> (i32, i32, i32) {
    %c0_i32 = arith.constant 0 : i32
    %c0_i32_0 = arith.constant 0 : i32
    %c0_i32_1 = arith.constant 0 : i32
    return %arg0, %c0_i32, %c0_i32_0 : i32, i32, i32
  }
  func.func @transform_6(%arg0: i32, %arg1: i32) -> (i32, i32, i32) {
    %c0_i32 = arith.constant 0 : i32
    %c0_i32_0 = arith.constant 0 : i32
    %c0_i32_1 = arith.constant 0 : i32
    return %arg0, %c0_i32, %c0_i32_0 : i32, i32, i32
  }
}

module attributes {stable_mosaic.version = 11 : i64} {
  func.func @_bn_crop_kernel(%arg0: i32, %arg1: i32, %arg2: memref<1x8x640xf32, #tpu.memory_space<vmem>>, %arg3: memref<8x1xf32, #tpu.memory_space<vmem>>, %arg4: memref<8x1xf32, #tpu.memory_space<vmem>>, %arg5: memref<1x8x17x17xf32, #tpu.memory_space<vmem>>) attributes {dimension_semantics = [#tpu.dimension_semantics<parallel>, #tpu.dimension_semantics<parallel>], iteration_bounds = array<i64: 2, 1>, scalar_prefetch = 0 : i64, scratch_operands = 0 : i64, tpu.core_type = #tpu.core_type<tc>, window_params = [{transform_indices = @transform_0, window_bounds = array<i64: 1, 8, 640>}, {pipeline_mode = #tpu.pipeline_mode<synchronous>, transform_indices = @transform_1, window_bounds = array<i64: 8, 1>}, {pipeline_mode = #tpu.pipeline_mode<synchronous>, transform_indices = @transform_2, window_bounds = array<i64: 8, 1>}, {transform_indices = @transform_3, window_bounds = array<i64: 1, 8, 17, 17>}]} {
    %c0 = arith.constant 0 : index
    %c0_0 = arith.constant 0 : index
    %c0_1 = arith.constant 0 : index
    %0 = vector.load %arg2[%c0, %c0_0, %c0_1] : memref<1x8x640xf32, #tpu.memory_space<vmem>>, vector<1x8x640xf32>
    %1 = vector.shape_cast %0 : vector<1x8x640xf32> to vector<8x640xf32>
    %c0_2 = arith.constant 0 : index
    %c0_3 = arith.constant 0 : index
    %2 = vector.load %arg3[%c0_2, %c0_3] : memref<8x1xf32, #tpu.memory_space<vmem>>, vector<8x1xf32>
    %3 = vector.broadcast %2 : vector<8x1xf32> to vector<8x640xf32>
    %4 = arith.mulf %1, %3 : vector<8x640xf32>
    %c0_4 = arith.constant 0 : index
    %c0_5 = arith.constant 0 : index
    %5 = vector.load %arg4[%c0_4, %c0_5] : memref<8x1xf32, #tpu.memory_space<vmem>>, vector<8x1xf32>
    %6 = vector.broadcast %5 : vector<8x1xf32> to vector<8x640xf32>
    %7 = arith.addf %4, %6 : vector<8x640xf32>
    %8 = vector.extract_strided_slice %7 {offsets = [0, 0], sizes = [8, 17], strides = [1, 1]} : vector<8x640xf32> to vector<8x17xf32>
    %c0_6 = arith.constant 0 : index
    %c0_7 = arith.constant 0 : index
    %c0_8 = arith.constant 0 : index
    %c0_9 = arith.constant 0 : index
    %9 = vector.load %arg5[%c0_6, %c0_7, %c0_8, %c0_9] : memref<1x8x17x17xf32, #tpu.memory_space<vmem>>, vector<1x8x1x17xf32>
    %10 = vector.shape_cast %9 : vector<1x8x1x17xf32> to vector<8x17xf32>
    %11 = vector.shape_cast %8 : vector<8x17xf32> to vector<1x8x1x17xf32>
    tpu.vector_store %arg5[%c0_6, %c0_7, %c0_8, %c0_9], %11 {strides = array<i32>} : memref<1x8x17x17xf32, #tpu.memory_space<vmem>>, vector<1x8x1x17xf32>,
    %12 = vector.extract_strided_slice %7 {offsets = [0, 20], sizes = [8, 17], strides = [1, 1]} : vector<8x640xf32> to vector<8x17xf32>
    %c0_10 = arith.constant 0 : index
    %c0_11 = arith.constant 0 : index
    %c1 = arith.constant 1 : index
    %c0_12 = arith.constant 0 : index
    %13 = vector.load %arg5[%c0_10, %c0_11, %c1, %c0_12] : memref<1x8x17x17xf32, #tpu.memory_space<vmem>>, vector<1x8x1x17xf32>
    %14 = vector.shape_cast %13 : vector<1x8x1x17xf32> to vector<8x17xf32>
    %15 = vector.shape_cast %12 : vector<8x17xf32> to vector<1x8x1x17xf32>
    tpu.vector_store %arg5[%c0_10, %c0_11, %c1, %c0_12], %15 {strides = array<i32>} : memref<1x8x17x17xf32, #tpu.memory_space<vmem>>, vector<1x8x1x17xf32>,
    %16 = vector.extract_strided_slice %7 {offsets = [0, 40], sizes = [8, 17], strides = [1, 1]} : vector<8x640xf32> to vector<8x17xf32>
    %c0_13 = arith.constant 0 : index
    %c0_14 = arith.constant 0 : index
    %c2 = arith.constant 2 : index
    %c0_15 = arith.constant 0 : index
    %17 = vector.load %arg5[%c0_13, %c0_14, %c2, %c0_15] : memref<1x8x17x17xf32, #tpu.memory_space<vmem>>, vector<1x8x1x17xf32>
    %18 = vector.shape_cast %17 : vector<1x8x1x17xf32> to vector<8x17xf32>
    %19 = vector.shape_cast %16 : vector<8x17xf32> to vector<1x8x1x17xf32>
    tpu.vector_store %arg5[%c0_13, %c0_14, %c2, %c0_15], %19 {strides = array<i32>} : memref<1x8x17x17xf32, #tpu.memory_space<vmem>>, vector<1x8x1x17xf32>,
    %20 = vector.extract_strided_slice %7 {offsets = [0, 60], sizes = [8, 17], strides = [1, 1]} : vector<8x640xf32> to vector<8x17xf32>
    %c0_16 = arith.constant 0 : index
    %c0_17 = arith.constant 0 : index
    %c3 = arith.constant 3 : index
    %c0_18 = arith.constant 0 : index
    %21 = vector.load %arg5[%c0_16, %c0_17, %c3, %c0_18] : memref<1x8x17x17xf32, #tpu.memory_space<vmem>>, vector<1x8x1x17xf32>
    %22 = vector.shape_cast %21 : vector<1x8x1x17xf32> to vector<8x17xf32>
    %23 = vector.shape_cast %20 : vector<8x17xf32> to vector<1x8x1x17xf32>
    tpu.vector_store %arg5[%c0_16, %c0_17, %c3, %c0_18], %23 {strides = array<i32>} : memref<1x8x17x17xf32, #tpu.memory_space<vmem>>, vector<1x8x1x17xf32>,
    %24 = vector.extract_strided_slice %7 {offsets = [0, 80], sizes = [8, 17], strides = [1, 1]} : vector<8x640xf32> to vector<8x17xf32>
    %c0_19 = arith.constant 0 : index
    %c0_20 = arith.constant 0 : index
    %c4 = arith.constant 4 : index
    %c0_21 = arith.constant 0 : index
    %25 = vector.load %arg5[%c0_19, %c0_20, %c4, %c0_21] : memref<1x8x17x17xf32, #tpu.memory_space<vmem>>, vector<1x8x1x17xf32>
    %26 = vector.shape_cast %25 : vector<1x8x1x17xf32> to vector<8x17xf32>
    %27 = vector.shape_cast %24 : vector<8x17xf32> to vector<1x8x1x17xf32>
    tpu.vector_store %arg5[%c0_19, %c0_20, %c4, %c0_21], %27 {strides = array<i32>} : memref<1x8x17x17xf32, #tpu.memory_space<vmem>>, vector<1x8x1x17xf32>,
    %28 = vector.extract_strided_slice %7 {offsets = [0, 100], sizes = [8, 17], strides = [1, 1]} : vector<8x640xf32> to vector<8x17xf32>
    %c0_22 = arith.constant 0 : index
    %c0_23 = arith.constant 0 : index
    %c5 = arith.constant 5 : index
    %c0_24 = arith.constant 0 : index
    %29 = vector.load %arg5[%c0_22, %c0_23, %c5, %c0_24] : memref<1x8x17x17xf32, #tpu.memory_space<vmem>>, vector<1x8x1x17xf32>
    %30 = vector.shape_cast %29 : vector<1x8x1x17xf32> to vector<8x17xf32>
    %31 = vector.shape_cast %28 : vector<8x17xf32> to vector<1x8x1x17xf32>
    tpu.vector_store %arg5[%c0_22, %c0_23, %c5, %c0_24], %31 {strides = array<i32>} : memref<1x8x17x17xf32, #tpu.memory_space<vmem>>, vector<1x8x1x17xf32>,
    %32 = vector.extract_strided_slice %7 {offsets = [0, 120], sizes = [8, 17], strides = [1, 1]} : vector<8x640xf32> to vector<8x17xf32>
    %c0_25 = arith.constant 0 : index
    %c0_26 = arith.constant 0 : index
    %c6 = arith.constant 6 : index
    %c0_27 = arith.constant 0 : index
    %33 = vector.load %arg5[%c0_25, %c0_26, %c6, %c0_27] : memref<1x8x17x17xf32, #tpu.memory_space<vmem>>, vector<1x8x1x17xf32>
    %34 = vector.shape_cast %33 : vector<1x8x1x17xf32> to vector<8x17xf32>
    %35 = vector.shape_cast %32 : vector<8x17xf32> to vector<1x8x1x17xf32>
    tpu.vector_store %arg5[%c0_25, %c0_26, %c6, %c0_27], %35 {strides = array<i32>} : memref<1x8x17x17xf32, #tpu.memory_space<vmem>>, vector<1x8x1x17xf32>,
    %36 = vector.extract_strided_slice %7 {offsets = [0, 140], sizes = [8, 17], strides = [1, 1]} : vector<8x640xf32> to vector<8x17xf32>
    %c0_28 = arith.constant 0 : index
    %c0_29 = arith.constant 0 : index
    %c7 = arith.constant 7 : index
    %c0_30 = arith.constant 0 : index
    %37 = vector.load %arg5[%c0_28, %c0_29, %c7, %c0_30] : memref<1x8x17x17xf32, #tpu.memory_space<vmem>>, vector<1x8x1x17xf32>
    %38 = vector.shape_cast %37 : vector<1x8x1x17xf32> to vector<8x17xf32>
    %39 = vector.shape_cast %36 : vector<8x17xf32> to vector<1x8x1x17xf32>
    tpu.vector_store %arg5[%c0_28, %c0_29, %c7, %c0_30], %39 {strides = array<i32>} : memref<1x8x17x17xf32, #tpu.memory_space<vmem>>, vector<1x8x1x17xf32>,
    %40 = vector.extract_strided_slice %7 {offsets = [0, 160], sizes = [8, 17], strides = [1, 1]} : vector<8x640xf32> to vector<8x17xf32>
    %c0_31 = arith.constant 0 : index
    %c0_32 = arith.constant 0 : index
    %c8 = arith.constant 8 : index
    %c0_33 = arith.constant 0 : index
    %41 = vector.load %arg5[%c0_31, %c0_32, %c8, %c0_33] : memref<1x8x17x17xf32, #tpu.memory_space<vmem>>, vector<1x8x1x17xf32>
    %42 = vector.shape_cast %41 : vector<1x8x1x17xf32> to vector<8x17xf32>
    %43 = vector.shape_cast %40 : vector<8x17xf32> to vector<1x8x1x17xf32>
    tpu.vector_store %arg5[%c0_31, %c0_32, %c8, %c0_33], %43 {strides = array<i32>} : memref<1x8x17x17xf32, #tpu.memory_space<vmem>>, vector<1x8x1x17xf32>,
    %44 = vector.extract_strided_slice %7 {offsets = [0, 180], sizes = [8, 17], strides = [1, 1]} : vector<8x640xf32> to vector<8x17xf32>
    %c0_34 = arith.constant 0 : index
    %c0_35 = arith.constant 0 : index
    %c9 = arith.constant 9 : index
    %c0_36 = arith.constant 0 : index
    %45 = vector.load %arg5[%c0_34, %c0_35, %c9, %c0_36] : memref<1x8x17x17xf32, #tpu.memory_space<vmem>>, vector<1x8x1x17xf32>
    %46 = vector.shape_cast %45 : vector<1x8x1x17xf32> to vector<8x17xf32>
    %47 = vector.shape_cast %44 : vector<8x17xf32> to vector<1x8x1x17xf32>
    tpu.vector_store %arg5[%c0_34, %c0_35, %c9, %c0_36], %47 {strides = array<i32>} : memref<1x8x17x17xf32, #tpu.memory_space<vmem>>, vector<1x8x1x17xf32>,
    %48 = vector.extract_strided_slice %7 {offsets = [0, 200], sizes = [8, 17], strides = [1, 1]} : vector<8x640xf32> to vector<8x17xf32>
    %c0_37 = arith.constant 0 : index
    %c0_38 = arith.constant 0 : index
    %c10 = arith.constant 10 : index
    %c0_39 = arith.constant 0 : index
    %49 = vector.load %arg5[%c0_37, %c0_38, %c10, %c0_39] : memref<1x8x17x17xf32, #tpu.memory_space<vmem>>, vector<1x8x1x17xf32>
    %50 = vector.shape_cast %49 : vector<1x8x1x17xf32> to vector<8x17xf32>
    %51 = vector.shape_cast %48 : vector<8x17xf32> to vector<1x8x1x17xf32>
    tpu.vector_store %arg5[%c0_37, %c0_38, %c10, %c0_39], %51 {strides = array<i32>} : memref<1x8x17x17xf32, #tpu.memory_space<vmem>>, vector<1x8x1x17xf32>,
    %52 = vector.extract_strided_slice %7 {offsets = [0, 220], sizes = [8, 17], strides = [1, 1]} : vector<8x640xf32> to vector<8x17xf32>
    %c0_40 = arith.constant 0 : index
    %c0_41 = arith.constant 0 : index
    %c11 = arith.constant 11 : index
    %c0_42 = arith.constant 0 : index
    %53 = vector.load %arg5[%c0_40, %c0_41, %c11, %c0_42] : memref<1x8x17x17xf32, #tpu.memory_space<vmem>>, vector<1x8x1x17xf32>
    %54 = vector.shape_cast %53 : vector<1x8x1x17xf32> to vector<8x17xf32>
    %55 = vector.shape_cast %52 : vector<8x17xf32> to vector<1x8x1x17xf32>
    tpu.vector_store %arg5[%c0_40, %c0_41, %c11, %c0_42], %55 {strides = array<i32>} : memref<1x8x17x17xf32, #tpu.memory_space<vmem>>, vector<1x8x1x17xf32>,
    %56 = vector.extract_strided_slice %7 {offsets = [0, 240], sizes = [8, 17], strides = [1, 1]} : vector<8x640xf32> to vector<8x17xf32>
    %c0_43 = arith.constant 0 : index
    %c0_44 = arith.constant 0 : index
    %c12 = arith.constant 12 : index
    %c0_45 = arith.constant 0 : index
    %57 = vector.load %arg5[%c0_43, %c0_44, %c12, %c0_45] : memref<1x8x17x17xf32, #tpu.memory_space<vmem>>, vector<1x8x1x17xf32>
    %58 = vector.shape_cast %57 : vector<1x8x1x17xf32> to vector<8x17xf32>
    %59 = vector.shape_cast %56 : vector<8x17xf32> to vector<1x8x1x17xf32>
    tpu.vector_store %arg5[%c0_43, %c0_44, %c12, %c0_45], %59 {strides = array<i32>} : memref<1x8x17x17xf32, #tpu.memory_space<vmem>>, vector<1x8x1x17xf32>,
    %60 = vector.extract_strided_slice %7 {offsets = [0, 260], sizes = [8, 17], strides = [1, 1]} : vector<8x640xf32> to vector<8x17xf32>
    %c0_46 = arith.constant 0 : index
    %c0_47 = arith.constant 0 : index
    %c13 = arith.constant 13 : index
    %c0_48 = arith.constant 0 : index
    %61 = vector.load %arg5[%c0_46, %c0_47, %c13, %c0_48] : memref<1x8x17x17xf32, #tpu.memory_space<vmem>>, vector<1x8x1x17xf32>
    %62 = vector.shape_cast %61 : vector<1x8x1x17xf32> to vector<8x17xf32>
    %63 = vector.shape_cast %60 : vector<8x17xf32> to vector<1x8x1x17xf32>
    tpu.vector_store %arg5[%c0_46, %c0_47, %c13, %c0_48], %63 {strides = array<i32>} : memref<1x8x17x17xf32, #tpu.memory_space<vmem>>, vector<1x8x1x17xf32>,
    %64 = vector.extract_strided_slice %7 {offsets = [0, 280], sizes = [8, 17], strides = [1, 1]} : vector<8x640xf32> to vector<8x17xf32>
    %c0_49 = arith.constant 0 : index
    %c0_50 = arith.constant 0 : index
    %c14 = arith.constant 14 : index
    %c0_51 = arith.constant 0 : index
    %65 = vector.load %arg5[%c0_49, %c0_50, %c14, %c0_51] : memref<1x8x17x17xf32, #tpu.memory_space<vmem>>, vector<1x8x1x17xf32>
    %66 = vector.shape_cast %65 : vector<1x8x1x17xf32> to vector<8x17xf32>
    %67 = vector.shape_cast %64 : vector<8x17xf32> to vector<1x8x1x17xf32>
    tpu.vector_store %arg5[%c0_49, %c0_50, %c14, %c0_51], %67 {strides = array<i32>} : memref<1x8x17x17xf32, #tpu.memory_space<vmem>>, vector<1x8x1x17xf32>,
    %68 = vector.extract_strided_slice %7 {offsets = [0, 300], sizes = [8, 17], strides = [1, 1]} : vector<8x640xf32> to vector<8x17xf32>
    %c0_52 = arith.constant 0 : index
    %c0_53 = arith.constant 0 : index
    %c15 = arith.constant 15 : index
    %c0_54 = arith.constant 0 : index
    %69 = vector.load %arg5[%c0_52, %c0_53, %c15, %c0_54] : memref<1x8x17x17xf32, #tpu.memory_space<vmem>>, vector<1x8x1x17xf32>
    %70 = vector.shape_cast %69 : vector<1x8x1x17xf32> to vector<8x17xf32>
    %71 = vector.shape_cast %68 : vector<8x17xf32> to vector<1x8x1x17xf32>
    tpu.vector_store %arg5[%c0_52, %c0_53, %c15, %c0_54], %71 {strides = array<i32>} : memref<1x8x17x17xf32, #tpu.memory_space<vmem>>, vector<1x8x1x17xf32>,
    %72 = vector.extract_strided_slice %7 {offsets = [0, 320], sizes = [8, 17], strides = [1, 1]} : vector<8x640xf32> to vector<8x17xf32>
    %c0_55 = arith.constant 0 : index
    %c0_56 = arith.constant 0 : index
    %c16 = arith.constant 16 : index
    %c0_57 = arith.constant 0 : index
    %73 = vector.load %arg5[%c0_55, %c0_56, %c16, %c0_57] : memref<1x8x17x17xf32, #tpu.memory_space<vmem>>, vector<1x8x1x17xf32>
    %74 = vector.shape_cast %73 : vector<1x8x1x17xf32> to vector<8x17xf32>
    %75 = vector.shape_cast %72 : vector<8x17xf32> to vector<1x8x1x17xf32>
    tpu.vector_store %arg5[%c0_55, %c0_56, %c16, %c0_57], %75 {strides = array<i32>} : memref<1x8x17x17xf32, #tpu.memory_space<vmem>>, vector<1x8x1x17xf32>,
    return
  }
  func.func @transform_0(%arg0: i32, %arg1: i32) -> (i32, i32, i32) {
    %c0_i32 = arith.constant 0 : i32
    %c0_i32_0 = arith.constant 0 : i32
    return %arg0, %c0_i32, %arg1 : i32, i32, i32
  }
  func.func @transform_1(%arg0: i32, %arg1: i32) -> (i32, i32) {
    %c0_i32 = arith.constant 0 : i32
    %c0_i32_0 = arith.constant 0 : i32
    %c0_i32_1 = arith.constant 0 : i32
    return %c0_i32, %c0_i32_0 : i32, i32
  }
  func.func @transform_2(%arg0: i32, %arg1: i32) -> (i32, i32) {
    %c0_i32 = arith.constant 0 : i32
    %c0_i32_0 = arith.constant 0 : i32
    %c0_i32_1 = arith.constant 0 : i32
    return %c0_i32, %c0_i32_0 : i32, i32
  }
  func.func @transform_3(%arg0: i32, %arg1: i32) -> (i32, i32, i32, i32) {
    %c0_i32 = arith.constant 0 : i32
    %c0_i32_0 = arith.constant 0 : i32
    %c0_i32_1 = arith.constant 0 : i32
    return %arg0, %c0_i32, %arg1, %c0_i32_0 : i32, i32, i32, i32
  }
}

</mosaic_0001>

<llo_original>
// kernel: cdk2d_forward.3
$region0: #{cdk2d_forward.3}
  #allocation0 [shape = 'u32[]', space=smem, size = 0x4, offset = 0x4, fixed_abs, tag = 'smem constant byte address 0x4 - core index']
  #allocation1 [shape = 'u32[72,128]{1,0:T(1,128)}', space=vmem, size = 0x9000, scoped, tag = 'internal scratch']
  %s0 = inlined_call_operand.vmem [shape: f32[2,8,640], index: 0, kind: input, shape index: {}]
  %s1 = inlined_call_operand.vmem [shape: f32[8,1], index: 1, kind: input, shape index: {}]
  %s2 = inlined_call_operand.vmem [shape: f32[8,1], index: 2, kind: input, shape index: {}]
  %s3 = inlined_call_operand.vmem [shape: f32[2,8,17,17], index: 3, kind: output, shape index: {}]
  %s4 = sld [smem:[#allocation0]]
  $region45: #{cdk2d_forward.3} parent=0
    _
  %s6 = ssub.s32 1, %s4
  %s7 = scalar_select 0, %s6, %s4
  loop: start=0, step=1, limit=4
  $region2: #{cdk2d_forward.3} parent=0 // loop_pre_header
    _
  $region3: #{cdk2d_forward.3} parent=0 // loop_header
    %s9 = sphi 0, %s13
    %p10 = scmp.ge.s32.totalorder %s9, 4
    %s16 = sphi 0, %s28
    %s17 = sphi 0, %s24
    %s18 = sphi 0, %s16
    %s19 = sphi 0, %s17
    %s20 = sphi 0, %s18
    %s21 = sphi 0, %s19
    %s33 = sphi 0, %s35
    %s36 = sphi 0, %s33
    %s37 = sphi 0, %s36
    %s53 = sphi 0, %s37
    %s57 = sphi 0, %s57
    %s59 = sphi 0, %s57
    %s60 = sphi 0, %s59
    %s74 = sphi 0, %s60
    %s78 = sphi 0, %s78
    %s80 = sphi 0, %s78
    %s81 = sphi 0, %s80
    %s95 = sphi 0, %s81
    %s103 = sphi 0, %s105
    %s106 = sphi 0, %s103
    %s107 = sphi 0, %s106
    %s123 = sphi 0, %s107
  $region4: #{cdk2d_forward.3} parent=0 // loop_header_branch
    %12 = sbr.rel (%p10) target = $region8
  $region5: #{cdk2d_forward.3} parent=0 // loop_body
    %s14 = ssub.s32 %s9, 1
    %s15 = ssub.s32 %s9, 2
    %s22 = sadd.s32 1, %s17
    %p23 = scmp.ge.s32.totalorder %s22, 1
    %s24 = scalar_select %p23, 0, %s22
    %s25 = sadd.s32 1, %s16
    %s26 = scalar_select %p23, %s25, %s16
    %p27 = scmp.ge.s32.totalorder %s26, 2
    %s28 = scalar_select %p27, 0, %s26
    %s29 = ssub.s32 %s16, %s28
    %s30 = ssub.s32 %s17, %s24
    %s31 = sor.u32 %s29, %s30
    %p32 = scmp.eq.s32.totalorder %s31, 0
    %s34 = sadd.s32 %s33, 1
    %s35 = scalar_select %p32, %s33, %s34
    %p38 = pneg %p32
    %p39 = scmp.eq.s32.totalorder %s9, 1
    %p40 = por %p38, %p39
    %p41 = scmp.ne.s32.totalorder %s33, %s36
    %p42 = scmp.eq.s32.totalorder %s9, 0
    %p43 = por %p41, %p42
    %p44 = scmp.ne.s32.totalorder %s33, %s36
    %p45 = scmp.eq.s32.totalorder %s14, 1
    %p46 = por %p44, %p45
    %p47 = scmp.ne.s32.totalorder %s36, %s37
    %p48 = scmp.eq.s32.totalorder %s14, 0
    %p49 = por %p47, %p48
    %p50 = scmp.ne.s32.totalorder %s36, %s37
    %p51 = scmp.eq.s32.totalorder %s15, 1
    %p52 = por %p50, %p51
    %p54 = scmp.ne.s32.totalorder %s37, %s53
    %p55 = scmp.eq.s32.totalorder %s15, 0
    %p56 = por %p54, %p55
    %s58 = sadd.s32 %s57, 1
    %p61 = scmp.eq.s32.totalorder %s9, 1
    %p62 = scmp.ne.s32.totalorder %s57, %s59
    %p63 = scmp.eq.s32.totalorder %s9, 0
    %p64 = por %p62, %p63
    %p65 = scmp.ne.s32.totalorder %s57, %s59
    %p66 = scmp.eq.s32.totalorder %s14, 1
    %p67 = por %p65, %p66
    %p68 = scmp.ne.s32.totalorder %s59, %s60
    %p69 = scmp.eq.s32.totalorder %s14, 0
    %p70 = por %p68, %p69
    %p71 = scmp.ne.s32.totalorder %s59, %s60
    %p72 = scmp.eq.s32.totalorder %s15, 1
    %p73 = por %p71, %p72
    %p75 = scmp.ne.s32.totalorder %s60, %s74
    %p76 = scmp.eq.s32.totalorder %s15, 0
    %p77 = por %p75, %p76
    %s79 = sadd.s32 %s78, 1
    %p82 = scmp.eq.s32.totalorder %s9, 1
    %p83 = scmp.ne.s32.totalorder %s78, %s80
    %p84 = scmp.eq.s32.totalorder %s9, 0
    %p85 = por %p83, %p84
    %p86 = scmp.ne.s32.totalorder %s78, %s80
    %p87 = scmp.eq.s32.totalorder %s14, 1
    %p88 = por %p86, %p87
    %p89 = scmp.ne.s32.totalorder %s80, %s81
    %p90 = scmp.eq.s32.totalorder %s14, 0
    %p91 = por %p89, %p90
    %p92 = scmp.ne.s32.totalorder %s80, %s81
    %p93 = scmp.eq.s32.totalorder %s15, 1
    %p94 = por %p92, %p93
    %p96 = scmp.ne.s32.totalorder %s81, %s95
    %p97 = scmp.eq.s32.totalorder %s15, 0
    %p98 = por %p96, %p97
    %s99 = ssub.s32 %s16, %s28
    %s100 = ssub.s32 %s17, %s24
    %s101 = sor.u32 %s99, %s100
    %p102 = scmp.eq.s32.totalorder %s101, 0
    %s104 = sadd.s32 %s103, 1
    %s105 = scalar_select %p102, %s103, %s104
    %p108 = pneg %p102
    %p109 = scmp.eq.s32.totalorder %s9, 1
    %p110 = por %p108, %p109
    %p111 = scmp.ne.s32.totalorder %s103, %s106
    %p112 = scmp.eq.s32.totalorder %s9, 0
    %p113 = por %p111, %p112
    %p114 = scmp.ne.s32.totalorder %s103, %s106
    %p115 = scmp.eq.s32.totalorder %s14, 1
    %p116 = por %p114, %p115
    %p117 = scmp.ne.s32.totalorder %s106, %s107
    %p118 = scmp.eq.s32.totalorder %s14, 0
    %p119 = por %p117, %p118
    %p120 = scmp.ne.s32.totalorder %s106, %s107
    %p121 = scmp.eq.s32.totalorder %s15, 1
    %p122 = por %p120, %p121
    %p124 = scmp.ne.s32.totalorder %s107, %s123
    %p125 = scmp.eq.s32.totalorder %s15, 0
    %p126 = por %p124, %p125
    %p127 = scmp.le.s32.totalorder 1, %s9
    %p128 = scmp.lt.s32.totalorder %s9, 3
    %p129 = pnand %p127, %p128
    %p130 = pneg %p129
    // Predicated region
    $region9: #{cdk2d_forward.3} parent=5 // pred_check
      _
    $region10: #{cdk2d_forward.3} parent=5 // pred_check_branch
      %132 = sbr.rel (%p129) target = $region12
    $region11: #{cdk2d_forward.3} parent=5 // pred_region
      %s133 = ssub.s32 %s9, 1
      // Predicated region
      $region13: #{cdk2d_forward.3} parent=11 // pred_check
        %p134 = pneg %p70
      $region14: #{cdk2d_forward.3} parent=11 // pred_check_branch
        %136 = sbr.rel (%p134) target = $region16
      $region15: #{cdk2d_forward.3} parent=11 // pred_region
        _
      $region16: #{cdk2d_forward.3} parent=11 // pred_fallthru
        _
      // Predicated region
      $region17: #{cdk2d_forward.3} parent=11 // pred_check
        %p137 = pneg %p91
      $region18: #{cdk2d_forward.3} parent=11 // pred_check_branch
        %139 = sbr.rel (%p137) target = $region20
      $region19: #{cdk2d_forward.3} parent=11 // pred_region
        _
      $region20: #{cdk2d_forward.3} parent=11 // pred_fallthru
        _
    $region12: #{cdk2d_forward.3} parent=5 // pred_fallthru
      _
    %p140 = scmp.lt.s32.totalorder %s9, 2
    // Predicated region
    $region21: #{cdk2d_forward.3} parent=5 // pred_check
      %p141 = pneg %p140
    $region22: #{cdk2d_forward.3} parent=5 // pred_check_branch
      %143 = sbr.rel (%p141) target = $region24
    $region23: #{cdk2d_forward.3} parent=5 // pred_region
      // Predicated region
      $region25: #{cdk2d_forward.3} parent=23 // pred_check
        %p144 = pneg %p43
      $region26: #{cdk2d_forward.3} parent=23 // pred_check_branch
        %146 = sbr.rel (%p144) target = $region28
      $region27: #{cdk2d_forward.3} parent=23 // pred_region
        %s147 = smul.u32 5, %s17
        %p148 = scmp.lt.s32.totalorder %s16, 1
        %s149 = scalar_select %p148, %s16, 1
        %p150 = scmp.lt.s32.totalorder %s147, 4
        %s151 = scalar_select %p150, %s147, 4
        %s152 = smul.addr %s149, 5
        %s153 = sadd.s32 %s151, %s152
        %s154 = smul.addr %s153, 8
        %s155 = scalar_lea.vmem %s0, %s154
        %s156 = smul.u32 5, %s17
      $region28: #{cdk2d_forward.3} parent=23 // pred_fallthru
        _
    $region24: #{cdk2d_forward.3} parent=5 // pred_fallthru
      _
    %p157 = scmp.le.s32.totalorder 1, %s9
    %p158 = scmp.lt.s32.totalorder %s9, 3
    %p159 = pnand %p157, %p158
    %p160 = pneg %p159
    // Predicated region
    $region29: #{cdk2d_forward.3} parent=5 // pred_check
      _
    $region30: #{cdk2d_forward.3} parent=5 // pred_check_branch
      %162 = sbr.rel (%p159) target = $region32
    $region31: #{cdk2d_forward.3} parent=5 // pred_region
      %s163 = ssub.s32 %s9, 1
      %s164 = smul.u32 5, %s19
      %p165 = scmp.lt.s32.totalorder %s18, 1
      %s166 = scalar_select %p165, %s18, 1
      %p167 = scmp.lt.s32.totalorder %s164, 4
      %s168 = scalar_select %p167, %s164, 4
      %s169 = smul.addr %s166, 5
      %s170 = sadd.s32 %s168, %s169
      %s171 = smul.addr %s170, 8
      %s172 = scalar_lea.vmem %s0, %s171
      %p173 = pneg %p49
      %p174 = pneg %p46
      %p175 = pneg %p70
      %p176 = pneg %p67
      %p177 = pneg %p91
      %p178 = pneg %p88
      %p179 = pneg %p119
      %p180 = pneg %p116
      %s181 = smul.u32 3, %s19
      %p182 = scmp.lt.s32.totalorder %s18, 1
      %s183 = scalar_select %p182, %s18, 1
      %p184 = scmp.lt.s32.totalorder %s181, 2
      %s185 = scalar_select %p184, %s181, 2
      %s186 = smul.addr %s183, 24
      %s187 = sadd.s32 %s185, %s186
      %s188 = smul.addr %s187, 8
      %s189 = scalar_lea.vmem %s3, %s188
      %s190 = smul.u32 5, %s19
      %p191 = scmp.lt.s32.totalorder %s18, 1
      %s192 = scalar_select %p191, %s18, 1
      %p193 = scmp.lt.s32.totalorder %s190, 4
      %s194 = scalar_select %p193, %s190, 4
      %s195 = smul.addr %s192, 5
      %s196 = sadd.s32 %s194, %s195
      %s197 = smul.addr %s196, 8
      %s198 = scalar_lea.vmem %s0, %s197
      %s199 = smul.u32 5, %s19
      %s200 = smul.u32 3, %s19
      %p201 = scmp.lt.s32.totalorder %s18, 1
      %s202 = scalar_select %p201, %s18, 1
      %p203 = scmp.lt.s32.totalorder %s200, 2
      %s204 = scalar_select %p203, %s200, 2
      %s205 = smul.addr %s202, 24
      %s206 = sadd.s32 %s204, %s205
      %s207 = smul.addr %s206, 8
      %s208 = scalar_lea.vmem %s3, %s207
      %s209 = smul.u32 3, %s19
      %v210 = vld [vmem:[%s198] sm:$0xff]
      %v211 = vld [vmem:[%s198 + $0x8] sm:$0xff]
      %v212 = vld [vmem:[%s198 + $0x10] sm:$0xff]
      %v213 = vld [vmem:[%s1] sm:$0xff]
      %215 = vset.pattern.permute.xlu0 0
      %216 = vperm.xlu0 %215, %v213
      %v217 = vpop.permute.xlu0 %216
      %v219 = vmul.f32 %v210, %v217
      %v220 = vmul.f32 %v211, %v217
      %v221 = vmul.f32 %v212, %v217
      %v222 = vld [vmem:[%s2] sm:$0xff]
      %224 = vset.pattern.permute.xlu0 0
      %225 = vperm.xlu0 %224, %v222
      %v226 = vpop.permute.xlu0 %225
      %v228 = vadd.f32 %v219, %v226
      %v229 = vadd.f32 %v220, %v226
      %v230 = vadd.f32 %v221, %v226
      %v232 = vrot.slane %v228, 1
      %v233 = vrot.slane %v228, 2
      %v234 = vrot.slane %v228, 3
      %v235 = vrot.slane %v228, 4
      %v236 = vrot.slane %v228, 5
      %v237 = vrot.slane %v228, 6
      %v238 = vrot.slane %v228, 7
      %vm246 = vcmask 131072
      %247 = vst.msk [vmem:[%s208] sm:$0x1] %vm246, %v228
      %248 = vst.msk [vmem:[%s208 + $0x18] sm:$0x1] %vm246, %v232
      %249 = vst.msk [vmem:[%s208 + $0x30] sm:$0x1] %vm246, %v233
      %250 = vst.msk [vmem:[%s208 + $0x48] sm:$0x1] %vm246, %v234
      %251 = vst.msk [vmem:[%s208 + $0x60] sm:$0x1] %vm246, %v235
      %252 = vst.msk [vmem:[%s208 + $0x78] sm:$0x1] %vm246, %v236
      %253 = vst.msk [vmem:[%s208 + $0x90] sm:$0x1] %vm246, %v237
      %254 = vst.msk [vmem:[%s208 + $0xa8] sm:$0x1] %vm246, %v238
      %v255 = vperm.slane %v228, 0
      %v256 = vperm.slane %v232, 0
      %v257 = vperm.slane %v233, 0
      %v258 = vperm.slane %v234, 0
      %v259 = vperm.slane %v235, 0
      %v260 = vperm.slane %v236, 0
      %v261 = vperm.slane %v237, 0
      %v262 = vperm.slane %v238, 0
      %263 = vrot.lane.b32.xlu0 %v255, 108
      %v264 = vpop.permute.xlu0 %263
      %265 = vrot.lane.b32.xlu0 %v256, 108
      %v266 = vpop.permute.xlu0 %265
      %267 = vrot.lane.b32.xlu0 %v257, 108
      %v268 = vpop.permute.xlu0 %267
      %269 = vrot.lane.b32.xlu0 %v258, 108
      %v270 = vpop.permute.xlu0 %269
      %271 = vrot.lane.b32.xlu0 %v259, 108
      %v272 = vpop.permute.xlu0 %271
      %273 = vrot.lane.b32.xlu0 %v260, 108
      %v274 = vpop.permute.xlu0 %273
      %275 = vrot.lane.b32.xlu0 %v261, 108
      %v276 = vpop.permute.xlu0 %275
      %277 = vrot.lane.b32.xlu0 %v262, 108
      %v278 = vpop.permute.xlu0 %277
      %287 = vst.msk [vmem:[%s208 + $0x1] sm:$0x1] %vm246, %v264
      %288 = vst.msk [vmem:[%s208 + $0x19] sm:$0x1] %vm246, %v266
      %289 = vst.msk [vmem:[%s208 + $0x31] sm:$0x1] %vm246, %v268
      %290 = vst.msk [vmem:[%s208 + $0x49] sm:$0x1] %vm246, %v270
      %291 = vst.msk [vmem:[%s208 + $0x61] sm:$0x1] %vm246, %v272
      %292 = vst.msk [vmem:[%s208 + $0x79] sm:$0x1] %vm246, %v274
      %293 = vst.msk [vmem:[%s208 + $0x91] sm:$0x1] %vm246, %v276
      %294 = vst.msk [vmem:[%s208 + $0xa9] sm:$0x1] %vm246, %v278
      %295 = vrot.lane.b32.xlu0 %v255, 88
      %v296 = vpop.permute.xlu0 %295
      %297 = vrot.lane.b32.xlu0 %v256, 88
      %v298 = vpop.permute.xlu0 %297
      %299 = vrot.lane.b32.xlu0 %v257, 88
      %v300 = vpop.permute.xlu0 %299
      %301 = vrot.lane.b32.xlu0 %v258, 88
      %v302 = vpop.permute.xlu0 %301
      %303 = vrot.lane.b32.xlu0 %v259, 88
      %v304 = vpop.permute.xlu0 %303
      %305 = vrot.lane.b32.xlu0 %v260, 88
      %v306 = vpop.permute.xlu0 %305
      %307 = vrot.lane.b32.xlu0 %v261, 88
      %v308 = vpop.permute.xlu0 %307
      %309 = vrot.lane.b32.xlu0 %v262, 88
      %v310 = vpop.permute.xlu0 %309
      %319 = vst.msk [vmem:[%s208 + $0x2] sm:$0x1] %vm246, %v296
      %320 = vst.msk [vmem:[%s208 + $0x1a] sm:$0x1] %vm246, %v298
      %321 = vst.msk [vmem:[%s208 + $0x32] sm:$0x1] %vm246, %v300
      %322 = vst.msk [vmem:[%s208 + $0x4a] sm:$0x1] %vm246, %v302
      %323 = vst.msk [vmem:[%s208 + $0x62] sm:$0x1] %vm246, %v304
      %324 = vst.msk [vmem:[%s208 + $0x7a] sm:$0x1] %vm246, %v306
      %325 = vst.msk [vmem:[%s208 + $0x92] sm:$0x1] %vm246, %v308
      %326 = vst.msk [vmem:[%s208 + $0xaa] sm:$0x1] %vm246, %v310
      %327 = vrot.lane.b32.xlu0 %v255, 68
      %v328 = vpop.permute.xlu0 %327
      %329 = vrot.lane.b32.xlu0 %v256, 68
      %v330 = vpop.permute.xlu0 %329
      %331 = vrot.lane.b32.xlu0 %v257, 68
      %v332 = vpop.permute.xlu0 %331
      %333 = vrot.lane.b32.xlu0 %v258, 68
      %v334 = vpop.permute.xlu0 %333
      %335 = vrot.lane.b32.xlu0 %v259, 68
      %v336 = vpop.permute.xlu0 %335
      %337 = vrot.lane.b32.xlu0 %v260, 68
      %v338 = vpop.permute.xlu0 %337
      %339 = vrot.lane.b32.xlu0 %v261, 68
      %v340 = vpop.permute.xlu0 %339
      %341 = vrot.lane.b32.xlu0 %v262, 68
      %v342 = vpop.permute.xlu0 %341
      %351 = vst.msk [vmem:[%s208 + $0x3] sm:$0x1] %vm246, %v328
      %352 = vst.msk [vmem:[%s208 + $0x1b] sm:$0x1] %vm246, %v330
      %353 = vst.msk [vmem:[%s208 + $0x33] sm:$0x1] %vm246, %v332
      %354 = vst.msk [vmem:[%s208 + $0x4b] sm:$0x1] %vm246, %v334
      %355 = vst.msk [vmem:[%s208 + $0x63] sm:$0x1] %vm246, %v336
      %356 = vst.msk [vmem:[%s208 + $0x7b] sm:$0x1] %vm246, %v338
      %357 = vst.msk [vmem:[%s208 + $0x93] sm:$0x1] %vm246, %v340
      %358 = vst.msk [vmem:[%s208 + $0xab] sm:$0x1] %vm246, %v342
      %359 = vrot.lane.b32.xlu0 %v255, 48
      %v360 = vpop.permute.xlu0 %359
      %361 = vrot.lane.b32.xlu0 %v256, 48
      %v362 = vpop.permute.xlu0 %361
      %363 = vrot.lane.b32.xlu0 %v257, 48
      %v364 = vpop.permute.xlu0 %363
      %365 = vrot.lane.b32.xlu0 %v258, 48
      %v366 = vpop.permute.xlu0 %365
      %367 = vrot.lane.b32.xlu0 %v259, 48
      %v368 = vpop.permute.xlu0 %367
      %369 = vrot.lane.b32.xlu0 %v260, 48
      %v370 = vpop.permute.xlu0 %369
      %371 = vrot.lane.b32.xlu0 %v261, 48
      %v372 = vpop.permute.xlu0 %371
      %373 = vrot.lane.b32.xlu0 %v262, 48
      %v374 = vpop.permute.xlu0 %373
      %383 = vst.msk [vmem:[%s208 + $0x4] sm:$0x1] %vm246, %v360
      %384 = vst.msk [vmem:[%s208 + $0x1c] sm:$0x1] %vm246, %v362
      %385 = vst.msk [vmem:[%s208 + $0x34] sm:$0x1] %vm246, %v364
      %386 = vst.msk [vmem:[%s208 + $0x4c] sm:$0x1] %vm246, %v366
      %387 = vst.msk [vmem:[%s208 + $0x64] sm:$0x1] %vm246, %v368
      %388 = vst.msk [vmem:[%s208 + $0x7c] sm:$0x1] %vm246, %v370
      %389 = vst.msk [vmem:[%s208 + $0x94] sm:$0x1] %vm246, %v372
      %390 = vst.msk [vmem:[%s208 + $0xac] sm:$0x1] %vm246, %v374
      %391 = vrot.lane.b32.xlu0 %v255, 28
      %v392 = vpop.permute.xlu0 %391
      %393 = vrot.lane.b32.xlu0 %v256, 28
      %v394 = vpop.permute.xlu0 %393
      %395 = vrot.lane.b32.xlu0 %v257, 28
      %v396 = vpop.permute.xlu0 %395
      %397 = vrot.lane.b32.xlu0 %v258, 28
      %v398 = vpop.permute.xlu0 %397
      %399 = vrot.lane.b32.xlu0 %v259, 28
      %v400 = vpop.permute.xlu0 %399
      %401 = vrot.lane.b32.xlu0 %v260, 28
      %v402 = vpop.permute.xlu0 %401
      %403 = vrot.lane.b32.xlu0 %v261, 28
      %v404 = vpop.permute.xlu0 %403
      %405 = vrot.lane.b32.xlu0 %v262, 28
      %v406 = vpop.permute.xlu0 %405
      %415 = vst.msk [vmem:[%s208 + $0x5] sm:$0x1] %vm246, %v392
      %416 = vst.msk [vmem:[%s208 + $0x1d] sm:$0x1] %vm246, %v394
      %417 = vst.msk [vmem:[%s208 + $0x35] sm:$0x1] %vm246, %v396
      %418 = vst.msk [vmem:[%s208 + $0x4d] sm:$0x1] %vm246, %v398
      %419 = vst.msk [vmem:[%s208 + $0x65] sm:$0x1] %vm246, %v400
      %420 = vst.msk [vmem:[%s208 + $0x7d] sm:$0x1] %vm246, %v402
      %421 = vst.msk [vmem:[%s208 + $0x95] sm:$0x1] %vm246, %v404
      %422 = vst.msk [vmem:[%s208 + $0xad] sm:$0x1] %vm246, %v406
      %v424 = vrot.slane %v229, 7
      %vm425 = vcmask 1040384
      %v426 = vsel %vm425, %v228, %v424
      %vm427 = vcmask 1041409
      %v428 = vsel %vm427, %v228, %v424
      %v429 = vrot.slane %v428, 1
      %vm430 = vcmask 1042434
      %v431 = vsel %vm430, %v228, %v424
      %v432 = vrot.slane %v431, 2
      %vm433 = vcmask 1043459
      %v434 = vsel %vm433, %v228, %v424
      %v435 = vrot.slane %v434, 3
      %vm436 = vcmask 1044484
      %v437 = vsel %vm436, %v228, %v424
      %v438 = vrot.slane %v437, 4
      %vm439 = vcmask 1045509
      %v440 = vsel %vm439, %v228, %v424
      %v441 = vrot.slane %v440, 5
      %vm442 = vcmask 1046534
      %v443 = vsel %vm442, %v228, %v424
      %v444 = vrot.slane %v443, 6
      %vm445 = vcmask 1046528
      %v446 = vsel %vm445, %v424, %v228
      %v447 = vrot.slane %v446, 7
      %v448 = vperm.slane %v426, 0
      %v449 = vperm.slane %v426, 1
      %v450 = vperm.slane %v429, 0
      %v451 = vperm.slane %v429, 1
      %v452 = vperm.slane %v432, 0
      %v453 = vperm.slane %v432, 1
      %v454 = vperm.slane %v435, 0
      %v455 = vperm.slane %v435, 1
      %v456 = vperm.slane %v438, 0
      %v457 = vperm.slane %v438, 1
      %v458 = vperm.slane %v441, 0
      %v459 = vperm.slane %v441, 1
      %v460 = vperm.slane %v444, 0
      %v461 = vperm.slane %v444, 1
      %v462 = vperm.slane %v447, 0
      %v463 = vperm.slane %v447, 1
      %464 = vrot.lane.b32.xlu0 %v448, 8
      %v465 = vpop.permute.xlu0 %464
      %466 = vrot.lane.b32.xlu0 %v449, 8
      %v467 = vpop.permute.xlu0 %466
      %468 = vrot.lane.b32.xlu0 %v450, 8
      %v469 = vpop.permute.xlu0 %468
      %470 = vrot.lane.b32.xlu0 %v451, 8
      %v471 = vpop.permute.xlu0 %470
      %472 = vrot.lane.b32.xlu0 %v452, 8
      %v473 = vpop.permute.xlu0 %472
      %474 = vrot.lane.b32.xlu0 %v453, 8
      %v475 = vpop.permute.xlu0 %474
      %476 = vrot.lane.b32.xlu0 %v454, 8
      %v477 = vpop.permute.xlu0 %476
      %478 = vrot.lane.b32.xlu0 %v455, 8
      %v479 = vpop.permute.xlu0 %478
      %480 = vrot.lane.b32.xlu0 %v456, 8
      %v481 = vpop.permute.xlu0 %480
      %482 = vrot.lane.b32.xlu0 %v457, 8
      %v483 = vpop.permute.xlu0 %482
      %484 = vrot.lane.b32.xlu0 %v458, 8
      %v485 = vpop.permute.xlu0 %484
      %486 = vrot.lane.b32.xlu0 %v459, 8
      %v487 = vpop.permute.xlu0 %486
      %488 = vrot.lane.b32.xlu0 %v460, 8
      %v489 = vpop.permute.xlu0 %488
      %490 = vrot.lane.b32.xlu0 %v461, 8
      %v491 = vpop.permute.xlu0 %490
      %492 = vrot.lane.b32.xlu0 %v462, 8
      %v493 = vpop.permute.xlu0 %492
      %494 = vrot.lane.b32.xlu0 %v463, 8
      %v495 = vpop.permute.xlu0 %494
      %vm496 = vcmask 64512
      %v497 = vsel %vm496, %v465, %v467
      %v498 = vsel %vm496, %v469, %v471
      %v499 = vsel %vm496, %v473, %v475
      %v500 = vsel %vm496, %v477, %v479
      %v501 = vsel %vm496, %v481, %v483
      %v502 = vsel %vm496, %v485, %v487
      %v503 = vsel %vm496, %v489, %v491
      %v504 = vsel %vm496, %v493, %v495
      %513 = vst.msk [vmem:[%s208 + $0x6] sm:$0x1] %vm246, %v497
      %514 = vst.msk [vmem:[%s208 + $0x1e] sm:$0x1] %vm246, %v498
      %515 = vst.msk [vmem:[%s208 + $0x36] sm:$0x1] %vm246, %v499
      %516 = vst.msk [vmem:[%s208 + $0x4e] sm:$0x1] %vm246, %v500
      %517 = vst.msk [vmem:[%s208 + $0x66] sm:$0x1] %vm246, %v501
      %518 = vst.msk [vmem:[%s208 + $0x7e] sm:$0x1] %vm246, %v502
      %519 = vst.msk [vmem:[%s208 + $0x96] sm:$0x1] %vm246, %v503
      %520 = vst.msk [vmem:[%s208 + $0xae] sm:$0x1] %vm246, %v504
      %v521 = vrot.slane %v229, 1
      %v522 = vrot.slane %v229, 2
      %v523 = vrot.slane %v229, 3
      %v524 = vrot.slane %v229, 4
      %v525 = vrot.slane %v229, 5
      %v526 = vrot.slane %v229, 6
      %v527 = vperm.slane %v229, 0
      %v528 = vperm.slane %v521, 0
      %v529 = vperm.slane %v522, 0
      %v530 = vperm.slane %v523, 0
      %v531 = vperm.slane %v524, 0
      %v532 = vperm.slane %v525, 0
      %v533 = vperm.slane %v526, 0
      %v534 = vperm.slane %v424, 0
      %535 = vrot.lane.b32.xlu0 %v527, 116
      %v536 = vpop.permute.xlu0 %535
      %537 = vrot.lane.b32.xlu0 %v528, 116
      %v538 = vpop.permute.xlu0 %537
      %539 = vrot.lane.b32.xlu0 %v529, 116
      %v540 = vpop.permute.xlu0 %539
      %541 = vrot.lane.b32.xlu0 %v530, 116
      %v542 = vpop.permute.xlu0 %541
      %543 = vrot.lane.b32.xlu0 %v531, 116
      %v544 = vpop.permute.xlu0 %543
      %545 = vrot.lane.b32.xlu0 %v532, 116
      %v546 = vpop.permute.xlu0 %545
      %547 = vrot.lane.b32.xlu0 %v533, 116
      %v548 = vpop.permute.xlu0 %547
      %549 = vrot.lane.b32.xlu0 %v534, 116
      %v550 = vpop.permute.xlu0 %549
      %559 = vst.msk [vmem:[%s208 + $0x7] sm:$0x1] %vm246, %v536
      %560 = vst.msk [vmem:[%s208 + $0x1f] sm:$0x1] %vm246, %v538
      %561 = vst.msk [vmem:[%s208 + $0x37] sm:$0x1] %vm246, %v540
      %562 = vst.msk [vmem:[%s208 + $0x4f] sm:$0x1] %vm246, %v542
      %563 = vst.msk [vmem:[%s208 + $0x67] sm:$0x1] %vm246, %v544
      %564 = vst.msk [vmem:[%s208 + $0x7f] sm:$0x1] %vm246, %v546
      %565 = vst.msk [vmem:[%s208 + $0x97] sm:$0x1] %vm246, %v548
      %566 = vst.msk [vmem:[%s208 + $0xaf] sm:$0x1] %vm246, %v550
      %567 = vrot.lane.b32.xlu0 %v527, 96
      %v568 = vpop.permute.xlu0 %567
      %569 = vrot.lane.b32.xlu0 %v528, 96
      %v570 = vpop.permute.xlu0 %569
      %571 = vrot.lane.b32.xlu0 %v529, 96
      %v572 = vpop.permute.xlu0 %571
      %573 = vrot.lane.b32.xlu0 %v530, 96
      %v574 = vpop.permute.xlu0 %573
      %575 = vrot.lane.b32.xlu0 %v531, 96
      %v576 = vpop.permute.xlu0 %575
      %577 = vrot.lane.b32.xlu0 %v532, 96
      %v578 = vpop.permute.xlu0 %577
      %579 = vrot.lane.b32.xlu0 %v533, 96
      %v580 = vpop.permute.xlu0 %579
      %581 = vrot.lane.b32.xlu0 %v534, 96
      %v582 = vpop.permute.xlu0 %581
      %591 = vst.msk [vmem:[%s208 + $0x8] sm:$0x1] %vm246, %v568
      %592 = vst.msk [vmem:[%s208 + $0x20] sm:$0x1] %vm246, %v570
      %593 = vst.msk [vmem:[%s208 + $0x38] sm:$0x1] %vm246, %v572
      %594 = vst.msk [vmem:[%s208 + $0x50] sm:$0x1] %vm246, %v574
      %595 = vst.msk [vmem:[%s208 + $0x68] sm:$0x1] %vm246, %v576
      %596 = vst.msk [vmem:[%s208 + $0x80] sm:$0x1] %vm246, %v578
      %597 = vst.msk [vmem:[%s208 + $0x98] sm:$0x1] %vm246, %v580
      %598 = vst.msk [vmem:[%s208 + $0xb0] sm:$0x1] %vm246, %v582
      %599 = vrot.lane.b32.xlu0 %v527, 76
      %v600 = vpop.permute.xlu0 %599
      %601 = vrot.lane.b32.xlu0 %v528, 76
      %v602 = vpop.permute.xlu0 %601
      %603 = vrot.lane.b32.xlu0 %v529, 76
      %v604 = vpop.permute.xlu0 %603
      %605 = vrot.lane.b32.xlu0 %v530, 76
      %v606 = vpop.permute.xlu0 %605
      %607 = vrot.lane.b32.xlu0 %v531, 76
      %v608 = vpop.permute.xlu0 %607
      %609 = vrot.lane.b32.xlu0 %v532, 76
      %v610 = vpop.permute.xlu0 %609
      %611 = vrot.lane.b32.xlu0 %v533, 76
      %v612 = vpop.permute.xlu0 %611
      %613 = vrot.lane.b32.xlu0 %v534, 76
      %v614 = vpop.permute.xlu0 %613
      %623 = vst.msk [vmem:[%s208 + $0x9] sm:$0x1] %vm246, %v600
      %624 = vst.msk [vmem:[%s208 + $0x21] sm:$0x1] %vm246, %v602
      %625 = vst.msk [vmem:[%s208 + $0x39] sm:$0x1] %vm246, %v604
      %626 = vst.msk [vmem:[%s208 + $0x51] sm:$0x1] %vm246, %v606
      %627 = vst.msk [vmem:[%s208 + $0x69] sm:$0x1] %vm246, %v608
      %628 = vst.msk [vmem:[%s208 + $0x81] sm:$0x1] %vm246, %v610
      %629 = vst.msk [vmem:[%s208 + $0x99] sm:$0x1] %vm246, %v612
      %630 = vst.msk [vmem:[%s208 + $0xb1] sm:$0x1] %vm246, %v614
      %631 = vrot.lane.b32.xlu0 %v527, 56
      %v632 = vpop.permute.xlu0 %631
      %633 = vrot.lane.b32.xlu0 %v528, 56
      %v634 = vpop.permute.xlu0 %633
      %635 = vrot.lane.b32.xlu0 %v529, 56
      %v636 = vpop.permute.xlu0 %635
      %637 = vrot.lane.b32.xlu0 %v530, 56
      %v638 = vpop.permute.xlu0 %637
      %639 = vrot.lane.b32.xlu0 %v531, 56
      %v640 = vpop.permute.xlu0 %639
      %641 = vrot.lane.b32.xlu0 %v532, 56
      %v642 = vpop.permute.xlu0 %641
      %643 = vrot.lane.b32.xlu0 %v533, 56
      %v644 = vpop.permute.xlu0 %643
      %645 = vrot.lane.b32.xlu0 %v534, 56
      %v646 = vpop.permute.xlu0 %645
      %655 = vst.msk [vmem:[%s208 + $0xa] sm:$0x1] %vm246, %v632
      %656 = vst.msk [vmem:[%s208 + $0x22] sm:$0x1] %vm246, %v634
      %657 = vst.msk [vmem:[%s208 + $0x3a] sm:$0x1] %vm246, %v636
      %658 = vst.msk [vmem:[%s208 + $0x52] sm:$0x1] %vm246, %v638
      %659 = vst.msk [vmem:[%s208 + $0x6a] sm:$0x1] %vm246, %v640
      %660 = vst.msk [vmem:[%s208 + $0x82] sm:$0x1] %vm246, %v642
      %661 = vst.msk [vmem:[%s208 + $0x9a] sm:$0x1] %vm246, %v644
      %662 = vst.msk [vmem:[%s208 + $0xb2] sm:$0x1] %vm246, %v646
      %663 = vrot.lane.b32.xlu0 %v527, 36
      %v664 = vpop.permute.xlu0 %663
      %665 = vrot.lane.b32.xlu0 %v528, 36
      %v666 = vpop.permute.xlu0 %665
      %667 = vrot.lane.b32.xlu0 %v529, 36
      %v668 = vpop.permute.xlu0 %667
      %669 = vrot.lane.b32.xlu0 %v530, 36
      %v670 = vpop.permute.xlu0 %669
      %671 = vrot.lane.b32.xlu0 %v531, 36
      %v672 = vpop.permute.xlu0 %671
      %673 = vrot.lane.b32.xlu0 %v532, 36
      %v674 = vpop.permute.xlu0 %673
      %675 = vrot.lane.b32.xlu0 %v533, 36
      %v676 = vpop.permute.xlu0 %675
      %677 = vrot.lane.b32.xlu0 %v534, 36
      %v678 = vpop.permute.xlu0 %677
      %687 = vst.msk [vmem:[%s208 + $0xb] sm:$0x1] %vm246, %v664
      %688 = vst.msk [vmem:[%s208 + $0x23] sm:$0x1] %vm246, %v666
      %689 = vst.msk [vmem:[%s208 + $0x3b] sm:$0x1] %vm246, %v668
      %690 = vst.msk [vmem:[%s208 + $0x53] sm:$0x1] %vm246, %v670
      %691 = vst.msk [vmem:[%s208 + $0x6b] sm:$0x1] %vm246, %v672
      %692 = vst.msk [vmem:[%s208 + $0x83] sm:$0x1] %vm246, %v674
      %693 = vst.msk [vmem:[%s208 + $0x9b] sm:$0x1] %vm246, %v676
      %694 = vst.msk [vmem:[%s208 + $0xb3] sm:$0x1] %vm246, %v678
      %v696 = vrot.slane %v230, 7
      %v697 = vsel %vm425, %v229, %v696
      %v698 = vsel %vm427, %v229, %v696
      %v699 = vrot.slane %v698, 1
      %v700 = vsel %vm430, %v229, %v696
      %v701 = vrot.slane %v700, 2
      %v702 = vsel %vm433, %v229, %v696
      %v703 = vrot.slane %v702, 3
      %v704 = vsel %vm436, %v229, %v696
      %v705 = vrot.slane %v704, 4
      %v706 = vsel %vm439, %v229, %v696
      %v707 = vrot.slane %v706, 5
      %v708 = vsel %vm442, %v229, %v696
      %v709 = vrot.slane %v708, 6
      %v710 = vsel %vm445, %v696, %v229
      %v711 = vrot.slane %v710, 7
      %v712 = vperm.slane %v697, 0
      %v713 = vperm.slane %v697, 1
      %v714 = vperm.slane %v699, 0
      %v715 = vperm.slane %v699, 1
      %v716 = vperm.slane %v701, 0
      %v717 = vperm.slane %v701, 1
      %v718 = vperm.slane %v703, 0
      %v719 = vperm.slane %v703, 1
      %v720 = vperm.slane %v705, 0
      %v721 = vperm.slane %v705, 1
      %v722 = vperm.slane %v707, 0
      %v723 = vperm.slane %v707, 1
      %v724 = vperm.slane %v709, 0
      %v725 = vperm.slane %v709, 1
      %v726 = vperm.slane %v711, 0
      %v727 = vperm.slane %v711, 1
      %728 = vrot.lane.b32.xlu0 %v712, 16
      %v729 = vpop.permute.xlu0 %728
      %730 = vrot.lane.b32.xlu0 %v713, 16
      %v731 = vpop.permute.xlu0 %730
      %732 = vrot.lane.b32.xlu0 %v714, 16
      %v733 = vpop.permute.xlu0 %732
      %734 = vrot.lane.b32.xlu0 %v715, 16
      %v735 = vpop.permute.xlu0 %734
      %736 = vrot.lane.b32.xlu0 %v716, 16
      %v737 = vpop.permute.xlu0 %736
      %738 = vrot.lane.b32.xlu0 %v717, 16
      %v739 = vpop.permute.xlu0 %738
      %740 = vrot.lane.b32.xlu0 %v718, 16
      %v741 = vpop.permute.xlu0 %740
      %742 = vrot.lane.b32.xlu0 %v719, 16
      %v743 = vpop.permute.xlu0 %742
      %744 = vrot.lane.b32.xlu0 %v720, 16
      %v745 = vpop.permute.xlu0 %744
      %746 = vrot.lane.b32.xlu0 %v721, 16
      %v747 = vpop.permute.xlu0 %746
      %748 = vrot.lane.b32.xlu0 %v722, 16
      %v749 = vpop.permute.xlu0 %748
      %750 = vrot.lane.b32.xlu0 %v723, 16
      %v751 = vpop.permute.xlu0 %750
      %752 = vrot.lane.b32.xlu0 %v724, 16
      %v753 = vpop.permute.xlu0 %752
      %754 = vrot.lane.b32.xlu0 %v725, 16
      %v755 = vpop.permute.xlu0 %754
      %756 = vrot.lane.b32.xlu0 %v726, 16
      %v757 = vpop.permute.xlu0 %756
      %758 = vrot.lane.b32.xlu0 %v727, 16
      %v759 = vpop.permute.xlu0 %758
      %vm760 = vcmask 130048
      %v761 = vsel %vm760, %v729, %v731
      %v762 = vsel %vm760, %v733, %v735
      %v763 = vsel %vm760, %v737, %v739
      %v764 = vsel %vm760, %v741, %v743
      %v765 = vsel %vm760, %v745, %v747
      %v766 = vsel %vm760, %v749, %v751
      %v767 = vsel %vm760, %v753, %v755
      %v768 = vsel %vm760, %v757, %v759
      %777 = vst.msk [vmem:[%s208 + $0xc] sm:$0x1] %vm246, %v761
      %778 = vst.msk [vmem:[%s208 + $0x24] sm:$0x1] %vm246, %v762
      %779 = vst.msk [vmem:[%s208 + $0x3c] sm:$0x1] %vm246, %v763
      %780 = vst.msk [vmem:[%s208 + $0x54] sm:$0x1] %vm246, %v764
      %781 = vst.msk [vmem:[%s208 + $0x6c] sm:$0x1] %vm246, %v765
      %782 = vst.msk [vmem:[%s208 + $0x84] sm:$0x1] %vm246, %v766
      %783 = vst.msk [vmem:[%s208 + $0x9c] sm:$0x1] %vm246, %v767
      %784 = vst.msk [vmem:[%s208 + $0xb4] sm:$0x1] %vm246, %v768
      %v785 = vrot.slane %v230, 1
      %v786 = vrot.slane %v230, 2
      %v787 = vrot.slane %v230, 3
      %v788 = vrot.slane %v230, 4
      %v789 = vrot.slane %v230, 5
      %v790 = vrot.slane %v230, 6
      %v791 = vperm.slane %v230, 0
      %v792 = vperm.slane %v785, 0
      %v793 = vperm.slane %v786, 0
      %v794 = vperm.slane %v787, 0
      %v795 = vperm.slane %v788, 0
      %v796 = vperm.slane %v789, 0
      %v797 = vperm.slane %v790, 0
      %v798 = vperm.slane %v696, 0
      %799 = vrot.lane.b32.xlu0 %v791, 124
      %v800 = vpop.permute.xlu0 %799
      %801 = vrot.lane.b32.xlu0 %v792, 124
      %v802 = vpop.permute.xlu0 %801
      %803 = vrot.lane.b32.xlu0 %v793, 124
      %v804 = vpop.permute.xlu0 %803
      %805 = vrot.lane.b32.xlu0 %v794, 124
      %v806 = vpop.permute.xlu0 %805
      %807 = vrot.lane.b32.xlu0 %v795, 124
      %v808 = vpop.permute.xlu0 %807
      %809 = vrot.lane.b32.xlu0 %v796, 124
      %v810 = vpop.permute.xlu0 %809
      %811 = vrot.lane.b32.xlu0 %v797, 124
      %v812 = vpop.permute.xlu0 %811
      %813 = vrot.lane.b32.xlu0 %v798, 124
      %v814 = vpop.permute.xlu0 %813
      %823 = vst.msk [vmem:[%s208 + $0xd] sm:$0x1] %vm246, %v800
      %824 = vst.msk [vmem:[%s208 + $0x25] sm:$0x1] %vm246, %v802
      %825 = vst.msk [vmem:[%s208 + $0x3d] sm:$0x1] %vm246, %v804
      %826 = vst.msk [vmem:[%s208 + $0x55] sm:$0x1] %vm246, %v806
      %827 = vst.msk [vmem:[%s208 + $0x6d] sm:$0x1] %vm246, %v808
      %828 = vst.msk [vmem:[%s208 + $0x85] sm:$0x1] %vm246, %v810
      %829 = vst.msk [vmem:[%s208 + $0x9d] sm:$0x1] %vm246, %v812
      %830 = vst.msk [vmem:[%s208 + $0xb5] sm:$0x1] %vm246, %v814
      %831 = vrot.lane.b32.xlu0 %v791, 104
      %v832 = vpop.permute.xlu0 %831
      %833 = vrot.lane.b32.xlu0 %v792, 104
      %v834 = vpop.permute.xlu0 %833
      %835 = vrot.lane.b32.xlu0 %v793, 104
      %v836 = vpop.permute.xlu0 %835
      %837 = vrot.lane.b32.xlu0 %v794, 104
      %v838 = vpop.permute.xlu0 %837
      %839 = vrot.lane.b32.xlu0 %v795, 104
      %v840 = vpop.permute.xlu0 %839
      %841 = vrot.lane.b32.xlu0 %v796, 104
      %v842 = vpop.permute.xlu0 %841
      %843 = vrot.lane.b32.xlu0 %v797, 104
      %v844 = vpop.permute.xlu0 %843
      %845 = vrot.lane.b32.xlu0 %v798, 104
      %v846 = vpop.permute.xlu0 %845
      %855 = vst.msk [vmem:[%s208 + $0xe] sm:$0x1] %vm246, %v832
      %856 = vst.msk [vmem:[%s208 + $0x26] sm:$0x1] %vm246, %v834
      %857 = vst.msk [vmem:[%s208 + $0x3e] sm:$0x1] %vm246, %v836
      %858 = vst.msk [vmem:[%s208 + $0x56] sm:$0x1] %vm246, %v838
      %859 = vst.msk [vmem:[%s208 + $0x6e] sm:$0x1] %vm246, %v840
      %860 = vst.msk [vmem:[%s208 + $0x86] sm:$0x1] %vm246, %v842
      %861 = vst.msk [vmem:[%s208 + $0x9e] sm:$0x1] %vm246, %v844
      %862 = vst.msk [vmem:[%s208 + $0xb6] sm:$0x1] %vm246, %v846
      %863 = vrot.lane.b32.xlu0 %v791, 84
      %v864 = vpop.permute.xlu0 %863
      %865 = vrot.lane.b32.xlu0 %v792, 84
      %v866 = vpop.permute.xlu0 %865
      %867 = vrot.lane.b32.xlu0 %v793, 84
      %v868 = vpop.permute.xlu0 %867
      %869 = vrot.lane.b32.xlu0 %v794, 84
      %v870 = vpop.permute.xlu0 %869
      %871 = vrot.lane.b32.xlu0 %v795, 84
      %v872 = vpop.permute.xlu0 %871
      %873 = vrot.lane.b32.xlu0 %v796, 84
      %v874 = vpop.permute.xlu0 %873
      %875 = vrot.lane.b32.xlu0 %v797, 84
      %v876 = vpop.permute.xlu0 %875
      %877 = vrot.lane.b32.xlu0 %v798, 84
      %v878 = vpop.permute.xlu0 %877
      %887 = vst.msk [vmem:[%s208 + $0xf] sm:$0x1] %vm246, %v864
      %888 = vst.msk [vmem:[%s208 + $0x27] sm:$0x1] %vm246, %v866
      %889 = vst.msk [vmem:[%s208 + $0x3f] sm:$0x1] %vm246, %v868
      %890 = vst.msk [vmem:[%s208 + $0x57] sm:$0x1] %vm246, %v870
      %891 = vst.msk [vmem:[%s208 + $0x6f] sm:$0x1] %vm246, %v872
      %892 = vst.msk [vmem:[%s208 + $0x87] sm:$0x1] %vm246, %v874
      %893 = vst.msk [vmem:[%s208 + $0x9f] sm:$0x1] %vm246, %v876
      %894 = vst.msk [vmem:[%s208 + $0xb7] sm:$0x1] %vm246, %v878
      %895 = vrot.lane.b32.xlu0 %v791, 64
      %v896 = vpop.permute.xlu0 %895
      %897 = vrot.lane.b32.xlu0 %v792, 64
      %v898 = vpop.permute.xlu0 %897
      %899 = vrot.lane.b32.xlu0 %v793, 64
      %v900 = vpop.permute.xlu0 %899
      %901 = vrot.lane.b32.xlu0 %v794, 64
      %v902 = vpop.permute.xlu0 %901
      %903 = vrot.lane.b32.xlu0 %v795, 64
      %v904 = vpop.permute.xlu0 %903
      %905 = vrot.lane.b32.xlu0 %v796, 64
      %v906 = vpop.permute.xlu0 %905
      %907 = vrot.lane.b32.xlu0 %v797, 64
      %v908 = vpop.permute.xlu0 %907
      %909 = vrot.lane.b32.xlu0 %v798, 64
      %v910 = vpop.permute.xlu0 %909
      %919 = vst.msk [vmem:[%s208 + $0x10] sm:$0x1] %vm246, %v896
      %920 = vst.msk [vmem:[%s208 + $0x28] sm:$0x1] %vm246, %v898
      %921 = vst.msk [vmem:[%s208 + $0x40] sm:$0x1] %vm246, %v900
      %922 = vst.msk [vmem:[%s208 + $0x58] sm:$0x1] %vm246, %v902
      %923 = vst.msk [vmem:[%s208 + $0x70] sm:$0x1] %vm246, %v904
      %924 = vst.msk [vmem:[%s208 + $0x88] sm:$0x1] %vm246, %v906
      %925 = vst.msk [vmem:[%s208 + $0xa0] sm:$0x1] %vm246, %v908
      %926 = vst.msk [vmem:[%s208 + $0xb8] sm:$0x1] %vm246, %v910
      %s927 = smul.u32 3, %s19
      %p928 = scmp.lt.s32.totalorder %s18, 1
      %s929 = scalar_select %p928, %s18, 1
      %p930 = scmp.lt.s32.totalorder %s927, 2
      %s931 = scalar_select %p930, %s927, 2
      %s932 = smul.addr %s929, 24
      %s933 = sadd.s32 %s931, %s932
      %s934 = smul.addr %s933, 8
      %s935 = scalar_lea.vmem %s3, %s934
      // Predicated region
      $region33: #{cdk2d_forward.3} parent=31 // pred_check
        %p936 = pneg %p116
      $region34: #{cdk2d_forward.3} parent=31 // pred_check_branch
        %938 = sbr.rel (%p936) target = $region36
      $region35: #{cdk2d_forward.3} parent=31 // pred_region
        %s939 = smul.u32 3, %s19
      $region36: #{cdk2d_forward.3} parent=31 // pred_fallthru
        _
    $region32: #{cdk2d_forward.3} parent=5 // pred_fallthru
      _
    %p940 = scmp.le.s32.totalorder 2, %s9
    // Predicated region
    $region37: #{cdk2d_forward.3} parent=5 // pred_check
      %p941 = pneg %p940
    $region38: #{cdk2d_forward.3} parent=5 // pred_check_branch
      %943 = sbr.rel (%p941) target = $region40
    $region39: #{cdk2d_forward.3} parent=5 // pred_region
      %s944 = ssub.s32 %s9, 2
      // Predicated region
      $region41: #{cdk2d_forward.3} parent=39 // pred_check
        %p945 = pneg %p122
      $region42: #{cdk2d_forward.3} parent=39 // pred_check_branch
        %947 = sbr.rel (%p945) target = $region44
      $region43: #{cdk2d_forward.3} parent=39 // pred_region
        %s948 = smul.u32 3, %s21
        %p949 = scmp.lt.s32.totalorder %s20, 1
        %s950 = scalar_select %p949, %s20, 1
        %p951 = scmp.lt.s32.totalorder %s948, 2
        %s952 = scalar_select %p951, %s948, 2
        %s953 = smul.addr %s950, 24
        %s954 = sadd.s32 %s952, %s953
        %s955 = smul.addr %s954, 8
        %s956 = scalar_lea.vmem %s3, %s955
      $region44: #{cdk2d_forward.3} parent=39 // pred_fallthru
        _
    $region40: #{cdk2d_forward.3} parent=5 // pred_fallthru
      _
  $region6: #{cdk2d_forward.3} parent=0 // loop_footer
    %s13 = sadd.s32 1, %s9
  $region7: #{cdk2d_forward.3} parent=0 // loop_footer_branch
    %8 = sbr.rel target = $region3
  $region8: #{cdk2d_forward.3} parent=0 // loop_exit
    _

// kernel: cdk2d_forward.2
$region0: #{cdk2d_forward.2}
  #allocation0 [shape = 'u32[]', space=smem, size = 0x4, offset = 0x4, fixed_abs, tag = 'smem constant byte address 0x4 - core index']
  #allocation1 [shape = 'u32[72,128]{1,0:T(1,128)}', space=vmem, size = 0x9000, scoped, tag = 'internal scratch']
  #allocation2 [shape = 'bf16[4,768]{1,0:T(4,128)(2,1)}', space=vmem, size = 0x1800, scoped, tag = 'scratch operand']
  #allocation3 [shape = 's32[1]{0}', space=sflag, size = 0x4, scoped, tag = 'scratch operand']
  #allocation4 [shape = 's32[]', space=sflag, size = 0x4, offset = 0, fixed_abs, tag = 'sflag constant byte address 0x0 - dummy sync flag']
  %s0 = inlined_call_operand.vmem [shape: bf16[2,4,768], index: 0, kind: input, shape index: {}]
  %s1 = inlined_call_operand.vmem [shape: bf16[16,8,4], index: 1, kind: input, shape index: {}]
  %s2 = inlined_call_operand.vmem [shape: f32[8,1], index: 2, kind: input, shape index: {}]
  %s3 = inlined_call_operand.vmem [shape: f32[1,640], index: 3, kind: input, shape index: {}]
  %s4 = inlined_call_operand.vmem [shape: f32[2,8,640], index: 4, kind: output, shape index: {0}]
  %s5 = inlined_call_operand.vmem [shape: f32[2,8,1], index: 5, kind: output, shape index: {1}]
  %s6 = inlined_call_operand.vmem [shape: f32[2,8,1], index: 6, kind: output, shape index: {2}]
  %7 = xla_tuple %s4, %s5, %s6
  %s8 = sld [smem:[#allocation0]]
  $region87: #{cdk2d_forward.2} parent=0
    _
  %s10 = ssub.s32 1, %s8
  %s11 = scalar_select 0, %s10, %s8
  loop: start=0, step=1, limit=4
  $region2: #{cdk2d_forward.2} parent=0 // loop_pre_header
    _
  $region3: #{cdk2d_forward.2} parent=0 // loop_header
    %s13 = sphi 0, %s17
    %p14 = scmp.ge.s32.totalorder %s13, 4
    %s20 = sphi 0, %s32
    %s21 = sphi 0, %s28
    %s22 = sphi 0, %s20
    %s23 = sphi 0, %s21
    %s24 = sphi 0, %s22
    %s25 = sphi 0, %s23
    %s33 = sphi 0, %s33
    %s35 = sphi 0, %s33
    %s36 = sphi 0, %s35
    %s50 = sphi 0, %s36
    %s54 = sphi 0, %s54
    %s56 = sphi 0, %s54
    %s57 = sphi 0, %s56
    %s71 = sphi 0, %s57
    %s77 = sphi 0, %s79
    %s80 = sphi 0, %s77
    %s81 = sphi 0, %s80
    %s97 = sphi 0, %s81
    %s105 = sphi 0, %s107
    %s108 = sphi 0, %s105
    %s109 = sphi 0, %s108
    %s125 = sphi 0, %s109
    %s131 = sphi 0, %s133
    %s134 = sphi 0, %s131
    %s135 = sphi 0, %s134
    %s151 = sphi 0, %s135
    %s157 = sphi 0, %s159
    %s160 = sphi 0, %s157
    %s161 = sphi 0, %s160
    %s177 = sphi 0, %s161
  $region4: #{cdk2d_forward.2} parent=0 // loop_header_branch
    %16 = sbr.rel (%p14) target = $region8
  $region5: #{cdk2d_forward.2} parent=0 // loop_body
    %s18 = ssub.s32 %s13, 1
    %s19 = ssub.s32 %s13, 2
    %s26 = sadd.s32 1, %s21
    %p27 = scmp.ge.s32.totalorder %s26, 1
    %s28 = scalar_select %p27, 0, %s26
    %s29 = sadd.s32 1, %s20
    %s30 = scalar_select %p27, %s29, %s20
    %p31 = scmp.ge.s32.totalorder %s30, 2
    %s32 = scalar_select %p31, 0, %s30
    %s34 = sadd.s32 %s33, 1
    %p37 = scmp.eq.s32.totalorder %s13, 1
    %p38 = scmp.ne.s32.totalorder %s33, %s35
    %p39 = scmp.eq.s32.totalorder %s13, 0
    %p40 = por %p38, %p39
    %p41 = scmp.ne.s32.totalorder %s33, %s35
    %p42 = scmp.eq.s32.totalorder %s18, 1
    %p43 = por %p41, %p42
    %p44 = scmp.ne.s32.totalorder %s35, %s36
    %p45 = scmp.eq.s32.totalorder %s18, 0
    %p46 = por %p44, %p45
    %p47 = scmp.ne.s32.totalorder %s35, %s36
    %p48 = scmp.eq.s32.totalorder %s19, 1
    %p49 = por %p47, %p48
    %p51 = scmp.ne.s32.totalorder %s36, %s50
    %p52 = scmp.eq.s32.totalorder %s19, 0
    %p53 = por %p51, %p52
    %s55 = sadd.s32 %s54, 1
    %p58 = scmp.eq.s32.totalorder %s13, 1
    %p59 = scmp.ne.s32.totalorder %s54, %s56
    %p60 = scmp.eq.s32.totalorder %s13, 0
    %p61 = por %p59, %p60
    %p62 = scmp.ne.s32.totalorder %s54, %s56
    %p63 = scmp.eq.s32.totalorder %s18, 1
    %p64 = por %p62, %p63
    %p65 = scmp.ne.s32.totalorder %s56, %s57
    %p66 = scmp.eq.s32.totalorder %s18, 0
    %p67 = por %p65, %p66
    %p68 = scmp.ne.s32.totalorder %s56, %s57
    %p69 = scmp.eq.s32.totalorder %s19, 1
    %p70 = por %p68, %p69
    %p72 = scmp.ne.s32.totalorder %s57, %s71
    %p73 = scmp.eq.s32.totalorder %s19, 0
    %p74 = por %p72, %p73
    %s75 = ssub.s32 %s21, %s28
    %p76 = scmp.eq.s32.totalorder %s75, 0
    %s78 = sadd.s32 %s77, 1
    %s79 = scalar_select %p76, %s77, %s78
    %p82 = pneg %p76
    %p83 = scmp.eq.s32.totalorder %s13, 1
    %p84 = por %p82, %p83
    %p85 = scmp.ne.s32.totalorder %s77, %s80
    %p86 = scmp.eq.s32.totalorder %s13, 0
    %p87 = por %p85, %p86
    %p88 = scmp.ne.s32.totalorder %s77, %s80
    %p89 = scmp.eq.s32.totalorder %s18, 1
    %p90 = por %p88, %p89
    %p91 = scmp.ne.s32.totalorder %s80, %s81
    %p92 = scmp.eq.s32.totalorder %s18, 0
    %p93 = por %p91, %p92
    %p94 = scmp.ne.s32.totalorder %s80, %s81
    %p95 = scmp.eq.s32.totalorder %s19, 1
    %p96 = por %p94, %p95
    %p98 = scmp.ne.s32.totalorder %s81, %s97
    %p99 = scmp.eq.s32.totalorder %s19, 0
    %p100 = por %p98, %p99
    %s101 = ssub.s32 %s20, %s32
    %s102 = ssub.s32 %s21, %s28
    %s103 = sor.u32 %s101, %s102
    %p104 = scmp.eq.s32.totalorder %s103, 0
    %s106 = sadd.s32 %s105, 1
    %s107 = scalar_select %p104, %s105, %s106
    %p110 = pneg %p104
    %p111 = scmp.eq.s32.totalorder %s13, 1
    %p112 = por %p110, %p111
    %p113 = scmp.ne.s32.totalorder %s105, %s108
    %p114 = scmp.eq.s32.totalorder %s13, 0
    %p115 = por %p113, %p114
    %p116 = scmp.ne.s32.totalorder %s105, %s108
    %p117 = scmp.eq.s32.totalorder %s18, 1
    %p118 = por %p116, %p117
    %p119 = scmp.ne.s32.totalorder %s108, %s109
    %p120 = scmp.eq.s32.totalorder %s18, 0
    %p121 = por %p119, %p120
    %p122 = scmp.ne.s32.totalorder %s108, %s109
    %p123 = scmp.eq.s32.totalorder %s19, 1
    %p124 = por %p122, %p123
    %p126 = scmp.ne.s32.totalorder %s109, %s125
    %p127 = scmp.eq.s32.totalorder %s19, 0
    %p128 = por %p126, %p127
    %s129 = ssub.s32 %s20, %s32
    %p130 = scmp.eq.s32.totalorder %s129, 0
    %s132 = sadd.s32 %s131, 1
    %s133 = scalar_select %p130, %s131, %s132
    %p136 = pneg %p130
    %p137 = scmp.eq.s32.totalorder %s13, 1
    %p138 = por %p136, %p137
    %p139 = scmp.ne.s32.totalorder %s131, %s134
    %p140 = scmp.eq.s32.totalorder %s13, 0
    %p141 = por %p139, %p140
    %p142 = scmp.ne.s32.totalorder %s131, %s134
    %p143 = scmp.eq.s32.totalorder %s18, 1
    %p144 = por %p142, %p143
    %p145 = scmp.ne.s32.totalorder %s134, %s135
    %p146 = scmp.eq.s32.totalorder %s18, 0
    %p147 = por %p145, %p146
    %p148 = scmp.ne.s32.totalorder %s134, %s135
    %p149 = scmp.eq.s32.totalorder %s19, 1
    %p150 = por %p148, %p149
    %p152 = scmp.ne.s32.totalorder %s135, %s151
    %p153 = scmp.eq.s32.totalorder %s19, 0
    %p154 = por %p152, %p153
    %s155 = ssub.s32 %s20, %s32
    %p156 = scmp.eq.s32.totalorder %s155, 0
    %s158 = sadd.s32 %s157, 1
    %s159 = scalar_select %p156, %s157, %s158
    %p162 = pneg %p156
    %p163 = scmp.eq.s32.totalorder %s13, 1
    %p164 = por %p162, %p163
    %p165 = scmp.ne.s32.totalorder %s157, %s160
    %p166 = scmp.eq.s32.totalorder %s13, 0
    %p167 = por %p165, %p166
    %p168 = scmp.ne.s32.totalorder %s157, %s160
    %p169 = scmp.eq.s32.totalorder %s18, 1
    %p170 = por %p168, %p169
    %p171 = scmp.ne.s32.totalorder %s160, %s161
    %p172 = scmp.eq.s32.totalorder %s18, 0
    %p173 = por %p171, %p172
    %p174 = scmp.ne.s32.totalorder %s160, %s161
    %p175 = scmp.eq.s32.totalorder %s19, 1
    %p176 = por %p174, %p175
    %p178 = scmp.ne.s32.totalorder %s161, %s177
    %p179 = scmp.eq.s32.totalorder %s19, 0
    %p180 = por %p178, %p179
    %p181 = scmp.le.s32.totalorder 1, %s13
    %p182 = scmp.lt.s32.totalorder %s13, 3
    %p183 = pnand %p181, %p182
    %p184 = pneg %p183
    // Predicated region
    $region9: #{cdk2d_forward.2} parent=5 // pred_check
      _
    $region10: #{cdk2d_forward.2} parent=5 // pred_check_branch
      %186 = sbr.rel (%p183) target = $region12
    $region11: #{cdk2d_forward.2} parent=5 // pred_region
      %s187 = ssub.s32 %s13, 1
      // Predicated region
      $region13: #{cdk2d_forward.2} parent=11 // pred_check
        %p188 = pneg %p46
      $region14: #{cdk2d_forward.2} parent=11 // pred_check_branch
        %190 = sbr.rel (%p188) target = $region16
      $region15: #{cdk2d_forward.2} parent=11 // pred_region
        _
      $region16: #{cdk2d_forward.2} parent=11 // pred_fallthru
        _
      // Predicated region
      $region17: #{cdk2d_forward.2} parent=11 // pred_check
        %p191 = pneg %p67
      $region18: #{cdk2d_forward.2} parent=11 // pred_check_branch
        %193 = sbr.rel (%p191) target = $region20
      $region19: #{cdk2d_forward.2} parent=11 // pred_region
        _
      $region20: #{cdk2d_forward.2} parent=11 // pred_fallthru
        _
      // Predicated region
      $region21: #{cdk2d_forward.2} parent=11 // pred_check
        %p194 = pneg %p93
      $region22: #{cdk2d_forward.2} parent=11 // pred_check_branch
        %196 = sbr.rel (%p194) target = $region24
      $region23: #{cdk2d_forward.2} parent=11 // pred_region
        %s197 = smul.u32 5, %s23
        %p198 = scmp.lt.s32.totalorder %s197, 4
        %s199 = scalar_select %p198, %s197, 4
        %s200 = scalar_lea.vmem %s3, %s199
        %s201 = smul.u32 5, %s23
      $region24: #{cdk2d_forward.2} parent=11 // pred_fallthru
        _
    $region12: #{cdk2d_forward.2} parent=5 // pred_fallthru
      _
    %p202 = scmp.lt.s32.totalorder %s13, 2
    // Predicated region
    $region25: #{cdk2d_forward.2} parent=5 // pred_check
      %p203 = pneg %p202
    $region26: #{cdk2d_forward.2} parent=5 // pred_check_branch
      %205 = sbr.rel (%p203) target = $region28
    $region27: #{cdk2d_forward.2} parent=5 // pred_region
      _
    $region28: #{cdk2d_forward.2} parent=5 // pred_fallthru
      _
    %p206 = scmp.le.s32.totalorder 1, %s13
    %p207 = scmp.lt.s32.totalorder %s13, 3
    %p208 = pnand %p206, %p207
    %p209 = pneg %p208
    // Predicated region
    $region29: #{cdk2d_forward.2} parent=5 // pred_check
      _
    $region30: #{cdk2d_forward.2} parent=5 // pred_check_branch
      %211 = sbr.rel (%p208) target = $region32
    $region31: #{cdk2d_forward.2} parent=5 // pred_region
      %s212 = ssub.s32 %s13, 1
      %p213 = pneg %p46
      %p214 = pneg %p43
      %p215 = pneg %p67
      %p216 = pneg %p64
      %s217 = smul.u32 5, %s23
      %p218 = scmp.lt.s32.totalorder %s217, 4
      %s219 = scalar_select %p218, %s217, 4
      %s220 = scalar_lea.vmem %s3, %s219
      %p221 = pneg %p93
      %p222 = pneg %p90
      %p223 = pneg %p121
      %p224 = pneg %p118
      %s225 = smul.u32 5, %s23
      %p226 = scmp.lt.s32.totalorder %s22, 1
      %s227 = scalar_select %p226, %s22, 1
      %p228 = scmp.lt.s32.totalorder %s225, 4
      %s229 = scalar_select %p228, %s225, 4
      %s230 = smul.addr %s227, 5
      %s231 = sadd.s32 %s229, %s230
      %s232 = smul.addr %s231, 8
      %s233 = scalar_lea.vmem %s4, %s232
      %p234 = pneg %p147
      %p235 = pneg %p144
      %p236 = scmp.lt.s32.totalorder %s22, 1
      %s237 = scalar_select %p236, %s22, 1
      %s238 = smul.addr %s237, 8
      %s239 = scalar_lea.vmem %s5, %s238
      %p240 = pneg %p173
      %p241 = pneg %p170
      %p242 = scmp.lt.s32.totalorder %s22, 1
      %s243 = scalar_select %p242, %s22, 1
      %s244 = smul.addr %s243, 8
      %s245 = scalar_lea.vmem %s6, %s244
      %s246 = smul.u32 5, %s23
      %p247 = scmp.lt.s32.totalorder %s246, 4
      %s248 = scalar_select %p247, %s246, 4
      %s249 = scalar_lea.vmem %s3, %s248
      %s250 = smul.u32 5, %s23
      %s251 = smul.u32 5, %s23
      %p252 = scmp.lt.s32.totalorder %s22, 1
      %s253 = scalar_select %p252, %s22, 1
      %p254 = scmp.lt.s32.totalorder %s251, 4
      %s255 = scalar_select %p254, %s251, 4
      %s256 = smul.addr %s253, 5
      %s257 = sadd.s32 %s255, %s256
      %s258 = smul.addr %s257, 8
      %s259 = scalar_lea.vmem %s4, %s258
      %s260 = smul.u32 5, %s23
      %p261 = scmp.lt.s32.totalorder %s22, 1
      %s262 = scalar_select %p261, %s22, 1
      %s263 = smul.addr %s262, 8
      %s264 = scalar_lea.vmem %s5, %s263
      %p265 = scmp.lt.s32.totalorder %s22, 1
      %s266 = scalar_select %p265, %s22, 1
      %s267 = smul.addr %s266, 8
      %s268 = scalar_lea.vmem %s6, %s267
      %s270 = smul.u32 %s23, 640
      %s271 = sshra.s32 %s270, 7
      %s272 = sand.u32 %s270, 127
      %s273 = smul.u32 %s22, 6
      %s274 = sadd.s32 %s271, %s273
      %s275 = smul.addr %s274, 2
      %s276 = scalar_lea.vmem %s0, %s275
      // Predicated region
      $region33: #{cdk2d_forward.2} parent=31 // pred_check
        _
      $region34: #{cdk2d_forward.2} parent=31 // pred_check_branch
        %278 = sbr.rel (0) target = $region36
      $region35: #{cdk2d_forward.2} parent=31 // pred_region
        %s279 = scalar_lea.vmem %s276, 8
        %s280 = scalar_lea.vmem [#allocation2], 8
        loop: start=0, step=1, limit=1
        $region37: #{cdk2d_forward.2} parent=35 // loop_pre_header
          _
        $region38: #{cdk2d_forward.2} parent=35 // loop_header
          %s282 = sphi 0, %s286
          %p283 = scmp.ge.s32.totalorder %s282, 1
          %s287 = sphi %s276, %s276
          %s288 = sphi [#allocation2], [#allocation2]
        $region39: #{cdk2d_forward.2} parent=35 // loop_header_branch
          %285 = sbr.rel (%p283) target = $region43
        $region40: #{cdk2d_forward.2} parent=35 // loop_body
          %v289 = vld [vmem:[%s287] sm:$0xff]
          %290 = vst [vmem:[%s288] sm:$0xff] %v289
        $region41: #{cdk2d_forward.2} parent=35 // loop_footer
          %s286 = sadd.s32 1, %s282
        $region42: #{cdk2d_forward.2} parent=35 // loop_footer_branch
          %281 = sbr.rel target = $region38
        $region43: #{cdk2d_forward.2} parent=35 // loop_exit
          _
        %s292 = ssub.s32 16, 1
        loop: start=0, step=1, limit=1
        $region44: #{cdk2d_forward.2} parent=35 // loop_pre_header
          _
        $region45: #{cdk2d_forward.2} parent=35 // loop_header
          %s294 = sphi 0, %s298
          %p295 = scmp.ge.s32.totalorder %s294, 1
          %s299 = sphi %s279, %s279
          %s300 = sphi %s280, %s280
        $region46: #{cdk2d_forward.2} parent=35 // loop_header_branch
          %297 = sbr.rel (%p295) target = $region50
        $region47: #{cdk2d_forward.2} parent=35 // loop_body
          %v301 = vld [vmem:[%s299] sm:%s292]
          %302 = vst [vmem:[%s300] sm:%s292] %v301
        $region48: #{cdk2d_forward.2} parent=35 // loop_footer
          %s298 = sadd.s32 1, %s294
        $region49: #{cdk2d_forward.2} parent=35 // loop_footer_branch
          %293 = sbr.rel target = $region45
        $region50: #{cdk2d_forward.2} parent=35 // loop_exit
          _
      $region36: #{cdk2d_forward.2} parent=31 // pred_fallthru
        _
      // Predicated region
      $region51: #{cdk2d_forward.2} parent=31 // pred_check
        _
      $region52: #{cdk2d_forward.2} parent=31 // pred_check_branch
        %305 = sbr.rel (0) target = $region54
      $region53: #{cdk2d_forward.2} parent=31 // pred_region
        %306 = vsyncadd [#allocation3], 192
      $region54: #{cdk2d_forward.2} parent=31 // pred_fallthru
        _
      %s307 = smul.u32 2, 1
      %s308 = smul.u32 %s307, 6
      %s309 = sshll.u32 %s308, 4
      %310 = dma.done [#allocation3], %s309
      %v311 = vld [vmem:[#allocation2] sm:$0xff]
      %v312 = vld [vmem:[#allocation2 + $0x8] sm:$0x3]
      %v313 = vld [vmem:[%s1] sm:$0xf]
      %v314 = vld [vmem:[#allocation2] sm:$0xff]
      %v315 = vld [vmem:[#allocation2 + $0x8] sm:$0xf]
      %s316 = scalar_lea.vmem %s1, 4
      %v317 = vld [vmem:[%s316] sm:$0xf]
      %319 = vst [vmem:[#allocation1] ss:$4 sm:$0xff] %v314
      %s321 = scalar_lea.vmem [#allocation1], 32
      %322 = vst [vmem:[%s321] ss:$4 sm:$0xff] %v315
      %v323 = vld.sshfl [vmem:[#allocation1] sm:$0xff pattern:$0x73625140]
      %v325 = vld.sshfl [vmem:[#allocation1 + $0x8] sm:$0xff pattern:$0x73625140]
      %v327 = vld.sshfl [vmem:[#allocation1 + $0x10] sm:$0xff pattern:$0x73625140]
      %v329 = vld.sshfl [vmem:[#allocation1 + $0x18] sm:$0xff pattern:$0x73625140]
      %v331 = vld.sshfl [vmem:[#allocation1 + $0x20] sm:$0xff pattern:$0x73625140]
      %v333 = vld.sshfl [vmem:[#allocation1 + $0x28] sm:$0xff pattern:$0x73625140]
      %335 = vrot.lane.b32.xlu0 %v323, 127
      %v336 = vpop.permute.xlu0 %335
      %337 = vrot.lane.b32.xlu0 %v325, 127
      %v338 = vpop.permute.xlu0 %337
      %339 = vrot.lane.b32.xlu0 %v327, 127
      %v340 = vpop.permute.xlu0 %339
      %341 = vrot.lane.b32.xlu0 %v329, 127
      %v342 = vpop.permute.xlu0 %341
      %343 = vrot.lane.b32.xlu0 %v331, 127
      %v344 = vpop.permute.xlu0 %343
      %345 = vrot.lane.b32.xlu0 %v333, 127
      %v346 = vpop.permute.xlu0 %345
      %vm347 = vcmask 1039360
      %v348 = vsel %vm347, %v336, %v338
      %v349 = vsel %vm347, %v338, %v340
      %v350 = vsel %vm347, %v340, %v342
      %v351 = vsel %vm347, %v342, %v344
      %v352 = vsel %vm347, %v344, %v346
      %vm353 = vcmask 31744
      %v355 = vsel %vm353, %v317, 0
      %vm357 = vcmask 1041408
      %v359 = vsel %vm357, %v348, 0
      %v362 = vsel %vm357, %v349, 0
      %v365 = vsel %vm357, %v350, 0
      %v368 = vsel %vm357, %v351, 0
      %v371 = vsel %vm357, %v352, 0
      %373 = vmatpush.bf16.msra.mxu0 0
      %374 = vmatpush.bf16.msra.mxu0 0
      %375 = vmatpush.bf16.msra.mxu0 0
      %376 = vmatpush.bf16.msra.mxu0 0
      %377 = vmatpush.bf16.msra.mxu0 0
      %378 = vmatpush.bf16.msra.mxu0 0
      %379 = vmatpush.bf16.msra.mxu0 0
      %380 = vmatpush.bf16.msra.mxu0 %v359
      %381 = vmatmul.bf16.gmra.mxu0 %v355
      %v382 = vpop.f32.mrf.mxu0
      %v383 = vadd.f32 0.0, %v382
      %v384 = vpop.f32.mrf.mxu0
      %385 = vdwg.mxu0
      %386 = vmatpush.bf16.msra.mxu0 0
      %387 = vmatpush.bf16.msra.mxu0 0
      %388 = vmatpush.bf16.msra.mxu0 0
      %389 = vmatpush.bf16.msra.mxu0 0
      %390 = vmatpush.bf16.msra.mxu0 0
      %391 = vmatpush.bf16.msra.mxu0 0
      %392 = vmatpush.bf16.msra.mxu0 0
      %393 = vmatpush.bf16.msra.mxu0 %v362
      %394 = vmatmul.bf16.gmra.mxu0 %v355
      %v395 = vpop.f32.mrf.mxu0
      %v396 = vadd.f32 0.0, %v395
      %v397 = vpop.f32.mrf.mxu0
      %398 = vdwg.mxu0
      %399 = vmatpush.bf16.msra.mxu0 0
      %400 = vmatpush.bf16.msra.mxu0 0
      %401 = vmatpush.bf16.msra.mxu0 0
      %402 = vmatpush.bf16.msra.mxu0 0
      %403 = vmatpush.bf16.msra.mxu0 0
      %404 = vmatpush.bf16.msra.mxu0 0
      %405 = vmatpush.bf16.msra.mxu0 0
      %406 = vmatpush.bf16.msra.mxu0 %v365
      %407 = vmatmul.bf16.gmra.mxu0 %v355
      %v408 = vpop.f32.mrf.mxu0
      %v409 = vadd.f32 0.0, %v408
      %v410 = vpop.f32.mrf.mxu0
      %411 = vdwg.mxu0
      %412 = vmatpush.bf16.msra.mxu0 0
      %413 = vmatpush.bf16.msra.mxu0 0
      %414 = vmatpush.bf16.msra.mxu0 0
      %415 = vmatpush.bf16.msra.mxu0 0
      %416 = vmatpush.bf16.msra.mxu0 0
      %417 = vmatpush.bf16.msra.mxu0 0
      %418 = vmatpush.bf16.msra.mxu0 0
      %419 = vmatpush.bf16.msra.mxu0 %v368
      %420 = vmatmul.bf16.gmra.mxu0 %v355
      %v421 = vpop.f32.mrf.mxu0
      %v422 = vadd.f32 0.0, %v421
      %v423 = vpop.f32.mrf.mxu0
      %424 = vdwg.mxu0
      %425 = vmatpush.bf16.msra.mxu0 0
      %426 = vmatpush.bf16.msra.mxu0 0
      %427 = vmatpush.bf16.msra.mxu0 0
      %428 = vmatpush.bf16.msra.mxu0 0
      %429 = vmatpush.bf16.msra.mxu0 0
      %430 = vmatpush.bf16.msra.mxu0 0
      %431 = vmatpush.bf16.msra.mxu0 0
      %432 = vmatpush.bf16.msra.mxu0 %v371
      %433 = vmatmul.bf16.gmra.mxu0 %v355
      %v434 = vpop.f32.mrf.mxu0
      %v435 = vadd.f32 0.0, %v434
      %v436 = vpop.f32.mrf.mxu0
      %437 = vdwg.mxu0
      %439 = vst [vmem:[#allocation1] ss:$4 sm:$0xff] %v311
      %s441 = scalar_lea.vmem [#allocation1], 32
      %442 = vst [vmem:[%s441] ss:$4 sm:$0xff] %v312
      %v443 = vld.sshfl [vmem:[#allocation1] sm:$0xff pattern:$0x73625140]
      %v444 = vld.sshfl [vmem:[#allocation1 + $0x8] sm:$0xff pattern:$0x73625140]
      %v445 = vld.sshfl [vmem:[#allocation1 + $0x10] sm:$0xff pattern:$0x73625140]
      %v446 = vld.sshfl [vmem:[#allocation1 + $0x18] sm:$0xff pattern:$0x73625140]
      %v447 = vld.sshfl [vmem:[#allocation1 + $0x20] sm:$0xff pattern:$0x73625140]
      %v449 = vsel %vm353, %v313, 0
      %v451 = vsel %vm357, %v443, 0
      %v453 = vsel %vm357, %v444, 0
      %v455 = vsel %vm357, %v445, 0
      %v457 = vsel %vm357, %v446, 0
      %v459 = vsel %vm357, %v447, 0
      %461 = vmatpush.bf16.msra.mxu0 0
      %462 = vmatpush.bf16.msra.mxu0 0
      %463 = vmatpush.bf16.msra.mxu0 0
      %464 = vmatpush.bf16.msra.mxu0 0
      %465 = vmatpush.bf16.msra.mxu0 0
      %466 = vmatpush.bf16.msra.mxu0 0
      %467 = vmatpush.bf16.msra.mxu0 0
      %468 = vmatpush.bf16.msra.mxu0 %v451
      %469 = vmatmul.bf16.gmra.mxu0 %v449
      %v470 = vpop.f32.mrf.mxu0
      %v471 = vadd.f32 %v383, %v470
      %v472 = vpop.f32.mrf.mxu0
      %473 = vdwg.mxu0
      %474 = vmatpush.bf16.msra.mxu0 0
      %475 = vmatpush.bf16.msra.mxu0 0
      %476 = vmatpush.bf16.msra.mxu0 0
      %477 = vmatpush.bf16.msra.mxu0 0
      %478 = vmatpush.bf16.msra.mxu0 0
      %479 = vmatpush.bf16.msra.mxu0 0
      %480 = vmatpush.bf16.msra.mxu0 0
      %481 = vmatpush.bf16.msra.mxu0 %v453
      %482 = vmatmul.bf16.gmra.mxu0 %v449
      %v483 = vpop.f32.mrf.mxu0
      %v484 = vadd.f32 %v396, %v483
      %v485 = vpop.f32.mrf.mxu0
      %486 = vdwg.mxu0
      %487 = vmatpush.bf16.msra.mxu0 0
      %488 = vmatpush.bf16.msra.mxu0 0
      %489 = vmatpush.bf16.msra.mxu0 0
      %490 = vmatpush.bf16.msra.mxu0 0
      %491 = vmatpush.bf16.msra.mxu0 0
      %492 = vmatpush.bf16.msra.mxu0 0
      %493 = vmatpush.bf16.msra.mxu0 0
      %494 = vmatpush.bf16.msra.mxu0 %v455
      %495 = vmatmul.bf16.gmra.mxu0 %v449
      %v496 = vpop.f32.mrf.mxu0
      %v497 = vadd.f32 %v409, %v496
      %v498 = vpop.f32.mrf.mxu0
      %499 = vdwg.mxu0
      %500 = vmatpush.bf16.msra.mxu0 0
      %501 = vmatpush.bf16.msra.mxu0 0
      %502 = vmatpush.bf16.msra.mxu0 0
      %503 = vmatpush.bf16.msra.mxu0 0
      %504 = vmatpush.bf16.msra.mxu0 0
      %505 = vmatpush.bf16.msra.mxu0 0
      %506 = vmatpush.bf16.msra.mxu0 0
      %507 = vmatpush.bf16.msra.mxu0 %v457
      %508 = vmatmul.bf16.gmra.mxu0 %v449
      %v509 = vpop.f32.mrf.mxu0
      %v510 = vadd.f32 %v422, %v509
      %v511 = vpop.f32.mrf.mxu0
      %512 = vdwg.mxu0
      %513 = vmatpush.bf16.msra.mxu0 0
      %514 = vmatpush.bf16.msra.mxu0 0
      %515 = vmatpush.bf16.msra.mxu0 0
      %516 = vmatpush.bf16.msra.mxu0 0
      %517 = vmatpush.bf16.msra.mxu0 0
      %518 = vmatpush.bf16.msra.mxu0 0
      %519 = vmatpush.bf16.msra.mxu0 0
      %520 = vmatpush.bf16.msra.mxu0 %v459
      %521 = vmatmul.bf16.gmra.mxu0 %v449
      %v522 = vpop.f32.mrf.mxu0
      %v523 = vadd.f32 %v435, %v522
      %v524 = vpop.f32.mrf.mxu0
      %525 = vdwg.mxu0
      %v526 = vld [vmem:[#allocation2] sm:$0xff]
      %v527 = vld [vmem:[#allocation2 + $0x8] sm:$0xf]
      %s528 = scalar_lea.vmem %s1, 8
      %v529 = vld [vmem:[%s528] sm:$0xf]
      %531 = vst [vmem:[#allocation1] ss:$4 sm:$0xff] %v526
      %s533 = scalar_lea.vmem [#allocation1], 32
      %534 = vst [vmem:[%s533] ss:$4 sm:$0xff] %v527
      %v535 = vld.sshfl [vmem:[#allocation1] sm:$0xff pattern:$0x73625140]
      %v537 = vld.sshfl [vmem:[#allocation1 + $0x8] sm:$0xff pattern:$0x73625140]
      %v539 = vld.sshfl [vmem:[#allocation1 + $0x10] sm:$0xff pattern:$0x73625140]
      %v541 = vld.sshfl [vmem:[#allocation1 + $0x18] sm:$0xff pattern:$0x73625140]
      %v543 = vld.sshfl [vmem:[#allocation1 + $0x20] sm:$0xff pattern:$0x73625140]
      %v545 = vld.sshfl [vmem:[#allocation1 + $0x28] sm:$0xff pattern:$0x73625140]
      %547 = vrot.lane.b32.xlu0 %v535, 126
      %v548 = vpop.permute.xlu0 %547
      %549 = vrot.lane.b32.xlu0 %v537, 126
      %v550 = vpop.permute.xlu0 %549
      %551 = vrot.lane.b32.xlu0 %v539, 126
      %v552 = vpop.permute.xlu0 %551
      %553 = vrot.lane.b32.xlu0 %v541, 126
      %v554 = vpop.permute.xlu0 %553
      %555 = vrot.lane.b32.xlu0 %v543, 126
      %v556 = vpop.permute.xlu0 %555
      %557 = vrot.lane.b32.xlu0 %v545, 126
      %v558 = vpop.permute.xlu0 %557
      %vm559 = vcmask 1031168
      %v560 = vsel %vm559, %v548, %v550
      %v561 = vsel %vm559, %v550, %v552
      %v562 = vsel %vm559, %v552, %v554
      %v563 = vsel %vm559, %v554, %v556
      %v564 = vsel %vm559, %v556, %v558
      %v566 = vsel %vm353, %v529, 0
      %v569 = vsel %vm357, %v560, 0
      %v572 = vsel %vm357, %v561, 0
      %v575 = vsel %vm357, %v562, 0
      %v578 = vsel %vm357, %v563, 0
      %v581 = vsel %vm357, %v564, 0
      %583 = vmatpush.bf16.msra.mxu0 0
      %584 = vmatpush.bf16.msra.mxu0 0
      %585 = vmatpush.bf16.msra.mxu0 0
      %586 = vmatpush.bf16.msra.mxu0 0
      %587 = vmatpush.bf16.msra.mxu0 0
      %588 = vmatpush.bf16.msra.mxu0 0
      %589 = vmatpush.bf16.msra.mxu0 0
      %590 = vmatpush.bf16.msra.mxu0 %v569
      %591 = vmatmul.bf16.gmra.mxu0 %v566
      %v592 = vpop.f32.mrf.mxu0
      %v593 = vadd.f32 0.0, %v592
      %v594 = vpop.f32.mrf.mxu0
      %595 = vdwg.mxu0
      %596 = vmatpush.bf16.msra.mxu0 0
      %597 = vmatpush.bf16.msra.mxu0 0
      %598 = vmatpush.bf16.msra.mxu0 0
      %599 = vmatpush.bf16.msra.mxu0 0
      %600 = vmatpush.bf16.msra.mxu0 0
      %601 = vmatpush.bf16.msra.mxu0 0
      %602 = vmatpush.bf16.msra.mxu0 0
      %603 = vmatpush.bf16.msra.mxu0 %v572
      %604 = vmatmul.bf16.gmra.mxu0 %v566
      %v605 = vpop.f32.mrf.mxu0
      %v606 = vadd.f32 0.0, %v605
      %v607 = vpop.f32.mrf.mxu0
      %608 = vdwg.mxu0
      %609 = vmatpush.bf16.msra.mxu0 0
      %610 = vmatpush.bf16.msra.mxu0 0
      %611 = vmatpush.bf16.msra.mxu0 0
      %612 = vmatpush.bf16.msra.mxu0 0
      %613 = vmatpush.bf16.msra.mxu0 0
      %614 = vmatpush.bf16.msra.mxu0 0
      %615 = vmatpush.bf16.msra.mxu0 0
      %616 = vmatpush.bf16.msra.mxu0 %v575
      %617 = vmatmul.bf16.gmra.mxu0 %v566
      %v618 = vpop.f32.mrf.mxu0
      %v619 = vadd.f32 0.0, %v618
      %v620 = vpop.f32.mrf.mxu0
      %621 = vdwg.mxu0
      %622 = vmatpush.bf16.msra.mxu0 0
      %623 = vmatpush.bf16.msra.mxu0 0
      %624 = vmatpush.bf16.msra.mxu0 0
      %625 = vmatpush.bf16.msra.mxu0 0
      %626 = vmatpush.bf16.msra.mxu0 0
      %627 = vmatpush.bf16.msra.mxu0 0
      %628 = vmatpush.bf16.msra.mxu0 0
      %629 = vmatpush.bf16.msra.mxu0 %v578
      %630 = vmatmul.bf16.gmra.mxu0 %v566
      %v631 = vpop.f32.mrf.mxu0
      %v632 = vadd.f32 0.0, %v631
      %v633 = vpop.f32.mrf.mxu0
      %634 = vdwg.mxu0
      %635 = vmatpush.bf16.msra.mxu0 0
      %636 = vmatpush.bf16.msra.mxu0 0
      %637 = vmatpush.bf16.msra.mxu0 0
      %638 = vmatpush.bf16.msra.mxu0 0
      %639 = vmatpush.bf16.msra.mxu0 0
      %640 = vmatpush.bf16.msra.mxu0 0
      %641 = vmatpush.bf16.msra.mxu0 0
      %642 = vmatpush.bf16.msra.mxu0 %v581
      %643 = vmatmul.bf16.gmra.mxu0 %v566
      %v644 = vpop.f32.mrf.mxu0
      %v645 = vadd.f32 0.0, %v644
      %v646 = vpop.f32.mrf.mxu0
      %647 = vdwg.mxu0
      %v648 = vadd.f32 %v471, %v593
      %v649 = vadd.f32 %v484, %v606
      %v650 = vadd.f32 %v497, %v619
      %v651 = vadd.f32 %v510, %v632
      %v652 = vadd.f32 %v523, %v645
      %v653 = vld [vmem:[#allocation2] sm:$0xff]
      %v654 = vld [vmem:[#allocation2 + $0x8] sm:$0xf]
      %s655 = scalar_lea.vmem %s1, 12
      %v656 = vld [vmem:[%s655] sm:$0xf]
      %658 = vst [vmem:[#allocation1] ss:$4 sm:$0xff] %v653
      %s660 = scalar_lea.vmem [#allocation1], 32
      %661 = vst [vmem:[%s660] ss:$4 sm:$0xff] %v654
      %v662 = vld.sshfl [vmem:[#allocation1] sm:$0xff pattern:$0x73625140]
      %v664 = vld.sshfl [vmem:[#allocation1 + $0x8] sm:$0xff pattern:$0x73625140]
      %v666 = vld.sshfl [vmem:[#allocation1 + $0x10] sm:$0xff pattern:$0x73625140]
      %v668 = vld.sshfl [vmem:[#allocation1 + $0x18] sm:$0xff pattern:$0x73625140]
      %v670 = vld.sshfl [vmem:[#allocation1 + $0x20] sm:$0xff pattern:$0x73625140]
      %v672 = vld.sshfl [vmem:[#allocation1 + $0x28] sm:$0xff pattern:$0x73625140]
      %674 = vrot.lane.b32.xlu0 %v662, 125
      %v675 = vpop.permute.xlu0 %674
      %676 = vrot.lane.b32.xlu0 %v664, 125
      %v677 = vpop.permute.xlu0 %676
      %678 = vrot.lane.b32.xlu0 %v666, 125
      %v679 = vpop.permute.xlu0 %678
      %680 = vrot.lane.b32.xlu0 %v668, 125
      %v681 = vpop.permute.xlu0 %680
      %682 = vrot.lane.b32.xlu0 %v670, 125
      %v683 = vpop.permute.xlu0 %682
      %684 = vrot.lane.b32.xlu0 %v672, 125
      %v685 = vpop.permute.xlu0 %684
      %vm686 = vcmask 1022976
      %v687 = vsel %vm686, %v675, %v677
      %v688 = vsel %vm686, %v677, %v679
      %v689 = vsel %vm686, %v679, %v681
      %v690 = vsel %vm686, %v681, %v683
      %v691 = vsel %vm686, %v683, %v685
      %v693 = vsel %vm353, %v656, 0
      %v696 = vsel %vm357, %v687, 0
      %v699 = vsel %vm357, %v688, 0
      %v702 = vsel %vm357, %v689, 0
      %v705 = vsel %vm357, %v690, 0
      %v708 = vsel %vm357, %v691, 0
      %710 = vmatpush.bf16.msra.mxu0 0
      %711 = vmatpush.bf16.msra.mxu0 0
      %712 = vmatpush.bf16.msra.mxu0 0
      %713 = vmatpush.bf16.msra.mxu0 0
      %714 = vmatpush.bf16.msra.mxu0 0
      %715 = vmatpush.bf16.msra.mxu0 0
      %716 = vmatpush.bf16.msra.mxu0 0
      %717 = vmatpush.bf16.msra.mxu0 %v696
      %718 = vmatmul.bf16.gmra.mxu0 %v693
      %v719 = vpop.f32.mrf.mxu0
      %v720 = vadd.f32 0.0, %v719
      %v721 = vpop.f32.mrf.mxu0
      %722 = vdwg.mxu0
      %723 = vmatpush.bf16.msra.mxu0 0
      %724 = vmatpush.bf16.msra.mxu0 0
      %725 = vmatpush.bf16.msra.mxu0 0
      %726 = vmatpush.bf16.msra.mxu0 0
      %727 = vmatpush.bf16.msra.mxu0 0
      %728 = vmatpush.bf16.msra.mxu0 0
      %729 = vmatpush.bf16.msra.mxu0 0
      %730 = vmatpush.bf16.msra.mxu0 %v699
      %731 = vmatmul.bf16.gmra.mxu0 %v693
      %v732 = vpop.f32.mrf.mxu0
      %v733 = vadd.f32 0.0, %v732
      %v734 = vpop.f32.mrf.mxu0
      %735 = vdwg.mxu0
      %736 = vmatpush.bf16.msra.mxu0 0
      %737 = vmatpush.bf16.msra.mxu0 0
      %738 = vmatpush.bf16.msra.mxu0 0
      %739 = vmatpush.bf16.msra.mxu0 0
      %740 = vmatpush.bf16.msra.mxu0 0
      %741 = vmatpush.bf16.msra.mxu0 0
      %742 = vmatpush.bf16.msra.mxu0 0
      %743 = vmatpush.bf16.msra.mxu0 %v702
      %744 = vmatmul.bf16.gmra.mxu0 %v693
      %v745 = vpop.f32.mrf.mxu0
      %v746 = vadd.f32 0.0, %v745
      %v747 = vpop.f32.mrf.mxu0
      %748 = vdwg.mxu0
      %749 = vmatpush.bf16.msra.mxu0 0
      %750 = vmatpush.bf16.msra.mxu0 0
      %751 = vmatpush.bf16.msra.mxu0 0
      %752 = vmatpush.bf16.msra.mxu0 0
      %753 = vmatpush.bf16.msra.mxu0 0
      %754 = vmatpush.bf16.msra.mxu0 0
      %755 = vmatpush.bf16.msra.mxu0 0
      %756 = vmatpush.bf16.msra.mxu0 %v705
      %757 = vmatmul.bf16.gmra.mxu0 %v693
      %v758 = vpop.f32.mrf.mxu0
      %v759 = vadd.f32 0.0, %v758
      %v760 = vpop.f32.mrf.mxu0
      %761 = vdwg.mxu0
      %762 = vmatpush.bf16.msra.mxu0 0
      %763 = vmatpush.bf16.msra.mxu0 0
      %764 = vmatpush.bf16.msra.mxu0 0
      %765 = vmatpush.bf16.msra.mxu0 0
      %766 = vmatpush.bf16.msra.mxu0 0
      %767 = vmatpush.bf16.msra.mxu0 0
      %768 = vmatpush.bf16.msra.mxu0 0
      %769 = vmatpush.bf16.msra.mxu0 %v708
      %770 = vmatmul.bf16.gmra.mxu0 %v693
      %v771 = vpop.f32.mrf.mxu0
      %v772 = vadd.f32 0.0, %v771
      %v773 = vpop.f32.mrf.mxu0
      %774 = vdwg.mxu0
      %v775 = vadd.f32 %v648, %v720
      %v776 = vadd.f32 %v649, %v733
      %v777 = vadd.f32 %v650, %v746
      %v778 = vadd.f32 %v651, %v759
      %v779 = vadd.f32 %v652, %v772
      %v780 = vld [vmem:[#allocation2] sm:$0xff]
      %v781 = vld [vmem:[#allocation2 + $0x8] sm:$0xf]
      %s782 = scalar_lea.vmem %s1, 16
      %v783 = vld [vmem:[%s782] sm:$0xf]
      %785 = vst [vmem:[#allocation1] ss:$4 sm:$0xff] %v780
      %s787 = scalar_lea.vmem [#allocation1], 32
      %788 = vst [vmem:[%s787] ss:$4 sm:$0xff] %v781
      %v789 = vld.sshfl [vmem:[#allocation1] sm:$0xff pattern:$0x73625140]
      %v791 = vld.sshfl [vmem:[#allocation1 + $0x8] sm:$0xff pattern:$0x73625140]
      %v793 = vld.sshfl [vmem:[#allocation1 + $0x10] sm:$0xff pattern:$0x73625140]
      %v795 = vld.sshfl [vmem:[#allocation1 + $0x18] sm:$0xff pattern:$0x73625140]
      %v797 = vld.sshfl [vmem:[#allocation1 + $0x20] sm:$0xff pattern:$0x73625140]
      %v799 = vld.sshfl [vmem:[#allocation1 + $0x28] sm:$0xff pattern:$0x73625140]
      %801 = vrot.lane.b32.xlu0 %v789, 108
      %v802 = vpop.permute.xlu0 %801
      %803 = vrot.lane.b32.xlu0 %v791, 108
      %v804 = vpop.permute.xlu0 %803
      %805 = vrot.lane.b32.xlu0 %v793, 108
      %v806 = vpop.permute.xlu0 %805
      %807 = vrot.lane.b32.xlu0 %v795, 108
      %v808 = vpop.permute.xlu0 %807
      %809 = vrot.lane.b32.xlu0 %v797, 108
      %v810 = vpop.permute.xlu0 %809
      %811 = vrot.lane.b32.xlu0 %v799, 108
      %v812 = vpop.permute.xlu0 %811
      %vm813 = vcmask 883712
      %v814 = vsel %vm813, %v802, %v804
      %v815 = vsel %vm813, %v804, %v806
      %v816 = vsel %vm813, %v806, %v808
      %v817 = vsel %vm813, %v808, %v810
      %v818 = vsel %vm813, %v810, %v812
      %v820 = vsel %vm353, %v783, 0
      %v823 = vsel %vm357, %v814, 0
      %v826 = vsel %vm357, %v815, 0
      %v829 = vsel %vm357, %v816, 0
      %v832 = vsel %vm357, %v817, 0
      %v835 = vsel %vm357, %v818, 0
      %837 = vmatpush.bf16.msra.mxu0 0
      %838 = vmatpush.bf16.msra.mxu0 0
      %839 = vmatpush.bf16.msra.mxu0 0
      %840 = vmatpush.bf16.msra.mxu0 0
      %841 = vmatpush.bf16.msra.mxu0 0
      %842 = vmatpush.bf16.msra.mxu0 0
      %843 = vmatpush.bf16.msra.mxu0 0
      %844 = vmatpush.bf16.msra.mxu0 %v823
      %845 = vmatmul.bf16.gmra.mxu0 %v820
      %v846 = vpop.f32.mrf.mxu0
      %v847 = vadd.f32 0.0, %v846
      %v848 = vpop.f32.mrf.mxu0
      %849 = vdwg.mxu0
      %850 = vmatpush.bf16.msra.mxu0 0
      %851 = vmatpush.bf16.msra.mxu0 0
      %852 = vmatpush.bf16.msra.mxu0 0
      %853 = vmatpush.bf16.msra.mxu0 0
      %854 = vmatpush.bf16.msra.mxu0 0
      %855 = vmatpush.bf16.msra.mxu0 0
      %856 = vmatpush.bf16.msra.mxu0 0
      %857 = vmatpush.bf16.msra.mxu0 %v826
      %858 = vmatmul.bf16.gmra.mxu0 %v820
      %v859 = vpop.f32.mrf.mxu0
      %v860 = vadd.f32 0.0, %v859
      %v861 = vpop.f32.mrf.mxu0
      %862 = vdwg.mxu0
      %863 = vmatpush.bf16.msra.mxu0 0
      %864 = vmatpush.bf16.msra.mxu0 0
      %865 = vmatpush.bf16.msra.mxu0 0
      %866 = vmatpush.bf16.msra.mxu0 0
      %867 = vmatpush.bf16.msra.mxu0 0
      %868 = vmatpush.bf16.msra.mxu0 0
      %869 = vmatpush.bf16.msra.mxu0 0
      %870 = vmatpush.bf16.msra.mxu0 %v829
      %871 = vmatmul.bf16.gmra.mxu0 %v820
      %v872 = vpop.f32.mrf.mxu0
      %v873 = vadd.f32 0.0, %v872
      %v874 = vpop.f32.mrf.mxu0
      %875 = vdwg.mxu0
      %876 = vmatpush.bf16.msra.mxu0 0
      %877 = vmatpush.bf16.msra.mxu0 0
      %878 = vmatpush.bf16.msra.mxu0 0
      %879 = vmatpush.bf16.msra.mxu0 0
      %880 = vmatpush.bf16.msra.mxu0 0
      %881 = vmatpush.bf16.msra.mxu0 0
      %882 = vmatpush.bf16.msra.mxu0 0
      %883 = vmatpush.bf16.msra.mxu0 %v832
      %884 = vmatmul.bf16.gmra.mxu0 %v820
      %v885 = vpop.f32.mrf.mxu0
      %v886 = vadd.f32 0.0, %v885
      %v887 = vpop.f32.mrf.mxu0
      %888 = vdwg.mxu0
      %889 = vmatpush.bf16.msra.mxu0 0
      %890 = vmatpush.bf16.msra.mxu0 0
      %891 = vmatpush.bf16.msra.mxu0 0
      %892 = vmatpush.bf16.msra.mxu0 0
      %893 = vmatpush.bf16.msra.mxu0 0
      %894 = vmatpush.bf16.msra.mxu0 0
      %895 = vmatpush.bf16.msra.mxu0 0
      %896 = vmatpush.bf16.msra.mxu0 %v835
      %897 = vmatmul.bf16.gmra.mxu0 %v820
      %v898 = vpop.f32.mrf.mxu0
      %v899 = vadd.f32 0.0, %v898
      %v900 = vpop.f32.mrf.mxu0
      %901 = vdwg.mxu0
      %v902 = vadd.f32 %v775, %v847
      %v903 = vadd.f32 %v776, %v860
      %v904 = vadd.f32 %v777, %v873
      %v905 = vadd.f32 %v778, %v886
      %v906 = vadd.f32 %v779, %v899
      %v907 = vld [vmem:[#allocation2] sm:$0xff]
      %v908 = vld [vmem:[#allocation2 + $0x8] sm:$0xf]
      %s909 = scalar_lea.vmem %s1, 20
      %v910 = vld [vmem:[%s909] sm:$0xf]
      %912 = vst [vmem:[#allocation1] ss:$4 sm:$0xff] %v907
      %s914 = scalar_lea.vmem [#allocation1], 32
      %915 = vst [vmem:[%s914] ss:$4 sm:$0xff] %v908
      %v916 = vld.sshfl [vmem:[#allocation1] sm:$0xff pattern:$0x73625140]
      %v918 = vld.sshfl [vmem:[#allocation1 + $0x8] sm:$0xff pattern:$0x73625140]
      %v920 = vld.sshfl [vmem:[#allocation1 + $0x10] sm:$0xff pattern:$0x73625140]
      %v922 = vld.sshfl [vmem:[#allocation1 + $0x18] sm:$0xff pattern:$0x73625140]
      %v924 = vld.sshfl [vmem:[#allocation1 + $0x20] sm:$0xff pattern:$0x73625140]
      %v926 = vld.sshfl [vmem:[#allocation1 + $0x28] sm:$0xff pattern:$0x73625140]
      %928 = vrot.lane.b32.xlu0 %v916, 107
      %v929 = vpop.permute.xlu0 %928
      %930 = vrot.lane.b32.xlu0 %v918, 107
      %v931 = vpop.permute.xlu0 %930
      %932 = vrot.lane.b32.xlu0 %v920, 107
      %v933 = vpop.permute.xlu0 %932
      %934 = vrot.lane.b32.xlu0 %v922, 107
      %v935 = vpop.permute.xlu0 %934
      %936 = vrot.lane.b32.xlu0 %v924, 107
      %v937 = vpop.permute.xlu0 %936
      %938 = vrot.lane.b32.xlu0 %v926, 107
      %v939 = vpop.permute.xlu0 %938
      %vm940 = vcmask 875520
      %v941 = vsel %vm940, %v929, %v931
      %v942 = vsel %vm940, %v931, %v933
      %v943 = vsel %vm940, %v933, %v935
      %v944 = vsel %vm940, %v935, %v937
      %v945 = vsel %vm940, %v937, %v939
      %v947 = vsel %vm353, %v910, 0
      %v950 = vsel %vm357, %v941, 0
      %v953 = vsel %vm357, %v942, 0
      %v956 = vsel %vm357, %v943, 0
      %v959 = vsel %vm357, %v944, 0
      %v962 = vsel %vm357, %v945, 0
      %964 = vmatpush.bf16.msra.mxu0 0
      %965 = vmatpush.bf16.msra.mxu0 0
      %966 = vmatpush.bf16.msra.mxu0 0
      %967 = vmatpush.bf16.msra.mxu0 0
      %968 = vmatpush.bf16.msra.mxu0 0
      %969 = vmatpush.bf16.msra.mxu0 0
      %970 = vmatpush.bf16.msra.mxu0 0
      %971 = vmatpush.bf16.msra.mxu0 %v950
      %972 = vmatmul.bf16.gmra.mxu0 %v947
      %v973 = vpop.f32.mrf.mxu0
      %v974 = vadd.f32 0.0, %v973
      %v975 = vpop.f32.mrf.mxu0
      %976 = vdwg.mxu0
      %977 = vmatpush.bf16.msra.mxu0 0
      %978 = vmatpush.bf16.msra.mxu0 0
      %979 = vmatpush.bf16.msra.mxu0 0
      %980 = vmatpush.bf16.msra.mxu0 0
      %981 = vmatpush.bf16.msra.mxu0 0
      %982 = vmatpush.bf16.msra.mxu0 0
      %983 = vmatpush.bf16.msra.mxu0 0
      %984 = vmatpush.bf16.msra.mxu0 %v953
      %985 = vmatmul.bf16.gmra.mxu0 %v947
      %v986 = vpop.f32.mrf.mxu0
      %v987 = vadd.f32 0.0, %v986
      %v988 = vpop.f32.mrf.mxu0
      %989 = vdwg.mxu0
      %990 = vmatpush.bf16.msra.mxu0 0
      %991 = vmatpush.bf16.msra.mxu0 0
      %992 = vmatpush.bf16.msra.mxu0 0
      %993 = vmatpush.bf16.msra.mxu0 0
      %994 = vmatpush.bf16.msra.mxu0 0
      %995 = vmatpush.bf16.msra.mxu0 0
      %996 = vmatpush.bf16.msra.mxu0 0
      %997 = vmatpush.bf16.msra.mxu0 %v956
      %998 = vmatmul.bf16.gmra.mxu0 %v947
      %v999 = vpop.f32.mrf.mxu0
      %v1000 = vadd.f32 0.0, %v999
      %v1001 = vpop.f32.mrf.mxu0
      %1002 = vdwg.mxu0
      %1003 = vmatpush.bf16.msra.mxu0 0
      %1004 = vmatpush.bf16.msra.mxu0 0
      %1005 = vmatpush.bf16.msra.mxu0 0
      %1006 = vmatpush.bf16.msra.mxu0 0
      %1007 = vmatpush.bf16.msra.mxu0 0
      %1008 = vmatpush.bf16.msra.mxu0 0
      %1009 = vmatpush.bf16.msra.mxu0 0
      %1010 = vmatpush.bf16.msra.mxu0 %v959
      %1011 = vmatmul.bf16.gmra.mxu0 %v947
      %v1012 = vpop.f32.mrf.mxu0
      %v1013 = vadd.f32 0.0, %v1012
      %v1014 = vpop.f32.mrf.mxu0
      %1015 = vdwg.mxu0
      %1016 = vmatpush.bf16.msra.mxu0 0
      %1017 = vmatpush.bf16.msra.mxu0 0
      %1018 = vmatpush.bf16.msra.mxu0 0
      %1019 = vmatpush.bf16.msra.mxu0 0
      %1020 = vmatpush.bf16.msra.mxu0 0
      %1021 = vmatpush.bf16.msra.mxu0 0
      %1022 = vmatpush.bf16.msra.mxu0 0
      %1023 = vmatpush.bf16.msra.mxu0 %v962
      %1024 = vmatmul.bf16.gmra.mxu0 %v947
      %v1025 = vpop.f32.mrf.mxu0
      %v1026 = vadd.f32 0.0, %v1025
      %v1027 = vpop.f32.mrf.mxu0
      %1028 = vdwg.mxu0
      %v1029 = vadd.f32 %v902, %v974
      %v1030 = vadd.f32 %v903, %v987
      %v1031 = vadd.f32 %v904, %v1000
      %v1032 = vadd.f32 %v905, %v1013
      %v1033 = vadd.f32 %v906, %v1026
      %v1034 = vld [vmem:[#allocation2] sm:$0xff]
      %v1035 = vld [vmem:[#allocation2 + $0x8] sm:$0xf]
      %s1036 = scalar_lea.vmem %s1, 24
      %v1037 = vld [vmem:[%s1036] sm:$0xf]
      %1039 = vst [vmem:[#allocation1] ss:$4 sm:$0xff] %v1034
      %s1041 = scalar_lea.vmem [#allocation1], 32
      %1042 = vst [vmem:[%s1041] ss:$4 sm:$0xff] %v1035
      %v1043 = vld.sshfl [vmem:[#allocation1] sm:$0xff pattern:$0x73625140]
      %v1045 = vld.sshfl [vmem:[#allocation1 + $0x8] sm:$0xff pattern:$0x73625140]
      %v1047 = vld.sshfl [vmem:[#allocation1 + $0x10] sm:$0xff pattern:$0x73625140]
      %v1049 = vld.sshfl [vmem:[#allocation1 + $0x18] sm:$0xff pattern:$0x73625140]
      %v1051 = vld.sshfl [vmem:[#allocation1 + $0x20] sm:$0xff pattern:$0x73625140]
      %v1053 = vld.sshfl [vmem:[#allocation1 + $0x28] sm:$0xff pattern:$0x73625140]
      %1055 = vrot.lane.b32.xlu0 %v1043, 106
      %v1056 = vpop.permute.xlu0 %1055
      %1057 = vrot.lane.b32.xlu0 %v1045, 106
      %v1058 = vpop.permute.xlu0 %1057
      %1059 = vrot.lane.b32.xlu0 %v1047, 106
      %v1060 = vpop.permute.xlu0 %1059
      %1061 = vrot.lane.b32.xlu0 %v1049, 106
      %v1062 = vpop.permute.xlu0 %1061
      %1063 = vrot.lane.b32.xlu0 %v1051, 106
      %v1064 = vpop.permute.xlu0 %1063
      %1065 = vrot.lane.b32.xlu0 %v1053, 106
      %v1066 = vpop.permute.xlu0 %1065
      %vm1067 = vcmask 867328
      %v1068 = vsel %vm1067, %v1056, %v1058
      %v1069 = vsel %vm1067, %v1058, %v1060
      %v1070 = vsel %vm1067, %v1060, %v1062
      %v1071 = vsel %vm1067, %v1062, %v1064
      %v1072 = vsel %vm1067, %v1064, %v1066
      %v1074 = vsel %vm353, %v1037, 0
      %v1077 = vsel %vm357, %v1068, 0
      %v1080 = vsel %vm357, %v1069, 0
      %v1083 = vsel %vm357, %v1070, 0
      %v1086 = vsel %vm357, %v1071, 0
      %v1089 = vsel %vm357, %v1072, 0
      %1091 = vmatpush.bf16.msra.mxu0 0
      %1092 = vmatpush.bf16.msra.mxu0 0
      %1093 = vmatpush.bf16.msra.mxu0 0
      %1094 = vmatpush.bf16.msra.mxu0 0
      %1095 = vmatpush.bf16.msra.mxu0 0
      %1096 = vmatpush.bf16.msra.mxu0 0
      %1097 = vmatpush.bf16.msra.mxu0 0
      %1098 = vmatpush.bf16.msra.mxu0 %v1077
      %1099 = vmatmul.bf16.gmra.mxu0 %v1074
      %v1100 = vpop.f32.mrf.mxu0
      %v1101 = vadd.f32 0.0, %v1100
      %v1102 = vpop.f32.mrf.mxu0
      %1103 = vdwg.mxu0
      %1104 = vmatpush.bf16.msra.mxu0 0
      %1105 = vmatpush.bf16.msra.mxu0 0
      %1106 = vmatpush.bf16.msra.mxu0 0
      %1107 = vmatpush.bf16.msra.mxu0 0
      %1108 = vmatpush.bf16.msra.mxu0 0
      %1109 = vmatpush.bf16.msra.mxu0 0
      %1110 = vmatpush.bf16.msra.mxu0 0
      %1111 = vmatpush.bf16.msra.mxu0 %v1080
      %1112 = vmatmul.bf16.gmra.mxu0 %v1074
      %v1113 = vpop.f32.mrf.mxu0
      %v1114 = vadd.f32 0.0, %v1113
      %v1115 = vpop.f32.mrf.mxu0
      %1116 = vdwg.mxu0
      %1117 = vmatpush.bf16.msra.mxu0 0
      %1118 = vmatpush.bf16.msra.mxu0 0
      %1119 = vmatpush.bf16.msra.mxu0 0
      %1120 = vmatpush.bf16.msra.mxu0 0
      %1121 = vmatpush.bf16.msra.mxu0 0
      %1122 = vmatpush.bf16.msra.mxu0 0
      %1123 = vmatpush.bf16.msra.mxu0 0
      %1124 = vmatpush.bf16.msra.mxu0 %v1083
      %1125 = vmatmul.bf16.gmra.mxu0 %v1074
      %v1126 = vpop.f32.mrf.mxu0
      %v1127 = vadd.f32 0.0, %v1126
      %v1128 = vpop.f32.mrf.mxu0
      %1129 = vdwg.mxu0
      %1130 = vmatpush.bf16.msra.mxu0 0
      %1131 = vmatpush.bf16.msra.mxu0 0
      %1132 = vmatpush.bf16.msra.mxu0 0
      %1133 = vmatpush.bf16.msra.mxu0 0
      %1134 = vmatpush.bf16.msra.mxu0 0
      %1135 = vmatpush.bf16.msra.mxu0 0
      %1136 = vmatpush.bf16.msra.mxu0 0
      %1137 = vmatpush.bf16.msra.mxu0 %v1086
      %1138 = vmatmul.bf16.gmra.mxu0 %v1074
      %v1139 = vpop.f32.mrf.mxu0
      %v1140 = vadd.f32 0.0, %v1139
      %v1141 = vpop.f32.mrf.mxu0
      %1142 = vdwg.mxu0
      %1143 = vmatpush.bf16.msra.mxu0 0
      %1144 = vmatpush.bf16.msra.mxu0 0
      %1145 = vmatpush.bf16.msra.mxu0 0
      %1146 = vmatpush.bf16.msra.mxu0 0
      %1147 = vmatpush.bf16.msra.mxu0 0
      %1148 = vmatpush.bf16.msra.mxu0 0
      %1149 = vmatpush.bf16.msra.mxu0 0
      %1150 = vmatpush.bf16.msra.mxu0 %v1089
      %1151 = vmatmul.bf16.gmra.mxu0 %v1074
      %v1152 = vpop.f32.mrf.mxu0
      %v1153 = vadd.f32 0.0, %v1152
      %v1154 = vpop.f32.mrf.mxu0
      %1155 = vdwg.mxu0
      %v1156 = vadd.f32 %v1029, %v1101
      %v1157 = vadd.f32 %v1030, %v1114
      %v1158 = vadd.f32 %v1031, %v1127
      %v1159 = vadd.f32 %v1032, %v1140
      %v1160 = vadd.f32 %v1033, %v1153
      %v1161 = vld [vmem:[#allocation2] sm:$0xff]
      %v1162 = vld [vmem:[#allocation2 + $0x8] sm:$0xf]
      %s1163 = scalar_lea.vmem %s1, 28
      %v1164 = vld [vmem:[%s1163] sm:$0xf]
      %1166 = vst [vmem:[#allocation1] ss:$4 sm:$0xff] %v1161
      %s1168 = scalar_lea.vmem [#allocation1], 32
      %1169 = vst [vmem:[%s1168] ss:$4 sm:$0xff] %v1162
      %v1170 = vld.sshfl [vmem:[#allocation1] sm:$0xff pattern:$0x73625140]
      %v1172 = vld.sshfl [vmem:[#allocation1 + $0x8] sm:$0xff pattern:$0x73625140]
      %v1174 = vld.sshfl [vmem:[#allocation1 + $0x10] sm:$0xff pattern:$0x73625140]
      %v1176 = vld.sshfl [vmem:[#allocation1 + $0x18] sm:$0xff pattern:$0x73625140]
      %v1178 = vld.sshfl [vmem:[#allocation1 + $0x20] sm:$0xff pattern:$0x73625140]
      %v1180 = vld.sshfl [vmem:[#allocation1 + $0x28] sm:$0xff pattern:$0x73625140]
      %1182 = vrot.lane.b32.xlu0 %v1170, 105
      %v1183 = vpop.permute.xlu0 %1182
      %1184 = vrot.lane.b32.xlu0 %v1172, 105
      %v1185 = vpop.permute.xlu0 %1184
      %1186 = vrot.lane.b32.xlu0 %v1174, 105
      %v1187 = vpop.permute.xlu0 %1186
      %1188 = vrot.lane.b32.xlu0 %v1176, 105
      %v1189 = vpop.permute.xlu0 %1188
      %1190 = vrot.lane.b32.xlu0 %v1178, 105
      %v1191 = vpop.permute.xlu0 %1190
      %1192 = vrot.lane.b32.xlu0 %v1180, 105
      %v1193 = vpop.permute.xlu0 %1192
      %vm1194 = vcmask 859136
      %v1195 = vsel %vm1194, %v1183, %v1185
      %v1196 = vsel %vm1194, %v1185, %v1187
      %v1197 = vsel %vm1194, %v1187, %v1189
      %v1198 = vsel %vm1194, %v1189, %v1191
      %v1199 = vsel %vm1194, %v1191, %v1193
      %v1201 = vsel %vm353, %v1164, 0
      %v1204 = vsel %vm357, %v1195, 0
      %v1207 = vsel %vm357, %v1196, 0
      %v1210 = vsel %vm357, %v1197, 0
      %v1213 = vsel %vm357, %v1198, 0
      %v1216 = vsel %vm357, %v1199, 0
      %1218 = vmatpush.bf16.msra.mxu0 0
      %1219 = vmatpush.bf16.msra.mxu0 0
      %1220 = vmatpush.bf16.msra.mxu0 0
      %1221 = vmatpush.bf16.msra.mxu0 0
      %1222 = vmatpush.bf16.msra.mxu0 0
      %1223 = vmatpush.bf16.msra.mxu0 0
      %1224 = vmatpush.bf16.msra.mxu0 0
      %1225 = vmatpush.bf16.msra.mxu0 %v1204
      %1226 = vmatmul.bf16.gmra.mxu0 %v1201
      %v1227 = vpop.f32.mrf.mxu0
      %v1228 = vadd.f32 0.0, %v1227
      %v1229 = vpop.f32.mrf.mxu0
      %1230 = vdwg.mxu0
      %1231 = vmatpush.bf16.msra.mxu0 0
      %1232 = vmatpush.bf16.msra.mxu0 0
      %1233 = vmatpush.bf16.msra.mxu0 0
      %1234 = vmatpush.bf16.msra.mxu0 0
      %1235 = vmatpush.bf16.msra.mxu0 0
      %1236 = vmatpush.bf16.msra.mxu0 0
      %1237 = vmatpush.bf16.msra.mxu0 0
      %1238 = vmatpush.bf16.msra.mxu0 %v1207
      %1239 = vmatmul.bf16.gmra.mxu0 %v1201
      %v1240 = vpop.f32.mrf.mxu0
      %v1241 = vadd.f32 0.0, %v1240
      %v1242 = vpop.f32.mrf.mxu0
      %1243 = vdwg.mxu0
      %1244 = vmatpush.bf16.msra.mxu0 0
      %1245 = vmatpush.bf16.msra.mxu0 0
      %1246 = vmatpush.bf16.msra.mxu0 0
      %1247 = vmatpush.bf16.msra.mxu0 0
      %1248 = vmatpush.bf16.msra.mxu0 0
      %1249 = vmatpush.bf16.msra.mxu0 0
      %1250 = vmatpush.bf16.msra.mxu0 0
      %1251 = vmatpush.bf16.msra.mxu0 %v1210
      %1252 = vmatmul.bf16.gmra.mxu0 %v1201
      %v1253 = vpop.f32.mrf.mxu0
      %v1254 = vadd.f32 0.0, %v1253
      %v1255 = vpop.f32.mrf.mxu0
      %1256 = vdwg.mxu0
      %1257 = vmatpush.bf16.msra.mxu0 0
      %1258 = vmatpush.bf16.msra.mxu0 0
      %1259 = vmatpush.bf16.msra.mxu0 0
      %1260 = vmatpush.bf16.msra.mxu0 0
      %1261 = vmatpush.bf16.msra.mxu0 0
      %1262 = vmatpush.bf16.msra.mxu0 0
      %1263 = vmatpush.bf16.msra.mxu0 0
      %1264 = vmatpush.bf16.msra.mxu0 %v1213
      %1265 = vmatmul.bf16.gmra.mxu0 %v1201
      %v1266 = vpop.f32.mrf.mxu0
      %v1267 = vadd.f32 0.0, %v1266
      %v1268 = vpop.f32.mrf.mxu0
      %1269 = vdwg.mxu0
      %1270 = vmatpush.bf16.msra.mxu0 0
      %1271 = vmatpush.bf16.msra.mxu0 0
      %1272 = vmatpush.bf16.msra.mxu0 0
      %1273 = vmatpush.bf16.msra.mxu0 0
      %1274 = vmatpush.bf16.msra.mxu0 0
      %1275 = vmatpush.bf16.msra.mxu0 0
      %1276 = vmatpush.bf16.msra.mxu0 0
      %1277 = vmatpush.bf16.msra.mxu0 %v1216
      %1278 = vmatmul.bf16.gmra.mxu0 %v1201
      %v1279 = vpop.f32.mrf.mxu0
      %v1280 = vadd.f32 0.0, %v1279
      %v1281 = vpop.f32.mrf.mxu0
      %1282 = vdwg.mxu0
      %v1283 = vadd.f32 %v1156, %v1228
      %v1284 = vadd.f32 %v1157, %v1241
      %v1285 = vadd.f32 %v1158, %v1254
      %v1286 = vadd.f32 %v1159, %v1267
      %v1287 = vadd.f32 %v1160, %v1280
      %v1288 = vld [vmem:[#allocation2] sm:$0xff]
      %v1289 = vld [vmem:[#allocation2 + $0x8] sm:$0xf]
      %s1290 = scalar_lea.vmem %s1, 32
      %v1291 = vld [vmem:[%s1290] sm:$0xf]
      %1293 = vst [vmem:[#allocation1] ss:$4 sm:$0xff] %v1288
      %s1295 = scalar_lea.vmem [#allocation1], 32
      %1296 = vst [vmem:[%s1295] ss:$4 sm:$0xff] %v1289
      %v1297 = vld.sshfl [vmem:[#allocation1] sm:$0xff pattern:$0x73625140]
      %v1299 = vld.sshfl [vmem:[#allocation1 + $0x8] sm:$0xff pattern:$0x73625140]
      %v1301 = vld.sshfl [vmem:[#allocation1 + $0x10] sm:$0xff pattern:$0x73625140]
      %v1303 = vld.sshfl [vmem:[#allocation1 + $0x18] sm:$0xff pattern:$0x73625140]
      %v1305 = vld.sshfl [vmem:[#allocation1 + $0x20] sm:$0xff pattern:$0x73625140]
      %v1307 = vld.sshfl [vmem:[#allocation1 + $0x28] sm:$0xff pattern:$0x73625140]
      %1309 = vrot.lane.b32.xlu0 %v1297, 88
      %v1310 = vpop.permute.xlu0 %1309
      %1311 = vrot.lane.b32.xlu0 %v1299, 88
      %v1312 = vpop.permute.xlu0 %1311
      %1313 = vrot.lane.b32.xlu0 %v1301, 88
      %v1314 = vpop.permute.xlu0 %1313
      %1315 = vrot.lane.b32.xlu0 %v1303, 88
      %v1316 = vpop.permute.xlu0 %1315
      %1317 = vrot.lane.b32.xlu0 %v1305, 88
      %v1318 = vpop.permute.xlu0 %1317
      %1319 = vrot.lane.b32.xlu0 %v1307, 88
      %v1320 = vpop.permute.xlu0 %1319
      %vm1321 = vcmask 719872
      %v1322 = vsel %vm1321, %v1310, %v1312
      %v1323 = vsel %vm1321, %v1312, %v1314
      %v1324 = vsel %vm1321, %v1314, %v1316
      %v1325 = vsel %vm1321, %v1316, %v1318
      %v1326 = vsel %vm1321, %v1318, %v1320
      %v1328 = vsel %vm353, %v1291, 0
      %v1331 = vsel %vm357, %v1322, 0
      %v1334 = vsel %vm357, %v1323, 0
      %v1337 = vsel %vm357, %v1324, 0
      %v1340 = vsel %vm357, %v1325, 0
      %v1343 = vsel %vm357, %v1326, 0
      %1345 = vmatpush.bf16.msra.mxu0 0
      %1346 = vmatpush.bf16.msra.mxu0 0
      %1347 = vmatpush.bf16.msra.mxu0 0
      %1348 = vmatpush.bf16.msra.mxu0 0
      %1349 = vmatpush.bf16.msra.mxu0 0
      %1350 = vmatpush.bf16.msra.mxu0 0
      %1351 = vmatpush.bf16.msra.mxu0 0
      %1352 = vmatpush.bf16.msra.mxu0 %v1331
      %1353 = vmatmul.bf16.gmra.mxu0 %v1328
      %v1354 = vpop.f32.mrf.mxu0
      %v1355 = vadd.f32 0.0, %v1354
      %v1356 = vpop.f32.mrf.mxu0
      %1357 = vdwg.mxu0
      %1358 = vmatpush.bf16.msra.mxu0 0
      %1359 = vmatpush.bf16.msra.mxu0 0
      %1360 = vmatpush.bf16.msra.mxu0 0
      %1361 = vmatpush.bf16.msra.mxu0 0
      %1362 = vmatpush.bf16.msra.mxu0 0
      %1363 = vmatpush.bf16.msra.mxu0 0
      %1364 = vmatpush.bf16.msra.mxu0 0
      %1365 = vmatpush.bf16.msra.mxu0 %v1334
      %1366 = vmatmul.bf16.gmra.mxu0 %v1328
      %v1367 = vpop.f32.mrf.mxu0
      %v1368 = vadd.f32 0.0, %v1367
      %v1369 = vpop.f32.mrf.mxu0
      %1370 = vdwg.mxu0
      %1371 = vmatpush.bf16.msra.mxu0 0
      %1372 = vmatpush.bf16.msra.mxu0 0
      %1373 = vmatpush.bf16.msra.mxu0 0
      %1374 = vmatpush.bf16.msra.mxu0 0
      %1375 = vmatpush.bf16.msra.mxu0 0
      %1376 = vmatpush.bf16.msra.mxu0 0
      %1377 = vmatpush.bf16.msra.mxu0 0
      %1378 = vmatpush.bf16.msra.mxu0 %v1337
      %1379 = vmatmul.bf16.gmra.mxu0 %v1328
      %v1380 = vpop.f32.mrf.mxu0
      %v1381 = vadd.f32 0.0, %v1380
      %v1382 = vpop.f32.mrf.mxu0
      %1383 = vdwg.mxu0
      %1384 = vmatpush.bf16.msra.mxu0 0
      %1385 = vmatpush.bf16.msra.mxu0 0
      %1386 = vmatpush.bf16.msra.mxu0 0
      %1387 = vmatpush.bf16.msra.mxu0 0
      %1388 = vmatpush.bf16.msra.mxu0 0
      %1389 = vmatpush.bf16.msra.mxu0 0
      %1390 = vmatpush.bf16.msra.mxu0 0
      %1391 = vmatpush.bf16.msra.mxu0 %v1340
      %1392 = vmatmul.bf16.gmra.mxu0 %v1328
      %v1393 = vpop.f32.mrf.mxu0
      %v1394 = vadd.f32 0.0, %v1393
      %v1395 = vpop.f32.mrf.mxu0
      %1396 = vdwg.mxu0
      %1397 = vmatpush.bf16.msra.mxu0 0
      %1398 = vmatpush.bf16.msra.mxu0 0
      %1399 = vmatpush.bf16.msra.mxu0 0
      %1400 = vmatpush.bf16.msra.mxu0 0
      %1401 = vmatpush.bf16.msra.mxu0 0
      %1402 = vmatpush.bf16.msra.mxu0 0
      %1403 = vmatpush.bf16.msra.mxu0 0
      %1404 = vmatpush.bf16.msra.mxu0 %v1343
      %1405 = vmatmul.bf16.gmra.mxu0 %v1328
      %v1406 = vpop.f32.mrf.mxu0
      %v1407 = vadd.f32 0.0, %v1406
      %v1408 = vpop.f32.mrf.mxu0
      %1409 = vdwg.mxu0
      %v1410 = vadd.f32 %v1283, %v1355
      %v1411 = vadd.f32 %v1284, %v1368
      %v1412 = vadd.f32 %v1285, %v1381
      %v1413 = vadd.f32 %v1286, %v1394
      %v1414 = vadd.f32 %v1287, %v1407
      %v1415 = vld [vmem:[#allocation2] sm:$0xff]
      %v1416 = vld [vmem:[#allocation2 + $0x8] sm:$0xf]
      %s1417 = scalar_lea.vmem %s1, 36
      %v1418 = vld [vmem:[%s1417] sm:$0xf]
      %1420 = vst [vmem:[#allocation1] ss:$4 sm:$0xff] %v1415
      %s1422 = scalar_lea.vmem [#allocation1], 32
      %1423 = vst [vmem:[%s1422] ss:$4 sm:$0xff] %v1416
      %v1424 = vld.sshfl [vmem:[#allocation1] sm:$0xff pattern:$0x73625140]
      %v1426 = vld.sshfl [vmem:[#allocation1 + $0x8] sm:$0xff pattern:$0x73625140]
      %v1428 = vld.sshfl [vmem:[#allocation1 + $0x10] sm:$0xff pattern:$0x73625140]
      %v1430 = vld.sshfl [vmem:[#allocation1 + $0x18] sm:$0xff pattern:$0x73625140]
      %v1432 = vld.sshfl [vmem:[#allocation1 + $0x20] sm:$0xff pattern:$0x73625140]
      %v1434 = vld.sshfl [vmem:[#allocation1 + $0x28] sm:$0xff pattern:$0x73625140]
      %1436 = vrot.lane.b32.xlu0 %v1424, 87
      %v1437 = vpop.permute.xlu0 %1436
      %1438 = vrot.lane.b32.xlu0 %v1426, 87
      %v1439 = vpop.permute.xlu0 %1438
      %1440 = vrot.lane.b32.xlu0 %v1428, 87
      %v1441 = vpop.permute.xlu0 %1440
      %1442 = vrot.lane.b32.xlu0 %v1430, 87
      %v1443 = vpop.permute.xlu0 %1442
      %1444 = vrot.lane.b32.xlu0 %v1432, 87
      %v1445 = vpop.permute.xlu0 %1444
      %1446 = vrot.lane.b32.xlu0 %v1434, 87
      %v1447 = vpop.permute.xlu0 %1446
      %vm1448 = vcmask 711680
      %v1449 = vsel %vm1448, %v1437, %v1439
      %v1450 = vsel %vm1448, %v1439, %v1441
      %v1451 = vsel %vm1448, %v1441, %v1443
      %v1452 = vsel %vm1448, %v1443, %v1445
      %v1453 = vsel %vm1448, %v1445, %v1447
      %v1455 = vsel %vm353, %v1418, 0
      %v1458 = vsel %vm357, %v1449, 0
      %v1461 = vsel %vm357, %v1450, 0
      %v1464 = vsel %vm357, %v1451, 0
      %v1467 = vsel %vm357, %v1452, 0
      %v1470 = vsel %vm357, %v1453, 0
      %1472 = vmatpush.bf16.msra.mxu0 0
      %1473 = vmatpush.bf16.msra.mxu0 0
      %1474 = vmatpush.bf16.msra.mxu0 0
      %1475 = vmatpush.bf16.msra.mxu0 0
      %1476 = vmatpush.bf16.msra.mxu0 0
      %1477 = vmatpush.bf16.msra.mxu0 0
      %1478 = vmatpush.bf16.msra.mxu0 0
      %1479 = vmatpush.bf16.msra.mxu0 %v1458
      %1480 = vmatmul.bf16.gmra.mxu0 %v1455
      %v1481 = vpop.f32.mrf.mxu0
      %v1482 = vadd.f32 0.0, %v1481
      %v1483 = vpop.f32.mrf.mxu0
      %1484 = vdwg.mxu0
      %1485 = vmatpush.bf16.msra.mxu0 0
      %1486 = vmatpush.bf16.msra.mxu0 0
      %1487 = vmatpush.bf16.msra.mxu0 0
      %1488 = vmatpush.bf16.msra.mxu0 0
      %1489 = vmatpush.bf16.msra.mxu0 0
      %1490 = vmatpush.bf16.msra.mxu0 0
      %1491 = vmatpush.bf16.msra.mxu0 0
      %1492 = vmatpush.bf16.msra.mxu0 %v1461
      %1493 = vmatmul.bf16.gmra.mxu0 %v1455
      %v1494 = vpop.f32.mrf.mxu0
      %v1495 = vadd.f32 0.0, %v1494
      %v1496 = vpop.f32.mrf.mxu0
      %1497 = vdwg.mxu0
      %1498 = vmatpush.bf16.msra.mxu0 0
      %1499 = vmatpush.bf16.msra.mxu0 0
      %1500 = vmatpush.bf16.msra.mxu0 0
      %1501 = vmatpush.bf16.msra.mxu0 0
      %1502 = vmatpush.bf16.msra.mxu0 0
      %1503 = vmatpush.bf16.msra.mxu0 0
      %1504 = vmatpush.bf16.msra.mxu0 0
      %1505 = vmatpush.bf16.msra.mxu0 %v1464
      %1506 = vmatmul.bf16.gmra.mxu0 %v1455
      %v1507 = vpop.f32.mrf.mxu0
      %v1508 = vadd.f32 0.0, %v1507
      %v1509 = vpop.f32.mrf.mxu0
      %1510 = vdwg.mxu0
      %1511 = vmatpush.bf16.msra.mxu0 0
      %1512 = vmatpush.bf16.msra.mxu0 0
      %1513 = vmatpush.bf16.msra.mxu0 0
      %1514 = vmatpush.bf16.msra.mxu0 0
      %1515 = vmatpush.bf16.msra.mxu0 0
      %1516 = vmatpush.bf16.msra.mxu0 0
      %1517 = vmatpush.bf16.msra.mxu0 0
      %1518 = vmatpush.bf16.msra.mxu0 %v1467
      %1519 = vmatmul.bf16.gmra.mxu0 %v1455
      %v1520 = vpop.f32.mrf.mxu0
      %v1521 = vadd.f32 0.0, %v1520
      %v1522 = vpop.f32.mrf.mxu0
      %1523 = vdwg.mxu0
      %1524 = vmatpush.bf16.msra.mxu0 0
      %1525 = vmatpush.bf16.msra.mxu0 0
      %1526 = vmatpush.bf16.msra.mxu0 0
      %1527 = vmatpush.bf16.msra.mxu0 0
      %1528 = vmatpush.bf16.msra.mxu0 0
      %1529 = vmatpush.bf16.msra.mxu0 0
      %1530 = vmatpush.bf16.msra.mxu0 0
      %1531 = vmatpush.bf16.msra.mxu0 %v1470
      %1532 = vmatmul.bf16.gmra.mxu0 %v1455
      %v1533 = vpop.f32.mrf.mxu0
      %v1534 = vadd.f32 0.0, %v1533
      %v1535 = vpop.f32.mrf.mxu0
      %1536 = vdwg.mxu0
      %v1537 = vadd.f32 %v1410, %v1482
      %v1538 = vadd.f32 %v1411, %v1495
      %v1539 = vadd.f32 %v1412, %v1508
      %v1540 = vadd.f32 %v1413, %v1521
      %v1541 = vadd.f32 %v1414, %v1534
      %v1542 = vld [vmem:[#allocation2] sm:$0xff]
      %v1543 = vld [vmem:[#allocation2 + $0x8] sm:$0xf]
      %s1544 = scalar_lea.vmem %s1, 40
      %v1545 = vld [vmem:[%s1544] sm:$0xf]
      %1547 = vst [vmem:[#allocation1] ss:$4 sm:$0xff] %v1542
      %s1549 = scalar_lea.vmem [#allocation1], 32
      %1550 = vst [vmem:[%s1549] ss:$4 sm:$0xff] %v1543
      %v1551 = vld.sshfl [vmem:[#allocation1] sm:$0xff pattern:$0x73625140]
      %v1553 = vld.sshfl [vmem:[#allocation1 + $0x8] sm:$0xff pattern:$0x73625140]
      %v1555 = vld.sshfl [vmem:[#allocation1 + $0x10] sm:$0xff pattern:$0x73625140]
      %v1557 = vld.sshfl [vmem:[#allocation1 + $0x18] sm:$0xff pattern:$0x73625140]
      %v1559 = vld.sshfl [vmem:[#allocation1 + $0x20] sm:$0xff pattern:$0x73625140]
      %v1561 = vld.sshfl [vmem:[#allocation1 + $0x28] sm:$0xff pattern:$0x73625140]
      %1563 = vrot.lane.b32.xlu0 %v1551, 86
      %v1564 = vpop.permute.xlu0 %1563
      %1565 = vrot.lane.b32.xlu0 %v1553, 86
      %v1566 = vpop.permute.xlu0 %1565
      %1567 = vrot.lane.b32.xlu0 %v1555, 86
      %v1568 = vpop.permute.xlu0 %1567
      %1569 = vrot.lane.b32.xlu0 %v1557, 86
      %v1570 = vpop.permute.xlu0 %1569
      %1571 = vrot.lane.b32.xlu0 %v1559, 86
      %v1572 = vpop.permute.xlu0 %1571
      %1573 = vrot.lane.b32.xlu0 %v1561, 86
      %v1574 = vpop.permute.xlu0 %1573
      %vm1575 = vcmask 703488
      %v1576 = vsel %vm1575, %v1564, %v1566
      %v1577 = vsel %vm1575, %v1566, %v1568
      %v1578 = vsel %vm1575, %v1568, %v1570
      %v1579 = vsel %vm1575, %v1570, %v1572
      %v1580 = vsel %vm1575, %v1572, %v1574
      %v1582 = vsel %vm353, %v1545, 0
      %v1585 = vsel %vm357, %v1576, 0
      %v1588 = vsel %vm357, %v1577, 0
      %v1591 = vsel %vm357, %v1578, 0
      %v1594 = vsel %vm357, %v1579, 0
      %v1597 = vsel %vm357, %v1580, 0
      %1599 = vmatpush.bf16.msra.mxu0 0
      %1600 = vmatpush.bf16.msra.mxu0 0
      %1601 = vmatpush.bf16.msra.mxu0 0
      %1602 = vmatpush.bf16.msra.mxu0 0
      %1603 = vmatpush.bf16.msra.mxu0 0
      %1604 = vmatpush.bf16.msra.mxu0 0
      %1605 = vmatpush.bf16.msra.mxu0 0
      %1606 = vmatpush.bf16.msra.mxu0 %v1585
      %1607 = vmatmul.bf16.gmra.mxu0 %v1582
      %v1608 = vpop.f32.mrf.mxu0
      %v1609 = vadd.f32 0.0, %v1608
      %v1610 = vpop.f32.mrf.mxu0
      %1611 = vdwg.mxu0
      %1612 = vmatpush.bf16.msra.mxu0 0
      %1613 = vmatpush.bf16.msra.mxu0 0
      %1614 = vmatpush.bf16.msra.mxu0 0
      %1615 = vmatpush.bf16.msra.mxu0 0
      %1616 = vmatpush.bf16.msra.mxu0 0
      %1617 = vmatpush.bf16.msra.mxu0 0
      %1618 = vmatpush.bf16.msra.mxu0 0
      %1619 = vmatpush.bf16.msra.mxu0 %v1588
      %1620 = vmatmul.bf16.gmra.mxu0 %v1582
      %v1621 = vpop.f32.mrf.mxu0
      %v1622 = vadd.f32 0.0, %v1621
      %v1623 = vpop.f32.mrf.mxu0
      %1624 = vdwg.mxu0
      %1625 = vmatpush.bf16.msra.mxu0 0
      %1626 = vmatpush.bf16.msra.mxu0 0
      %1627 = vmatpush.bf16.msra.mxu0 0
      %1628 = vmatpush.bf16.msra.mxu0 0
      %1629 = vmatpush.bf16.msra.mxu0 0
      %1630 = vmatpush.bf16.msra.mxu0 0
      %1631 = vmatpush.bf16.msra.mxu0 0
      %1632 = vmatpush.bf16.msra.mxu0 %v1591
      %1633 = vmatmul.bf16.gmra.mxu0 %v1582
      %v1634 = vpop.f32.mrf.mxu0
      %v1635 = vadd.f32 0.0, %v1634
      %v1636 = vpop.f32.mrf.mxu0
      %1637 = vdwg.mxu0
      %1638 = vmatpush.bf16.msra.mxu0 0
      %1639 = vmatpush.bf16.msra.mxu0 0
      %1640 = vmatpush.bf16.msra.mxu0 0
      %1641 = vmatpush.bf16.msra.mxu0 0
      %1642 = vmatpush.bf16.msra.mxu0 0
      %1643 = vmatpush.bf16.msra.mxu0 0
      %1644 = vmatpush.bf16.msra.mxu0 0
      %1645 = vmatpush.bf16.msra.mxu0 %v1594
      %1646 = vmatmul.bf16.gmra.mxu0 %v1582
      %v1647 = vpop.f32.mrf.mxu0
      %v1648 = vadd.f32 0.0, %v1647
      %v1649 = vpop.f32.mrf.mxu0
      %1650 = vdwg.mxu0
      %1651 = vmatpush.bf16.msra.mxu0 0
      %1652 = vmatpush.bf16.msra.mxu0 0
      %1653 = vmatpush.bf16.msra.mxu0 0
      %1654 = vmatpush.bf16.msra.mxu0 0
      %1655 = vmatpush.bf16.msra.mxu0 0
      %1656 = vmatpush.bf16.msra.mxu0 0
      %1657 = vmatpush.bf16.msra.mxu0 0
      %1658 = vmatpush.bf16.msra.mxu0 %v1597
      %1659 = vmatmul.bf16.gmra.mxu0 %v1582
      %v1660 = vpop.f32.mrf.mxu0
      %v1661 = vadd.f32 0.0, %v1660
      %v1662 = vpop.f32.mrf.mxu0
      %1663 = vdwg.mxu0
      %v1664 = vadd.f32 %v1537, %v1609
      %v1665 = vadd.f32 %v1538, %v1622
      %v1666 = vadd.f32 %v1539, %v1635
      %v1667 = vadd.f32 %v1540, %v1648
      %v1668 = vadd.f32 %v1541, %v1661
      %v1669 = vld [vmem:[#allocation2] sm:$0xff]
      %v1670 = vld [vmem:[#allocation2 + $0x8] sm:$0xf]
      %s1671 = scalar_lea.vmem %s1, 44
      %v1672 = vld [vmem:[%s1671] sm:$0xf]
      %1674 = vst [vmem:[#allocation1] ss:$4 sm:$0xff] %v1669
      %s1676 = scalar_lea.vmem [#allocation1], 32
      %1677 = vst [vmem:[%s1676] ss:$4 sm:$0xff] %v1670
      %v1678 = vld.sshfl [vmem:[#allocation1] sm:$0xff pattern:$0x73625140]
      %v1680 = vld.sshfl [vmem:[#allocation1 + $0x8] sm:$0xff pattern:$0x73625140]
      %v1682 = vld.sshfl [vmem:[#allocation1 + $0x10] sm:$0xff pattern:$0x73625140]
      %v1684 = vld.sshfl [vmem:[#allocation1 + $0x18] sm:$0xff pattern:$0x73625140]
      %v1686 = vld.sshfl [vmem:[#allocation1 + $0x20] sm:$0xff pattern:$0x73625140]
      %v1688 = vld.sshfl [vmem:[#allocation1 + $0x28] sm:$0xff pattern:$0x73625140]
      %1690 = vrot.lane.b32.xlu0 %v1678, 85
      %v1691 = vpop.permute.xlu0 %1690
      %1692 = vrot.lane.b32.xlu0 %v1680, 85
      %v1693 = vpop.permute.xlu0 %1692
      %1694 = vrot.lane.b32.xlu0 %v1682, 85
      %v1695 = vpop.permute.xlu0 %1694
      %1696 = vrot.lane.b32.xlu0 %v1684, 85
      %v1697 = vpop.permute.xlu0 %1696
      %1698 = vrot.lane.b32.xlu0 %v1686, 85
      %v1699 = vpop.permute.xlu0 %1698
      %1700 = vrot.lane.b32.xlu0 %v1688, 85
      %v1701 = vpop.permute.xlu0 %1700
      %vm1702 = vcmask 695296
      %v1703 = vsel %vm1702, %v1691, %v1693
      %v1704 = vsel %vm1702, %v1693, %v1695
      %v1705 = vsel %vm1702, %v1695, %v1697
      %v1706 = vsel %vm1702, %v1697, %v1699
      %v1707 = vsel %vm1702, %v1699, %v1701
      %v1709 = vsel %vm353, %v1672, 0
      %v1712 = vsel %vm357, %v1703, 0
      %v1715 = vsel %vm357, %v1704, 0
      %v1718 = vsel %vm357, %v1705, 0
      %v1721 = vsel %vm357, %v1706, 0
      %v1724 = vsel %vm357, %v1707, 0
      %1726 = vmatpush.bf16.msra.mxu0 0
      %1727 = vmatpush.bf16.msra.mxu0 0
      %1728 = vmatpush.bf16.msra.mxu0 0
      %1729 = vmatpush.bf16.msra.mxu0 0
      %1730 = vmatpush.bf16.msra.mxu0 0
      %1731 = vmatpush.bf16.msra.mxu0 0
      %1732 = vmatpush.bf16.msra.mxu0 0
      %1733 = vmatpush.bf16.msra.mxu0 %v1712
      %1734 = vmatmul.bf16.gmra.mxu0 %v1709
      %v1735 = vpop.f32.mrf.mxu0
      %v1736 = vadd.f32 0.0, %v1735
      %v1737 = vpop.f32.mrf.mxu0
      %1738 = vdwg.mxu0
      %1739 = vmatpush.bf16.msra.mxu0 0
      %1740 = vmatpush.bf16.msra.mxu0 0
      %1741 = vmatpush.bf16.msra.mxu0 0
      %1742 = vmatpush.bf16.msra.mxu0 0
      %1743 = vmatpush.bf16.msra.mxu0 0
      %1744 = vmatpush.bf16.msra.mxu0 0
      %1745 = vmatpush.bf16.msra.mxu0 0
      %1746 = vmatpush.bf16.msra.mxu0 %v1715
      %1747 = vmatmul.bf16.gmra.mxu0 %v1709
      %v1748 = vpop.f32.mrf.mxu0
      %v1749 = vadd.f32 0.0, %v1748
      %v1750 = vpop.f32.mrf.mxu0
      %1751 = vdwg.mxu0
      %1752 = vmatpush.bf16.msra.mxu0 0
      %1753 = vmatpush.bf16.msra.mxu0 0
      %1754 = vmatpush.bf16.msra.mxu0 0
      %1755 = vmatpush.bf16.msra.mxu0 0
      %1756 = vmatpush.bf16.msra.mxu0 0
      %1757 = vmatpush.bf16.msra.mxu0 0
      %1758 = vmatpush.bf16.msra.mxu0 0
      %1759 = vmatpush.bf16.msra.mxu0 %v1718
      %1760 = vmatmul.bf16.gmra.mxu0 %v1709
      %v1761 = vpop.f32.mrf.mxu0
      %v1762 = vadd.f32 0.0, %v1761
      %v1763 = vpop.f32.mrf.mxu0
      %1764 = vdwg.mxu0
      %1765 = vmatpush.bf16.msra.mxu0 0
      %1766 = vmatpush.bf16.msra.mxu0 0
      %1767 = vmatpush.bf16.msra.mxu0 0
      %1768 = vmatpush.bf16.msra.mxu0 0
      %1769 = vmatpush.bf16.msra.mxu0 0
      %1770 = vmatpush.bf16.msra.mxu0 0
      %1771 = vmatpush.bf16.msra.mxu0 0
      %1772 = vmatpush.bf16.msra.mxu0 %v1721
      %1773 = vmatmul.bf16.gmra.mxu0 %v1709
      %v1774 = vpop.f32.mrf.mxu0
      %v1775 = vadd.f32 0.0, %v1774
      %v1776 = vpop.f32.mrf.mxu0
      %1777 = vdwg.mxu0
      %1778 = vmatpush.bf16.msra.mxu0 0
      %1779 = vmatpush.bf16.msra.mxu0 0
      %1780 = vmatpush.bf16.msra.mxu0 0
      %1781 = vmatpush.bf16.msra.mxu0 0
      %1782 = vmatpush.bf16.msra.mxu0 0
      %1783 = vmatpush.bf16.msra.mxu0 0
      %1784 = vmatpush.bf16.msra.mxu0 0
      %1785 = vmatpush.bf16.msra.mxu0 %v1724
      %1786 = vmatmul.bf16.gmra.mxu0 %v1709
      %v1787 = vpop.f32.mrf.mxu0
      %v1788 = vadd.f32 0.0, %v1787
      %v1789 = vpop.f32.mrf.mxu0
      %1790 = vdwg.mxu0
      %v1791 = vadd.f32 %v1664, %v1736
      %v1792 = vadd.f32 %v1665, %v1749
      %v1793 = vadd.f32 %v1666, %v1762
      %v1794 = vadd.f32 %v1667, %v1775
      %v1795 = vadd.f32 %v1668, %v1788
      %v1796 = vld [vmem:[#allocation2] sm:$0xff]
      %v1797 = vld [vmem:[#allocation2 + $0x8] sm:$0xf]
      %s1798 = scalar_lea.vmem %s1, 48
      %v1799 = vld [vmem:[%s1798] sm:$0xf]
      %1801 = vst [vmem:[#allocation1] ss:$4 sm:$0xff] %v1796
      %s1803 = scalar_lea.vmem [#allocation1], 32
      %1804 = vst [vmem:[%s1803] ss:$4 sm:$0xff] %v1797
      %v1805 = vld.sshfl [vmem:[#allocation1] sm:$0xff pattern:$0x73625140]
      %v1807 = vld.sshfl [vmem:[#allocation1 + $0x8] sm:$0xff pattern:$0x73625140]
      %v1809 = vld.sshfl [vmem:[#allocation1 + $0x10] sm:$0xff pattern:$0x73625140]
      %v1811 = vld.sshfl [vmem:[#allocation1 + $0x18] sm:$0xff pattern:$0x73625140]
      %v1813 = vld.sshfl [vmem:[#allocation1 + $0x20] sm:$0xff pattern:$0x73625140]
      %v1815 = vld.sshfl [vmem:[#allocation1 + $0x28] sm:$0xff pattern:$0x73625140]
      %1817 = vrot.lane.b32.xlu0 %v1805, 68
      %v1818 = vpop.permute.xlu0 %1817
      %1819 = vrot.lane.b32.xlu0 %v1807, 68
      %v1820 = vpop.permute.xlu0 %1819
      %1821 = vrot.lane.b32.xlu0 %v1809, 68
      %v1822 = vpop.permute.xlu0 %1821
      %1823 = vrot.lane.b32.xlu0 %v1811, 68
      %v1824 = vpop.permute.xlu0 %1823
      %1825 = vrot.lane.b32.xlu0 %v1813, 68
      %v1826 = vpop.permute.xlu0 %1825
      %1827 = vrot.lane.b32.xlu0 %v1815, 68
      %v1828 = vpop.permute.xlu0 %1827
      %vm1829 = vcmask 556032
      %v1830 = vsel %vm1829, %v1818, %v1820
      %v1831 = vsel %vm1829, %v1820, %v1822
      %v1832 = vsel %vm1829, %v1822, %v1824
      %v1833 = vsel %vm1829, %v1824, %v1826
      %v1834 = vsel %vm1829, %v1826, %v1828
      %v1836 = vsel %vm353, %v1799, 0
      %v1839 = vsel %vm357, %v1830, 0
      %v1842 = vsel %vm357, %v1831, 0
      %v1845 = vsel %vm357, %v1832, 0
      %v1848 = vsel %vm357, %v1833, 0
      %v1851 = vsel %vm357, %v1834, 0
      %1853 = vmatpush.bf16.msra.mxu0 0
      %1854 = vmatpush.bf16.msra.mxu0 0
      %1855 = vmatpush.bf16.msra.mxu0 0
      %1856 = vmatpush.bf16.msra.mxu0 0
      %1857 = vmatpush.bf16.msra.mxu0 0
      %1858 = vmatpush.bf16.msra.mxu0 0
      %1859 = vmatpush.bf16.msra.mxu0 0
      %1860 = vmatpush.bf16.msra.mxu0 %v1839
      %1861 = vmatmul.bf16.gmra.mxu0 %v1836
      %v1862 = vpop.f32.mrf.mxu0
      %v1863 = vadd.f32 0.0, %v1862
      %v1864 = vpop.f32.mrf.mxu0
      %1865 = vdwg.mxu0
      %1866 = vmatpush.bf16.msra.mxu0 0
      %1867 = vmatpush.bf16.msra.mxu0 0
      %1868 = vmatpush.bf16.msra.mxu0 0
      %1869 = vmatpush.bf16.msra.mxu0 0
      %1870 = vmatpush.bf16.msra.mxu0 0
      %1871 = vmatpush.bf16.msra.mxu0 0
      %1872 = vmatpush.bf16.msra.mxu0 0
      %1873 = vmatpush.bf16.msra.mxu0 %v1842
      %1874 = vmatmul.bf16.gmra.mxu0 %v1836
      %v1875 = vpop.f32.mrf.mxu0
      %v1876 = vadd.f32 0.0, %v1875
      %v1877 = vpop.f32.mrf.mxu0
      %1878 = vdwg.mxu0
      %1879 = vmatpush.bf16.msra.mxu0 0
      %1880 = vmatpush.bf16.msra.mxu0 0
      %1881 = vmatpush.bf16.msra.mxu0 0
      %1882 = vmatpush.bf16.msra.mxu0 0
      %1883 = vmatpush.bf16.msra.mxu0 0
      %1884 = vmatpush.bf16.msra.mxu0 0
      %1885 = vmatpush.bf16.msra.mxu0 0
      %1886 = vmatpush.bf16.msra.mxu0 %v1845
      %1887 = vmatmul.bf16.gmra.mxu0 %v1836
      %v1888 = vpop.f32.mrf.mxu0
      %v1889 = vadd.f32 0.0, %v1888
      %v1890 = vpop.f32.mrf.mxu0
      %1891 = vdwg.mxu0
      %1892 = vmatpush.bf16.msra.mxu0 0
      %1893 = vmatpush.bf16.msra.mxu0 0
      %1894 = vmatpush.bf16.msra.mxu0 0
      %1895 = vmatpush.bf16.msra.mxu0 0
      %1896 = vmatpush.bf16.msra.mxu0 0
      %1897 = vmatpush.bf16.msra.mxu0 0
      %1898 = vmatpush.bf16.msra.mxu0 0
      %1899 = vmatpush.bf16.msra.mxu0 %v1848
      %1900 = vmatmul.bf16.gmra.mxu0 %v1836
      %v1901 = vpop.f32.mrf.mxu0
      %v1902 = vadd.f32 0.0, %v1901
      %v1903 = vpop.f32.mrf.mxu0
      %1904 = vdwg.mxu0
      %1905 = vmatpush.bf16.msra.mxu0 0
      %1906 = vmatpush.bf16.msra.mxu0 0
      %1907 = vmatpush.bf16.msra.mxu0 0
      %1908 = vmatpush.bf16.msra.mxu0 0
      %1909 = vmatpush.bf16.msra.mxu0 0
      %1910 = vmatpush.bf16.msra.mxu0 0
      %1911 = vmatpush.bf16.msra.mxu0 0
      %1912 = vmatpush.bf16.msra.mxu0 %v1851
      %1913 = vmatmul.bf16.gmra.mxu0 %v1836
      %v1914 = vpop.f32.mrf.mxu0
      %v1915 = vadd.f32 0.0, %v1914
      %v1916 = vpop.f32.mrf.mxu0
      %1917 = vdwg.mxu0
      %v1918 = vadd.f32 %v1791, %v1863
      %v1919 = vadd.f32 %v1792, %v1876
      %v1920 = vadd.f32 %v1793, %v1889
      %v1921 = vadd.f32 %v1794, %v1902
      %v1922 = vadd.f32 %v1795, %v1915
      %v1923 = vld [vmem:[#allocation2] sm:$0xff]
      %v1924 = vld [vmem:[#allocation2 + $0x8] sm:$0xf]
      %s1925 = scalar_lea.vmem %s1, 52
      %v1926 = vld [vmem:[%s1925] sm:$0xf]
      %1928 = vst [vmem:[#allocation1] ss:$4 sm:$0xff] %v1923
      %s1930 = scalar_lea.vmem [#allocation1], 32
      %1931 = vst [vmem:[%s1930] ss:$4 sm:$0xff] %v1924
      %v1932 = vld.sshfl [vmem:[#allocation1] sm:$0xff pattern:$0x73625140]
      %v1934 = vld.sshfl [vmem:[#allocation1 + $0x8] sm:$0xff pattern:$0x73625140]
      %v1936 = vld.sshfl [vmem:[#allocation1 + $0x10] sm:$0xff pattern:$0x73625140]
      %v1938 = vld.sshfl [vmem:[#allocation1 + $0x18] sm:$0xff pattern:$0x73625140]
      %v1940 = vld.sshfl [vmem:[#allocation1 + $0x20] sm:$0xff pattern:$0x73625140]
      %v1942 = vld.sshfl [vmem:[#allocation1 + $0x28] sm:$0xff pattern:$0x73625140]
      %1944 = vrot.lane.b32.xlu0 %v1932, 67
      %v1945 = vpop.permute.xlu0 %1944
      %1946 = vrot.lane.b32.xlu0 %v1934, 67
      %v1947 = vpop.permute.xlu0 %1946
      %1948 = vrot.lane.b32.xlu0 %v1936, 67
      %v1949 = vpop.permute.xlu0 %1948
      %1950 = vrot.lane.b32.xlu0 %v1938, 67
      %v1951 = vpop.permute.xlu0 %1950
      %1952 = vrot.lane.b32.xlu0 %v1940, 67
      %v1953 = vpop.permute.xlu0 %1952
      %1954 = vrot.lane.b32.xlu0 %v1942, 67
      %v1955 = vpop.permute.xlu0 %1954
      %vm1956 = vcmask 547840
      %v1957 = vsel %vm1956, %v1945, %v1947
      %v1958 = vsel %vm1956, %v1947, %v1949
      %v1959 = vsel %vm1956, %v1949, %v1951
      %v1960 = vsel %vm1956, %v1951, %v1953
      %v1961 = vsel %vm1956, %v1953, %v1955
      %v1963 = vsel %vm353, %v1926, 0
      %v1966 = vsel %vm357, %v1957, 0
      %v1969 = vsel %vm357, %v1958, 0
      %v1972 = vsel %vm357, %v1959, 0
      %v1975 = vsel %vm357, %v1960, 0
      %v1978 = vsel %vm357, %v1961, 0
      %1980 = vmatpush.bf16.msra.mxu0 0
      %1981 = vmatpush.bf16.msra.mxu0 0
      %1982 = vmatpush.bf16.msra.mxu0 0
      %1983 = vmatpush.bf16.msra.mxu0 0
      %1984 = vmatpush.bf16.msra.mxu0 0
      %1985 = vmatpush.bf16.msra.mxu0 0
      %1986 = vmatpush.bf16.msra.mxu0 0
      %1987 = vmatpush.bf16.msra.mxu0 %v1966
      %1988 = vmatmul.bf16.gmra.mxu0 %v1963
      %v1989 = vpop.f32.mrf.mxu0
      %v1990 = vadd.f32 0.0, %v1989
      %v1991 = vpop.f32.mrf.mxu0
      %1992 = vdwg.mxu0
      %1993 = vmatpush.bf16.msra.mxu0 0
      %1994 = vmatpush.bf16.msra.mxu0 0
      %1995 = vmatpush.bf16.msra.mxu0 0
      %1996 = vmatpush.bf16.msra.mxu0 0
      %1997 = vmatpush.bf16.msra.mxu0 0
      %1998 = vmatpush.bf16.msra.mxu0 0
      %1999 = vmatpush.bf16.msra.mxu0 0
      %2000 = vmatpush.bf16.msra.mxu0 %v1969
      %2001 = vmatmul.bf16.gmra.mxu0 %v1963
      %v2002 = vpop.f32.mrf.mxu0
      %v2003 = vadd.f32 0.0, %v2002
      %v2004 = vpop.f32.mrf.mxu0
      %2005 = vdwg.mxu0
      %2006 = vmatpush.bf16.msra.mxu0 0
      %2007 = vmatpush.bf16.msra.mxu0 0
      %2008 = vmatpush.bf16.msra.mxu0 0
      %2009 = vmatpush.bf16.msra.mxu0 0
      %2010 = vmatpush.bf16.msra.mxu0 0
      %2011 = vmatpush.bf16.msra.mxu0 0
      %2012 = vmatpush.bf16.msra.mxu0 0
      %2013 = vmatpush.bf16.msra.mxu0 %v1972
      %2014 = vmatmul.bf16.gmra.mxu0 %v1963
      %v2015 = vpop.f32.mrf.mxu0
      %v2016 = vadd.f32 0.0, %v2015
      %v2017 = vpop.f32.mrf.mxu0
      %2018 = vdwg.mxu0
      %2019 = vmatpush.bf16.msra.mxu0 0
      %2020 = vmatpush.bf16.msra.mxu0 0
      %2021 = vmatpush.bf16.msra.mxu0 0
      %2022 = vmatpush.bf16.msra.mxu0 0
      %2023 = vmatpush.bf16.msra.mxu0 0
      %2024 = vmatpush.bf16.msra.mxu0 0
      %2025 = vmatpush.bf16.msra.mxu0 0
      %2026 = vmatpush.bf16.msra.mxu0 %v1975
      %2027 = vmatmul.bf16.gmra.mxu0 %v1963
      %v2028 = vpop.f32.mrf.mxu0
      %v2029 = vadd.f32 0.0, %v2028
      %v2030 = vpop.f32.mrf.mxu0
      %2031 = vdwg.mxu0
      %2032 = vmatpush.bf16.msra.mxu0 0
      %2033 = vmatpush.bf16.msra.mxu0 0
      %2034 = vmatpush.bf16.msra.mxu0 0
      %2035 = vmatpush.bf16.msra.mxu0 0
      %2036 = vmatpush.bf16.msra.mxu0 0
      %2037 = vmatpush.bf16.msra.mxu0 0
      %2038 = vmatpush.bf16.msra.mxu0 0
      %2039 = vmatpush.bf16.msra.mxu0 %v1978
      %2040 = vmatmul.bf16.gmra.mxu0 %v1963
      %v2041 = vpop.f32.mrf.mxu0
      %v2042 = vadd.f32 0.0, %v2041
      %v2043 = vpop.f32.mrf.mxu0
      %2044 = vdwg.mxu0
      %v2045 = vadd.f32 %v1918, %v1990
      %v2046 = vadd.f32 %v1919, %v2003
      %v2047 = vadd.f32 %v1920, %v2016
      %v2048 = vadd.f32 %v1921, %v2029
      %v2049 = vadd.f32 %v1922, %v2042
      %v2050 = vld [vmem:[#allocation2] sm:$0xff]
      %v2051 = vld [vmem:[#allocation2 + $0x8] sm:$0xf]
      %s2052 = scalar_lea.vmem %s1, 56
      %v2053 = vld [vmem:[%s2052] sm:$0xf]
      %2055 = vst [vmem:[#allocation1] ss:$4 sm:$0xff] %v2050
      %s2057 = scalar_lea.vmem [#allocation1], 32
      %2058 = vst [vmem:[%s2057] ss:$4 sm:$0xff] %v2051
      %v2059 = vld.sshfl [vmem:[#allocation1] sm:$0xff pattern:$0x73625140]
      %v2061 = vld.sshfl [vmem:[#allocation1 + $0x8] sm:$0xff pattern:$0x73625140]
      %v2063 = vld.sshfl [vmem:[#allocation1 + $0x10] sm:$0xff pattern:$0x73625140]
      %v2065 = vld.sshfl [vmem:[#allocation1 + $0x18] sm:$0xff pattern:$0x73625140]
      %v2067 = vld.sshfl [vmem:[#allocation1 + $0x20] sm:$0xff pattern:$0x73625140]
      %v2069 = vld.sshfl [vmem:[#allocation1 + $0x28] sm:$0xff pattern:$0x73625140]
      %2071 = vrot.lane.b32.xlu0 %v2059, 66
      %v2072 = vpop.permute.xlu0 %2071
      %2073 = vrot.lane.b32.xlu0 %v2061, 66
      %v2074 = vpop.permute.xlu0 %2073
      %2075 = vrot.lane.b32.xlu0 %v2063, 66
      %v2076 = vpop.permute.xlu0 %2075
      %2077 = vrot.lane.b32.xlu0 %v2065, 66
      %v2078 = vpop.permute.xlu0 %2077
      %2079 = vrot.lane.b32.xlu0 %v2067, 66
      %v2080 = vpop.permute.xlu0 %2079
      %2081 = vrot.lane.b32.xlu0 %v2069, 66
      %v2082 = vpop.permute.xlu0 %2081
      %vm2083 = vcmask 539648
      %v2084 = vsel %vm2083, %v2072, %v2074
      %v2085 = vsel %vm2083, %v2074, %v2076
      %v2086 = vsel %vm2083, %v2076, %v2078
      %v2087 = vsel %vm2083, %v2078, %v2080
      %v2088 = vsel %vm2083, %v2080, %v2082
      %v2090 = vsel %vm353, %v2053, 0
      %v2093 = vsel %vm357, %v2084, 0
      %v2096 = vsel %vm357, %v2085, 0
      %v2099 = vsel %vm357, %v2086, 0
      %v2102 = vsel %vm357, %v2087, 0
      %v2105 = vsel %vm357, %v2088, 0
      %2107 = vmatpush.bf16.msra.mxu0 0
      %2108 = vmatpush.bf16.msra.mxu0 0
      %2109 = vmatpush.bf16.msra.mxu0 0
      %2110 = vmatpush.bf16.msra.mxu0 0
      %2111 = vmatpush.bf16.msra.mxu0 0
      %2112 = vmatpush.bf16.msra.mxu0 0
      %2113 = vmatpush.bf16.msra.mxu0 0
      %2114 = vmatpush.bf16.msra.mxu0 %v2093
      %2115 = vmatmul.bf16.gmra.mxu0 %v2090
      %v2116 = vpop.f32.mrf.mxu0
      %v2117 = vadd.f32 0.0, %v2116
      %v2118 = vpop.f32.mrf.mxu0
      %2119 = vdwg.mxu0
      %2120 = vmatpush.bf16.msra.mxu0 0
      %2121 = vmatpush.bf16.msra.mxu0 0
      %2122 = vmatpush.bf16.msra.mxu0 0
      %2123 = vmatpush.bf16.msra.mxu0 0
      %2124 = vmatpush.bf16.msra.mxu0 0
      %2125 = vmatpush.bf16.msra.mxu0 0
      %2126 = vmatpush.bf16.msra.mxu0 0
      %2127 = vmatpush.bf16.msra.mxu0 %v2096
      %2128 = vmatmul.bf16.gmra.mxu0 %v2090
      %v2129 = vpop.f32.mrf.mxu0
      %v2130 = vadd.f32 0.0, %v2129
      %v2131 = vpop.f32.mrf.mxu0
      %2132 = vdwg.mxu0
      %2133 = vmatpush.bf16.msra.mxu0 0
      %2134 = vmatpush.bf16.msra.mxu0 0
      %2135 = vmatpush.bf16.msra.mxu0 0
      %2136 = vmatpush.bf16.msra.mxu0 0
      %2137 = vmatpush.bf16.msra.mxu0 0
      %2138 = vmatpush.bf16.msra.mxu0 0
      %2139 = vmatpush.bf16.msra.mxu0 0
      %2140 = vmatpush.bf16.msra.mxu0 %v2099
      %2141 = vmatmul.bf16.gmra.mxu0 %v2090
      %v2142 = vpop.f32.mrf.mxu0
      %v2143 = vadd.f32 0.0, %v2142
      %v2144 = vpop.f32.mrf.mxu0
      %2145 = vdwg.mxu0
      %2146 = vmatpush.bf16.msra.mxu0 0
      %2147 = vmatpush.bf16.msra.mxu0 0
      %2148 = vmatpush.bf16.msra.mxu0 0
      %2149 = vmatpush.bf16.msra.mxu0 0
      %2150 = vmatpush.bf16.msra.mxu0 0
      %2151 = vmatpush.bf16.msra.mxu0 0
      %2152 = vmatpush.bf16.msra.mxu0 0
      %2153 = vmatpush.bf16.msra.mxu0 %v2102
      %2154 = vmatmul.bf16.gmra.mxu0 %v2090
      %v2155 = vpop.f32.mrf.mxu0
      %v2156 = vadd.f32 0.0, %v2155
      %v2157 = vpop.f32.mrf.mxu0
      %2158 = vdwg.mxu0
      %2159 = vmatpush.bf16.msra.mxu0 0
      %2160 = vmatpush.bf16.msra.mxu0 0
      %2161 = vmatpush.bf16.msra.mxu0 0
      %2162 = vmatpush.bf16.msra.mxu0 0
      %2163 = vmatpush.bf16.msra.mxu0 0
      %2164 = vmatpush.bf16.msra.mxu0 0
      %2165 = vmatpush.bf16.msra.mxu0 0
      %2166 = vmatpush.bf16.msra.mxu0 %v2105
      %2167 = vmatmul.bf16.gmra.mxu0 %v2090
      %v2168 = vpop.f32.mrf.mxu0
      %v2169 = vadd.f32 0.0, %v2168
      %v2170 = vpop.f32.mrf.mxu0
      %2171 = vdwg.mxu0
      %v2172 = vadd.f32 %v2045, %v2117
      %v2173 = vadd.f32 %v2046, %v2130
      %v2174 = vadd.f32 %v2047, %v2143
      %v2175 = vadd.f32 %v2048, %v2156
      %v2176 = vadd.f32 %v2049, %v2169
      %v2177 = vld [vmem:[#allocation2] sm:$0xff]
      %v2178 = vld [vmem:[#allocation2 + $0x8] sm:$0xf]
      %s2179 = scalar_lea.vmem %s1, 60
      %v2180 = vld [vmem:[%s2179] sm:$0xf]
      %2182 = vst [vmem:[#allocation1] ss:$4 sm:$0xff] %v2177
      %s2184 = scalar_lea.vmem [#allocation1], 32
      %2185 = vst [vmem:[%s2184] ss:$4 sm:$0xff] %v2178
      %v2186 = vld.sshfl [vmem:[#allocation1] sm:$0xff pattern:$0x73625140]
      %v2188 = vld.sshfl [vmem:[#allocation1 + $0x8] sm:$0xff pattern:$0x73625140]
      %v2190 = vld.sshfl [vmem:[#allocation1 + $0x10] sm:$0xff pattern:$0x73625140]
      %v2192 = vld.sshfl [vmem:[#allocation1 + $0x18] sm:$0xff pattern:$0x73625140]
      %v2194 = vld.sshfl [vmem:[#allocation1 + $0x20] sm:$0xff pattern:$0x73625140]
      %v2196 = vld.sshfl [vmem:[#allocation1 + $0x28] sm:$0xff pattern:$0x73625140]
      %2198 = vrot.lane.b32.xlu0 %v2186, 65
      %v2199 = vpop.permute.xlu0 %2198
      %2200 = vrot.lane.b32.xlu0 %v2188, 65
      %v2201 = vpop.permute.xlu0 %2200
      %2202 = vrot.lane.b32.xlu0 %v2190, 65
      %v2203 = vpop.permute.xlu0 %2202
      %2204 = vrot.lane.b32.xlu0 %v2192, 65
      %v2205 = vpop.permute.xlu0 %2204
      %2206 = vrot.lane.b32.xlu0 %v2194, 65
      %v2207 = vpop.permute.xlu0 %2206
      %2208 = vrot.lane.b32.xlu0 %v2196, 65
      %v2209 = vpop.permute.xlu0 %2208
      %vm2210 = vcmask 531456
      %v2211 = vsel %vm2210, %v2199, %v2201
      %v2212 = vsel %vm2210, %v2201, %v2203
      %v2213 = vsel %vm2210, %v2203, %v2205
      %v2214 = vsel %vm2210, %v2205, %v2207
      %v2215 = vsel %vm2210, %v2207, %v2209
      %v2217 = vsel %vm353, %v2180, 0
      %v2220 = vsel %vm357, %v2211, 0
      %v2223 = vsel %vm357, %v2212, 0
      %v2226 = vsel %vm357, %v2213, 0
      %v2229 = vsel %vm357, %v2214, 0
      %v2232 = vsel %vm357, %v2215, 0
      %2234 = vmatpush.bf16.msra.mxu0 0
      %2235 = vmatpush.bf16.msra.mxu0 0
      %2236 = vmatpush.bf16.msra.mxu0 0
      %2237 = vmatpush.bf16.msra.mxu0 0
      %2238 = vmatpush.bf16.msra.mxu0 0
      %2239 = vmatpush.bf16.msra.mxu0 0
      %2240 = vmatpush.bf16.msra.mxu0 0
      %2241 = vmatpush.bf16.msra.mxu0 %v2220
      %2242 = vmatmul.bf16.gmra.mxu0 %v2217
      %v2243 = vpop.f32.mrf.mxu0
      %v2244 = vadd.f32 0.0, %v2243
      %v2245 = vpop.f32.mrf.mxu0
      %2246 = vdwg.mxu0
      %2247 = vmatpush.bf16.msra.mxu0 0
      %2248 = vmatpush.bf16.msra.mxu0 0
      %2249 = vmatpush.bf16.msra.mxu0 0
      %2250 = vmatpush.bf16.msra.mxu0 0
      %2251 = vmatpush.bf16.msra.mxu0 0
      %2252 = vmatpush.bf16.msra.mxu0 0
      %2253 = vmatpush.bf16.msra.mxu0 0
      %2254 = vmatpush.bf16.msra.mxu0 %v2223
      %2255 = vmatmul.bf16.gmra.mxu0 %v2217
      %v2256 = vpop.f32.mrf.mxu0
      %v2257 = vadd.f32 0.0, %v2256
      %v2258 = vpop.f32.mrf.mxu0
      %2259 = vdwg.mxu0
      %2260 = vmatpush.bf16.msra.mxu0 0
      %2261 = vmatpush.bf16.msra.mxu0 0
      %2262 = vmatpush.bf16.msra.mxu0 0
      %2263 = vmatpush.bf16.msra.mxu0 0
      %2264 = vmatpush.bf16.msra.mxu0 0
      %2265 = vmatpush.bf16.msra.mxu0 0
      %2266 = vmatpush.bf16.msra.mxu0 0
      %2267 = vmatpush.bf16.msra.mxu0 %v2226
      %2268 = vmatmul.bf16.gmra.mxu0 %v2217
      %v2269 = vpop.f32.mrf.mxu0
      %v2270 = vadd.f32 0.0, %v2269
      %v2271 = vpop.f32.mrf.mxu0
      %2272 = vdwg.mxu0
      %2273 = vmatpush.bf16.msra.mxu0 0
      %2274 = vmatpush.bf16.msra.mxu0 0
      %2275 = vmatpush.bf16.msra.mxu0 0
      %2276 = vmatpush.bf16.msra.mxu0 0
      %2277 = vmatpush.bf16.msra.mxu0 0
      %2278 = vmatpush.bf16.msra.mxu0 0
      %2279 = vmatpush.bf16.msra.mxu0 0
      %2280 = vmatpush.bf16.msra.mxu0 %v2229
      %2281 = vmatmul.bf16.gmra.mxu0 %v2217
      %v2282 = vpop.f32.mrf.mxu0
      %v2283 = vadd.f32 0.0, %v2282
      %v2284 = vpop.f32.mrf.mxu0
      %2285 = vdwg.mxu0
      %2286 = vmatpush.bf16.msra.mxu0 0
      %2287 = vmatpush.bf16.msra.mxu0 0
      %2288 = vmatpush.bf16.msra.mxu0 0
      %2289 = vmatpush.bf16.msra.mxu0 0
      %2290 = vmatpush.bf16.msra.mxu0 0
      %2291 = vmatpush.bf16.msra.mxu0 0
      %2292 = vmatpush.bf16.msra.mxu0 0
      %2293 = vmatpush.bf16.msra.mxu0 %v2232
      %2294 = vmatmul.bf16.gmra.mxu0 %v2217
      %v2295 = vpop.f32.mrf.mxu0
      %v2296 = vadd.f32 0.0, %v2295
      %v2297 = vpop.f32.mrf.mxu0
      %2298 = vdwg.mxu0
      %v2299 = vadd.f32 %v2172, %v2244
      %v2300 = vadd.f32 %v2173, %v2257
      %v2301 = vadd.f32 %v2174, %v2270
      %v2302 = vadd.f32 %v2175, %v2283
      %v2303 = vadd.f32 %v2176, %v2296
      %v2304 = vld [vmem:[%s2] sm:$0xff]
      %2306 = vset.pattern.permute.xlu0 0
      %2307 = vperm.xlu0 %2306, %v2304
      %v2308 = vpop.permute.xlu0 %2307
      %v2310 = vadd.f32 %v2299, %v2308
      %v2311 = vadd.f32 %v2300, %v2308
      %v2312 = vadd.f32 %v2301, %v2308
      %v2313 = vadd.f32 %v2302, %v2308
      %v2314 = vadd.f32 %v2303, %v2308
      %2315 = vst [vmem:[%s259] sm:$0xff] %v2310
      %2316 = vst [vmem:[%s259 + $0x8] sm:$0xff] %v2311
      %2317 = vst [vmem:[%s259 + $0x10] sm:$0xff] %v2312
      %2318 = vst [vmem:[%s259 + $0x18] sm:$0xff] %v2313
      %2319 = vst [vmem:[%s259 + $0x20] sm:$0xff] %v2314
      %p2320 = scmp.eq.s32.totalorder %s23, 0
      // Predicated region
      $region55: #{cdk2d_forward.2} parent=31 // pred_check
        %p2321 = pneg %p2320
      $region56: #{cdk2d_forward.2} parent=31 // pred_check_branch
        %2323 = sbr.rel (%p2321) target = $region58
      $region57: #{cdk2d_forward.2} parent=31 // pred_region
        %vm2324 = vcmask 7168
        %2325 = vst.msk [vmem:[%s264] sm:$0xff] %vm2324, 0.0
        %2326 = vst.msk [vmem:[%s268] sm:$0xff] %vm2324, 0.0
      $region58: #{cdk2d_forward.2} parent=31 // pred_fallthru
        _
      %v2327 = vld [vmem:[%s249] sm:$0x1f]
      %v2329 = vperm.slane %v2327, 0
      %v2330 = vperm.slane %v2327, 1
      %v2331 = vperm.slane %v2327, 2
      %v2332 = vperm.slane %v2327, 3
      %v2333 = vperm.slane %v2327, 4
      %v2339 = vmul.f32 %v2310, %v2329
      %v2340 = vmul.f32 %v2311, %v2330
      %v2341 = vmul.f32 %v2312, %v2331
      %v2342 = vmul.f32 %v2313, %v2332
      %v2343 = vmul.f32 %v2314, %v2333
      %v2344 = vld [vmem:[%s264] sm:$0xff]
      %v2345 = vadd.f32 %v2339, %v2340
      %v2346 = vadd.f32 %v2345, %v2341
      %v2347 = vadd.f32 %v2346, %v2342
      %v2348 = vadd.f32 %v2347, %v2343
      %2349 = vadd.xlane.f32.xlu0 %v2348
      %v2350 = vpop.xlane.xlu0 %2349
      %v2351 = vadd.f32 %v2344, %v2350
      %vm2352 = vcmask 7168
      %2353 = vst.msk [vmem:[%s264] sm:$0xff] %vm2352, %v2351
      %v2354 = vld [vmem:[%s268] sm:$0xff]
      %v2355 = vmul.f32 %v2310, %v2339
      %v2356 = vmul.f32 %v2311, %v2340
      %v2357 = vmul.f32 %v2312, %v2341
      %v2358 = vmul.f32 %v2313, %v2342
      %v2359 = vmul.f32 %v2314, %v2343
      %v2360 = vadd.f32 %v2355, %v2356
      %v2361 = vadd.f32 %v2360, %v2357
      %v2362 = vadd.f32 %v2361, %v2358
      %v2363 = vadd.f32 %v2362, %v2359
      %2364 = vadd.xlane.f32.xlu0 %v2363
      %v2365 = vpop.xlane.xlu0 %2364
      %v2366 = vadd.f32 %v2354, %v2365
      %2367 = vst.msk [vmem:[%s268] sm:$0xff] %vm2352, %v2366
      %s2368 = smul.u32 5, %s23
      %p2369 = scmp.lt.s32.totalorder %s22, 1
      %s2370 = scalar_select %p2369, %s22, 1
      %p2371 = scmp.lt.s32.totalorder %s2368, 4
      %s2372 = scalar_select %p2371, %s2368, 4
      %s2373 = smul.addr %s2370, 5
      %s2374 = sadd.s32 %s2372, %s2373
      %s2375 = smul.addr %s2374, 8
      %s2376 = scalar_lea.vmem %s4, %s2375
      %p2377 = scmp.lt.s32.totalorder %s22, 1
      %s2378 = scalar_select %p2377, %s22, 1
      %s2379 = smul.addr %s2378, 8
      %s2380 = scalar_lea.vmem %s5, %s2379
      %p2381 = scmp.lt.s32.totalorder %s22, 1
      %s2382 = scalar_select %p2381, %s22, 1
      %s2383 = smul.addr %s2382, 8
      %s2384 = scalar_lea.vmem %s6, %s2383
      // Predicated region
      $region59: #{cdk2d_forward.2} parent=31 // pred_check
        %p2385 = pneg %p118
      $region60: #{cdk2d_forward.2} parent=31 // pred_check_branch
        %2387 = sbr.rel (%p2385) target = $region62
      $region61: #{cdk2d_forward.2} parent=31 // pred_region
        %s2388 = smul.u32 5, %s23
      $region62: #{cdk2d_forward.2} parent=31 // pred_fallthru
        _
      // Predicated region
      $region63: #{cdk2d_forward.2} parent=31 // pred_check
        %p2389 = pneg %p144
      $region64: #{cdk2d_forward.2} parent=31 // pred_check_branch
        %2391 = sbr.rel (%p2389) target = $region66
      $region65: #{cdk2d_forward.2} parent=31 // pred_region
        _
      $region66: #{cdk2d_forward.2} parent=31 // pred_fallthru
        _
      // Predicated region
      $region67: #{cdk2d_forward.2} parent=31 // pred_check
        %p2392 = pneg %p170
      $region68: #{cdk2d_forward.2} parent=31 // pred_check_branch
        %2394 = sbr.rel (%p2392) target = $region70
      $region69: #{cdk2d_forward.2} parent=31 // pred_region
        _
      $region70: #{cdk2d_forward.2} parent=31 // pred_fallthru
        _
    $region32: #{cdk2d_forward.2} parent=5 // pred_fallthru
      _
    %p2395 = scmp.le.s32.totalorder 2, %s13
    // Predicated region
    $region71: #{cdk2d_forward.2} parent=5 // pred_check
      %p2396 = pneg %p2395
    $region72: #{cdk2d_forward.2} parent=5 // pred_check_branch
      %2398 = sbr.rel (%p2396) target = $region74
    $region73: #{cdk2d_forward.2} parent=5 // pred_region
      %s2399 = ssub.s32 %s13, 2
      // Predicated region
      $region75: #{cdk2d_forward.2} parent=73 // pred_check
        %p2400 = pneg %p124
      $region76: #{cdk2d_forward.2} parent=73 // pred_check_branch
        %2402 = sbr.rel (%p2400) target = $region78
      $region77: #{cdk2d_forward.2} parent=73 // pred_region
        %s2403 = smul.u32 5, %s25
        %p2404 = scmp.lt.s32.totalorder %s24, 1
        %s2405 = scalar_select %p2404, %s24, 1
        %p2406 = scmp.lt.s32.totalorder %s2403, 4
        %s2407 = scalar_select %p2406, %s2403, 4
        %s2408 = smul.addr %s2405, 5
        %s2409 = sadd.s32 %s2407, %s2408
        %s2410 = smul.addr %s2409, 8
        %s2411 = scalar_lea.vmem %s4, %s2410
      $region78: #{cdk2d_forward.2} parent=73 // pred_fallthru
        _
      // Predicated region
      $region79: #{cdk2d_forward.2} parent=73 // pred_check
        %p2412 = pneg %p150
      $region80: #{cdk2d_forward.2} parent=73 // pred_check_branch
        %2414 = sbr.rel (%p2412) target = $region82
      $region81: #{cdk2d_forward.2} parent=73 // pred_region
        %p2415 = scmp.lt.s32.totalorder %s24, 1
        %s2416 = scalar_select %p2415, %s24, 1
        %s2417 = smul.addr %s2416, 8
        %s2418 = scalar_lea.vmem %s5, %s2417
      $region82: #{cdk2d_forward.2} parent=73 // pred_fallthru
        _
      // Predicated region
      $region83: #{cdk2d_forward.2} parent=73 // pred_check
        %p2419 = pneg %p176
      $region84: #{cdk2d_forward.2} parent=73 // pred_check_branch
        %2421 = sbr.rel (%p2419) target = $region86
      $region85: #{cdk2d_forward.2} parent=73 // pred_region
        %p2422 = scmp.lt.s32.totalorder %s24, 1
        %s2423 = scalar_select %p2422, %s24, 1
        %s2424 = smul.addr %s2423, 8
        %s2425 = scalar_lea.vmem %s6, %s2424
      $region86: #{cdk2d_forward.2} parent=73 // pred_fallthru
        _
    $region74: #{cdk2d_forward.2} parent=5 // pred_fallthru
      _
  $region6: #{cdk2d_forward.2} parent=0 // loop_footer
    %s17 = sadd.s32 1, %s13
  $region7: #{cdk2d_forward.2} parent=0 // loop_footer_branch
    %12 = sbr.rel target = $region3
  $region8: #{cdk2d_forward.2} parent=0 // loop_exit
    _
  %2426 = vsyncmov [#allocation3]
  %s2427 = vpop.sfrf %2426
  %p2428 = scmp.eq.s32.totalorder %s2427, 0
  %p2429 = pneg %p2428
  %2431 = shalt.err (%p2429)

</llo_original>
